<compile_context>
chip_gen: v6e
topology: v6e:2x2x1
jax: 0.10.0
libtpu: 0.0.40
codegen_flags: <defaults>
</compile_context>

<pallas_src>
import functools

import numpy as np
import jax
import jax.numpy as jnp
from jax.experimental import pallas as pl
from jax.experimental.pallas import tpu as pltpu


# ----------------------------------------------------------------------------
# Host-side constant helpers (numpy -> become jit constants).
# ----------------------------------------------------------------------------
def _make_conv_masks(H, W):
    """(9, H*W) f32 validity masks for the 9 conv taps in flat (y*W + x) space."""
    y = np.arange(H)[:, None]
    x = np.arange(W)[None, :]
    masks = []
    for dy in (-1, 0, 1):
        for dx in (-1, 0, 1):
            valid = ((y + dy >= 0) & (y + dy < H) &
                     (x + dx >= 0) & (x + dx < W))
            masks.append(valid.reshape(-1))
    return jnp.asarray(np.stack(masks).astype(np.float32))


def _make_pool_select(H, W):
    """(H*W, Ho*Wo) 0/1 matrix selecting flat index 2*yo*W + 2*xo per output."""
    Ho, Wo = H // 2, W // 2
    S = np.zeros((H * W, Ho * Wo), np.float32)
    dst = np.arange(Ho * Wo)
    yo, xo = dst // Wo, dst % Wo
    S[2 * yo * W + 2 * xo, dst] = 1.0
    return jnp.asarray(S)


def _pack_weight(w_oihw):
    """OIHW (Cout, Cin, 3, 3) -> (Cout, 9*Cin) with column = (dy*3+dx)*Cin + ci."""
    co, ci = w_oihw.shape[0], w_oihw.shape[1]
    return jnp.transpose(w_oihw, (0, 2, 3, 1)).reshape(co, 9 * ci)


# ----------------------------------------------------------------------------
# Fused encoder-block kernel: conv+ReLU -> conv+ReLU -> (optional) maxpool2x2.
# All tensors live with channels on sublanes and flattened spatial on lanes.
# ----------------------------------------------------------------------------
def _encoder_block_kernel(*refs, W, pool):
    if pool:
        (x_ref, w1_ref, b1_ref, w2_ref, b2_ref, m_ref, s_ref,
         act_ref, pool_ref) = refs
    else:
        (x_ref, w1_ref, b1_ref, w2_ref, b2_ref, m_ref, act_ref) = refs

    x = x_ref[0]                 # (Cin, HW)  f32
    masks = m_ref[...]           # (9, HW)    f32 border-validity masks
    HW = x.shape[-1]

    def conv3x3_relu(inp, w, b):
        # Build the (9*C, HW) im2col matrix: each tap is a lane rotation of the
        # flattened image (roll wrap only hits positions the mask zeroes out).
        rows = []
        for dy in range(3):
            for dx in range(3):
                s = (dy - 1) * W + (dx - 1)
                tap = dy * 3 + dx
                if s == 0:
                    rows.append(inp)                       # center tap: mask is all-ones
                else:
                    shifted = pltpu.roll(inp, (-s) % HW, axis=1)
                    rows.append(shifted * masks[tap:tap + 1, :])
        im2col = jnp.concatenate(rows, axis=0)             # (9*C, HW)
        # Single MXU matmul with K = 9*C; output is lane-dense (Cout, HW).
        y = jnp.dot(w, im2col, preferred_element_type=jnp.float32)
        return jnp.maximum(y + b, 0.0)

    h1 = conv3x3_relu(x, w1_ref[...], b1_ref[...])          # (Cout, HW)
    h2 = conv3x3_relu(h1, w2_ref[...], b2_ref[...])         # (Cout, HW)
    act_ref[0] = h2.astype(act_ref.dtype)

    if pool:
        # Pair-max along x then y (lane rotations); the 2x2 window maxima now
        # sit at flat positions 2*yo*W + 2*xo.  Compact them with an exact
        # 0/1 selection matmul (picks a single element per output).
        t = jnp.maximum(h2, pltpu.roll(h2, HW - 1, axis=1))
        t = jnp.maximum(t, pltpu.roll(t, HW - W, axis=1))
        pooled = jnp.dot(t, s_ref[...], preferred_element_type=jnp.float32)
        pool_ref[0] = pooled.astype(pool_ref.dtype)


def encoder_block(x_flat, w1p, b1, w2p, b2, H, W, pool):
    """x_flat: (N, Cin, H*W).  Returns act (N, Cout, H*W) and, if pool=True,
    also the 2x2-max-pooled activation (N, Cout, (H//2)*(W//2))."""
    N, Cin, HW = x_flat.shape
    Cout = w1p.shape[0]
    masks = _make_conv_masks(H, W)
    b1c = b1.reshape(Cout, 1)
    b2c = b2.reshape(Cout, 1)

    in_specs = [
        pl.BlockSpec((1, Cin, HW), lambda n: (n, 0, 0)),
        pl.BlockSpec((Cout, 9 * Cin), lambda n: (0, 0)),
        pl.BlockSpec((Cout, 1), lambda n: (0, 0)),
        pl.BlockSpec((Cout, 9 * Cout), lambda n: (0, 0)),
        pl.BlockSpec((Cout, 1), lambda n: (0, 0)),
        pl.BlockSpec((9, HW), lambda n: (0, 0)),
    ]
    args = [x_flat, w1p, b1c, w2p, b2c, masks]

    if pool:
        Ho, Wo = H // 2, W // 2
        S = _make_pool_select(H, W)
        in_specs.append(pl.BlockSpec((HW, Ho * Wo), lambda n: (0, 0)))
        args.append(S)
        out_shape = (jax.ShapeDtypeStruct((N, Cout, HW), x_flat.dtype),
                     jax.ShapeDtypeStruct((N, Cout, Ho * Wo), x_flat.dtype))
        out_specs = (pl.BlockSpec((1, Cout, HW), lambda n: (n, 0, 0)),
                     pl.BlockSpec((1, Cout, Ho * Wo), lambda n: (n, 0, 0)))
    else:
        out_shape = jax.ShapeDtypeStruct((N, Cout, HW), x_flat.dtype)
        out_specs = pl.BlockSpec((1, Cout, HW), lambda n: (n, 0, 0))

    kernel = functools.partial(_encoder_block_kernel, W=W, pool=pool)
    return pl.pallas_call(
        kernel,
        out_shape=out_shape,
        grid=(N,),
        in_specs=in_specs,
        out_specs=out_specs,
        compiler_params=pltpu.CompilerParams(dimension_semantics=("parallel",)),
    )(*args)


# ----------------------------------------------------------------------------
# Encoder: parameter init (PyTorch-Conv2d-like uniform bounds) + forward pass.
# ----------------------------------------------------------------------------
def init_encoder_params(key, in_channels, num_filters, num_blocks):
    params = []
    for i in range(num_blocks):
        cin = in_channels if i == 0 else num_filters * 2 ** (i - 1)
        cout = num_filters * 2 ** i
        blk = {}
        for j, (ci, co) in enumerate([(cin, cout), (cout, cout)], start=1):
            key, kw, kb = jax.random.split(key, 3)
            bound = 1.0 / float(np.sqrt(ci * 9))
            w = jax.random.uniform(kw, (co, ci, 3, 3), jnp.float32, -bound, bound)  # OIHW
            b = jax.random.uniform(kb, (co,), jnp.float32, -bound, bound)
            blk[f"w{j}"] = w                      # kept for the reference check
            blk[f"b{j}"] = b
            blk[f"w{j}p"] = _pack_weight(w)       # packed (Cout, 9*Cin) for the kernel
        params.append(blk)
    return params


def encoder_forward(params, x_nchw):
    """x_nchw: (N, Cin, H, W).  Returns the list of per-block NCHW activations."""
    N, C, H, W = x_nchw.shape
    x = x_nchw.reshape(N, C, H * W)               # free view: NCHW w/ flat spatial
    acts = []
    nb = len(params)
    for i, p in enumerate(params):
        cout = p["w1p"].shape[0]
        if i != nb - 1:
            act, x = encoder_block(x, p["w1p"], p["b1"], p["w2p"], p["b2"],
                                   H, W, pool=True)
            acts.append(act.reshape(N, cout, H, W))
            H, W = H // 2, W // 2
        else:
            act = encoder_block(x, p["w1p"], p["b1"], p["w2p"], p["b2"],
                                H, W, pool=False)
            acts.append(act.reshape(N, cout, H, W))
    return acts


# ----------------------------------------------------------------------------
# Pure-JAX reference (lax.conv, NCHW) for the correctness check only.
# ----------------------------------------------------------------------------
def _block_ref(x, p):
    def conv_relu(x, w, b):
        y = jax.lax.conv_general_dilated(
            x, w, window_strides=(1, 1), padding=((1, 1), (1, 1)),
            dimension_numbers=("NCHW", "OIHW", "NCHW"))
        return jnp.maximum(y + b[None, :, None, None], 0.0)
    x = conv_relu(x, p["w1"], p["b1"])
    x = conv_relu(x, p["w2"], p["b2"])
    return x


if __name__ == "__main__":
    key = jax.random.PRNGKey(0)
    kx, kp = jax.random.split(key)

    N, Cin, H, W = 2, 3, 16, 16
    num_filters, num_blocks = 4, 3

    x = jax.random.normal(kx, (N, Cin, H, W), jnp.float32)
    params = init_encoder_params(kp, Cin, num_filters, num_blocks)

    fwd = jax.jit(encoder_forward)
    acts = fwd(params, x)
    acts = jax.block_until_ready(acts)

    # Correctness check against a pure-JAX reference of the same Encoder.
    xr = x
    for i, p in enumerate(params):
        xr = _block_ref(xr, p)
        assert acts[i].shape == xr.shape, f"shape mismatch at block {i}"
        assert jnp.allclose(acts[i], xr, atol=1e-3, rtol=1e-3), \
            f"value mismatch at block {i}"
        if i != num_blocks - 1:
            n, c, hh, ww = xr.shape
            xr = jnp.max(xr.reshape(n, c, hh // 2, 2, ww // 2, 2), axis=(3, 5))

    print("KERNEL_OK")
</pallas_src>

<mosaic_0001>
module attributes {stable_mosaic.version = 11 : i64} {
  func.func @_encoder_block_kernel(%arg0: i32, %arg1: memref<1x4x64xf32, #tpu.memory_space<vmem>>, %arg2: memref<8x36xf32, #tpu.memory_space<vmem>>, %arg3: memref<8x1xf32, #tpu.memory_space<vmem>>, %arg4: memref<8x72xf32, #tpu.memory_space<vmem>>, %arg5: memref<8x1xf32, #tpu.memory_space<vmem>>, %arg6: memref<9x64xf32, #tpu.memory_space<vmem>>, %arg7: memref<64x16xf32, #tpu.memory_space<vmem>>, %arg8: memref<1x8x64xf32, #tpu.memory_space<vmem>>, %arg9: memref<1x8x16xf32, #tpu.memory_space<vmem>>) attributes {dimension_semantics = [#tpu.dimension_semantics<parallel>], iteration_bounds = array<i64: 2>, scalar_prefetch = 0 : i64, scratch_operands = 0 : i64, tpu.core_type = #tpu.core_type<tc>, window_params = [{transform_indices = @transform_0, window_bounds = array<i64: 1, 4, 64>}, {pipeline_mode = #tpu.pipeline_mode<synchronous>, transform_indices = @transform_1, window_bounds = array<i64: 8, 36>}, {pipeline_mode = #tpu.pipeline_mode<synchronous>, transform_indices = @transform_2, window_bounds = array<i64: 8, 1>}, {pipeline_mode = #tpu.pipeline_mode<synchronous>, transform_indices = @transform_3, window_bounds = array<i64: 8, 72>}, {pipeline_mode = #tpu.pipeline_mode<synchronous>, transform_indices = @transform_4, window_bounds = array<i64: 8, 1>}, {pipeline_mode = #tpu.pipeline_mode<synchronous>, transform_indices = @transform_5, window_bounds = array<i64: 9, 64>}, {pipeline_mode = #tpu.pipeline_mode<synchronous>, transform_indices = @transform_6, window_bounds = array<i64: 64, 16>}, {transform_indices = @transform_7, window_bounds = array<i64: 1, 8, 64>}, {transform_indices = @transform_8, window_bounds = array<i64: 1, 8, 16>}]} {
    %c0 = arith.constant 0 : index
    %c0_0 = arith.constant 0 : index
    %c0_1 = arith.constant 0 : index
    %0 = vector.load %arg1[%c0, %c0_0, %c0_1] : memref<1x4x64xf32, #tpu.memory_space<vmem>>, vector<1x4x64xf32>
    %1 = vector.shape_cast %0 : vector<1x4x64xf32> to vector<4x64xf32>
    %c0_2 = arith.constant 0 : index
    %c0_3 = arith.constant 0 : index
    %2 = vector.load %arg6[%c0_2, %c0_3] : memref<9x64xf32, #tpu.memory_space<vmem>>, vector<9x64xf32>
    %c0_4 = arith.constant 0 : index
    %c0_5 = arith.constant 0 : index
    %3 = vector.load %arg2[%c0_4, %c0_5] : memref<8x36xf32, #tpu.memory_space<vmem>>, vector<8x36xf32>
    %c0_6 = arith.constant 0 : index
    %c0_7 = arith.constant 0 : index
    %4 = vector.load %arg3[%c0_6, %c0_7] : memref<8x1xf32, #tpu.memory_space<vmem>>, vector<8x1xf32>
    %c9_i32 = arith.constant 9 : i32
    %5 = tpu.dynamic_rotate %1 by %c9_i32 dim 1 : vector<4x64xf32>, i32 -> vector<4x64xf32>
    %6 = vector.extract_strided_slice %2 {offsets = [0, 0], sizes = [1, 64], strides = [1, 1]} : vector<9x64xf32> to vector<1x64xf32>
    %7 = vector.broadcast %6 : vector<1x64xf32> to vector<4x64xf32>
    %8 = arith.mulf %5, %7 : vector<4x64xf32>
    %c8_i32 = arith.constant 8 : i32
    %9 = tpu.dynamic_rotate %1 by %c8_i32 dim 1 : vector<4x64xf32>, i32 -> vector<4x64xf32>
    %10 = vector.extract_strided_slice %2 {offsets = [1, 0], sizes = [1, 64], strides = [1, 1]} : vector<9x64xf32> to vector<1x64xf32>
    %11 = vector.broadcast %10 : vector<1x64xf32> to vector<4x64xf32>
    %12 = arith.mulf %9, %11 : vector<4x64xf32>
    %c7_i32 = arith.constant 7 : i32
    %13 = tpu.dynamic_rotate %1 by %c7_i32 dim 1 : vector<4x64xf32>, i32 -> vector<4x64xf32>
    %14 = vector.extract_strided_slice %2 {offsets = [2, 0], sizes = [1, 64], strides = [1, 1]} : vector<9x64xf32> to vector<1x64xf32>
    %15 = vector.broadcast %14 : vector<1x64xf32> to vector<4x64xf32>
    %16 = arith.mulf %13, %15 : vector<4x64xf32>
    %c1_i32 = arith.constant 1 : i32
    %17 = tpu.dynamic_rotate %1 by %c1_i32 dim 1 : vector<4x64xf32>, i32 -> vector<4x64xf32>
    %18 = vector.extract_strided_slice %2 {offsets = [3, 0], sizes = [1, 64], strides = [1, 1]} : vector<9x64xf32> to vector<1x64xf32>
    %19 = vector.broadcast %18 : vector<1x64xf32> to vector<4x64xf32>
    %20 = arith.mulf %17, %19 : vector<4x64xf32>
    %c63_i32 = arith.constant 63 : i32
    %21 = tpu.dynamic_rotate %1 by %c63_i32 dim 1 : vector<4x64xf32>, i32 -> vector<4x64xf32>
    %22 = vector.extract_strided_slice %2 {offsets = [5, 0], sizes = [1, 64], strides = [1, 1]} : vector<9x64xf32> to vector<1x64xf32>
    %23 = vector.broadcast %22 : vector<1x64xf32> to vector<4x64xf32>
    %24 = arith.mulf %21, %23 : vector<4x64xf32>
    %c57_i32 = arith.constant 57 : i32
    %25 = tpu.dynamic_rotate %1 by %c57_i32 dim 1 : vector<4x64xf32>, i32 -> vector<4x64xf32>
    %26 = vector.extract_strided_slice %2 {offsets = [6, 0], sizes = [1, 64], strides = [1, 1]} : vector<9x64xf32> to vector<1x64xf32>
    %27 = vector.broadcast %26 : vector<1x64xf32> to vector<4x64xf32>
    %28 = arith.mulf %25, %27 : vector<4x64xf32>
    %c56_i32 = arith.constant 56 : i32
    %29 = tpu.dynamic_rotate %1 by %c56_i32 dim 1 : vector<4x64xf32>, i32 -> vector<4x64xf32>
    %30 = vector.extract_strided_slice %2 {offsets = [7, 0], sizes = [1, 64], strides = [1, 1]} : vector<9x64xf32> to vector<1x64xf32>
    %31 = vector.broadcast %30 : vector<1x64xf32> to vector<4x64xf32>
    %32 = arith.mulf %29, %31 : vector<4x64xf32>
    %c55_i32 = arith.constant 55 : i32
    %33 = tpu.dynamic_rotate %1 by %c55_i32 dim 1 : vector<4x64xf32>, i32 -> vector<4x64xf32>
    %34 = vector.extract_strided_slice %2 {offsets = [8, 0], sizes = [1, 64], strides = [1, 1]} : vector<9x64xf32> to vector<1x64xf32>
    %35 = vector.broadcast %34 : vector<1x64xf32> to vector<4x64xf32>
    %36 = arith.mulf %33, %35 : vector<4x64xf32>
    %37 = tpu.concatenate %8, %12, %16, %20, %1, %24, %28, %32, %36 in 0 : vector<4x64xf32>, vector<4x64xf32>, vector<4x64xf32>, vector<4x64xf32>, vector<4x64xf32>, vector<4x64xf32>, vector<4x64xf32>, vector<4x64xf32>, vector<4x64xf32> -> vector<36x64xf32>
    %cst = arith.constant dense<0.000000e+00> : vector<8x64xf32>
    %38 = tpu.matmul %3, %37, %cst {dimension_numbers = #tpu.dot_dimension_numbers<[1], [0], [0], [1], [0, 0, 1, 1], [], []>} : vector<8x36xf32>, vector<36x64xf32>, vector<8x64xf32> -> vector<8x64xf32>
    %39 = vector.broadcast %4 : vector<8x1xf32> to vector<8x64xf32>
    %40 = arith.addf %38, %39 : vector<8x64xf32>
    %cst_8 = arith.constant 0.000000e+00 : f32
    %41 = vector.broadcast %cst_8 : f32 to vector<8x64xf32>
    %42 = arith.maximumf %40, %41 : vector<8x64xf32>
    %c0_9 = arith.constant 0 : index
    %c0_10 = arith.constant 0 : index
    %43 = vector.load %arg4[%c0_9, %c0_10] : memref<8x72xf32, #tpu.memory_space<vmem>>, vector<8x72xf32>
    %c0_11 = arith.constant 0 : index
    %c0_12 = arith.constant 0 : index
    %44 = vector.load %arg5[%c0_11, %c0_12] : memref<8x1xf32, #tpu.memory_space<vmem>>, vector<8x1xf32>
    %c9_i32_13 = arith.constant 9 : i32
    %45 = tpu.dynamic_rotate %42 by %c9_i32_13 dim 1 : vector<8x64xf32>, i32 -> vector<8x64xf32>
    %46 = vector.extract_strided_slice %2 {offsets = [0, 0], sizes = [1, 64], strides = [1, 1]} : vector<9x64xf32> to vector<1x64xf32>
    %47 = vector.broadcast %46 : vector<1x64xf32> to vector<8x64xf32>
    %48 = arith.mulf %45, %47 : vector<8x64xf32>
    %c8_i32_14 = arith.constant 8 : i32
    %49 = tpu.dynamic_rotate %42 by %c8_i32_14 dim 1 : vector<8x64xf32>, i32 -> vector<8x64xf32>
    %50 = vector.extract_strided_slice %2 {offsets = [1, 0], sizes = [1, 64], strides = [1, 1]} : vector<9x64xf32> to vector<1x64xf32>
    %51 = vector.broadcast %50 : vector<1x64xf32> to vector<8x64xf32>
    %52 = arith.mulf %49, %51 : vector<8x64xf32>
    %c7_i32_15 = arith.constant 7 : i32
    %53 = tpu.dynamic_rotate %42 by %c7_i32_15 dim 1 : vector<8x64xf32>, i32 -> vector<8x64xf32>
    %54 = vector.extract_strided_slice %2 {offsets = [2, 0], sizes = [1, 64], strides = [1, 1]} : vector<9x64xf32> to vector<1x64xf32>
    %55 = vector.broadcast %54 : vector<1x64xf32> to vector<8x64xf32>
    %56 = arith.mulf %53, %55 : vector<8x64xf32>
    %c1_i32_16 = arith.constant 1 : i32
    %57 = tpu.dynamic_rotate %42 by %c1_i32_16 dim 1 : vector<8x64xf32>, i32 -> vector<8x64xf32>
    %58 = vector.extract_strided_slice %2 {offsets = [3, 0], sizes = [1, 64], strides = [1, 1]} : vector<9x64xf32> to vector<1x64xf32>
    %59 = vector.broadcast %58 : vector<1x64xf32> to vector<8x64xf32>
    %60 = arith.mulf %57, %59 : vector<8x64xf32>
    %c63_i32_17 = arith.constant 63 : i32
    %61 = tpu.dynamic_rotate %42 by %c63_i32_17 dim 1 : vector<8x64xf32>, i32 -> vector<8x64xf32>
    %62 = vector.extract_strided_slice %2 {offsets = [5, 0], sizes = [1, 64], strides = [1, 1]} : vector<9x64xf32> to vector<1x64xf32>
    %63 = vector.broadcast %62 : vector<1x64xf32> to vector<8x64xf32>
    %64 = arith.mulf %61, %63 : vector<8x64xf32>
    %c57_i32_18 = arith.constant 57 : i32
    %65 = tpu.dynamic_rotate %42 by %c57_i32_18 dim 1 : vector<8x64xf32>, i32 -> vector<8x64xf32>
    %66 = vector.extract_strided_slice %2 {offsets = [6, 0], sizes = [1, 64], strides = [1, 1]} : vector<9x64xf32> to vector<1x64xf32>
    %67 = vector.broadcast %66 : vector<1x64xf32> to vector<8x64xf32>
    %68 = arith.mulf %65, %67 : vector<8x64xf32>
    %c56_i32_19 = arith.constant 56 : i32
    %69 = tpu.dynamic_rotate %42 by %c56_i32_19 dim 1 : vector<8x64xf32>, i32 -> vector<8x64xf32>
    %70 = vector.extract_strided_slice %2 {offsets = [7, 0], sizes = [1, 64], strides = [1, 1]} : vector<9x64xf32> to vector<1x64xf32>
    %71 = vector.broadcast %70 : vector<1x64xf32> to vector<8x64xf32>
    %72 = arith.mulf %69, %71 : vector<8x64xf32>
    %c55_i32_20 = arith.constant 55 : i32
    %73 = tpu.dynamic_rotate %42 by %c55_i32_20 dim 1 : vector<8x64xf32>, i32 -> vector<8x64xf32>
    %74 = vector.extract_strided_slice %2 {offsets = [8, 0], sizes = [1, 64], strides = [1, 1]} : vector<9x64xf32> to vector<1x64xf32>
    %75 = vector.broadcast %74 : vector<1x64xf32> to vector<8x64xf32>
    %76 = arith.mulf %73, %75 : vector<8x64xf32>
    %77 = tpu.concatenate %48, %52, %56, %60, %42, %64, %68, %72, %76 in 0 : vector<8x64xf32>, vector<8x64xf32>, vector<8x64xf32>, vector<8x64xf32>, vector<8x64xf32>, vector<8x64xf32>, vector<8x64xf32>, vector<8x64xf32>, vector<8x64xf32> -> vector<72x64xf32>
    %cst_21 = arith.constant dense<0.000000e+00> : vector<8x64xf32>
    %78 = tpu.matmul %43, %77, %cst_21 {dimension_numbers = #tpu.dot_dimension_numbers<[1], [0], [0], [1], [0, 0, 1, 1], [], []>} : vector<8x72xf32>, vector<72x64xf32>, vector<8x64xf32> -> vector<8x64xf32>
    %79 = vector.broadcast %44 : vector<8x1xf32> to vector<8x64xf32>
    %80 = arith.addf %78, %79 : vector<8x64xf32>
    %cst_22 = arith.constant 0.000000e+00 : f32
    %81 = vector.broadcast %cst_22 : f32 to vector<8x64xf32>
    %82 = arith.maximumf %80, %81 : vector<8x64xf32>
    %c0_23 = arith.constant 0 : index
    %c0_24 = arith.constant 0 : index
    %c0_25 = arith.constant 0 : index
    %83 = vector.load %arg8[%c0_23, %c0_24, %c0_25] : memref<1x8x64xf32, #tpu.memory_space<vmem>>, vector<1x8x64xf32>
    %84 = vector.shape_cast %83 : vector<1x8x64xf32> to vector<8x64xf32>
    %85 = vector.shape_cast %82 : vector<8x64xf32> to vector<1x8x64xf32>
    tpu.vector_store %arg8[%c0_23, %c0_24, %c0_25], %85 {strides = array<i32>} : memref<1x8x64xf32, #tpu.memory_space<vmem>>, vector<1x8x64xf32>,
    %c63_i32_26 = arith.constant 63 : i32
    %86 = tpu.dynamic_rotate %82 by %c63_i32_26 dim 1 : vector<8x64xf32>, i32 -> vector<8x64xf32>
    %87 = arith.maximumf %82, %86 : vector<8x64xf32>
    %c56_i32_27 = arith.constant 56 : i32
    %88 = tpu.dynamic_rotate %87 by %c56_i32_27 dim 1 : vector<8x64xf32>, i32 -> vector<8x64xf32>
    %89 = arith.maximumf %87, %88 : vector<8x64xf32>
    %c0_28 = arith.constant 0 : index
    %c0_29 = arith.constant 0 : index
    %90 = vector.load %arg7[%c0_28, %c0_29] : memref<64x16xf32, #tpu.memory_space<vmem>>, vector<64x16xf32>
    %cst_30 = arith.constant dense<0.000000e+00> : vector<8x16xf32>
    %91 = tpu.matmul %89, %90, %cst_30 {dimension_numbers = #tpu.dot_dimension_numbers<[1], [0], [0], [1], [0, 0, 1, 1], [], []>} : vector<8x64xf32>, vector<64x16xf32>, vector<8x16xf32> -> vector<8x16xf32>
    %c0_31 = arith.constant 0 : index
    %c0_32 = arith.constant 0 : index
    %c0_33 = arith.constant 0 : index
    %92 = vector.load %arg9[%c0_31, %c0_32, %c0_33] : memref<1x8x16xf32, #tpu.memory_space<vmem>>, vector<1x8x16xf32>
    %93 = vector.shape_cast %92 : vector<1x8x16xf32> to vector<8x16xf32>
    %94 = vector.shape_cast %91 : vector<8x16xf32> to vector<1x8x16xf32>
    tpu.vector_store %arg9[%c0_31, %c0_32, %c0_33], %94 {strides = array<i32>} : memref<1x8x16xf32, #tpu.memory_space<vmem>>, vector<1x8x16xf32>,
    return
  }
  func.func @transform_0(%arg0: i32) -> (i32, i32, i32) {
    %c0_i32 = arith.constant 0 : i32
    %c0_i32_0 = arith.constant 0 : i32
    %c0_i32_1 = arith.constant 0 : i32
    return %arg0, %c0_i32, %c0_i32_0 : i32, i32, i32
  }
  func.func @transform_1(%arg0: i32) -> (i32, i32) {
    %c0_i32 = arith.constant 0 : i32
    %c0_i32_0 = arith.constant 0 : i32
    %c0_i32_1 = arith.constant 0 : i32
    return %c0_i32, %c0_i32_0 : i32, i32
  }
  func.func @transform_2(%arg0: i32) -> (i32, i32) {
    %c0_i32 = arith.constant 0 : i32
    %c0_i32_0 = arith.constant 0 : i32
    %c0_i32_1 = arith.constant 0 : i32
    return %c0_i32, %c0_i32_0 : i32, i32
  }
  func.func @transform_3(%arg0: i32) -> (i32, i32) {
    %c0_i32 = arith.constant 0 : i32
    %c0_i32_0 = arith.constant 0 : i32
    %c0_i32_1 = arith.constant 0 : i32
    return %c0_i32, %c0_i32_0 : i32, i32
  }
  func.func @transform_4(%arg0: i32) -> (i32, i32) {
    %c0_i32 = arith.constant 0 : i32
    %c0_i32_0 = arith.constant 0 : i32
    %c0_i32_1 = arith.constant 0 : i32
    return %c0_i32, %c0_i32_0 : i32, i32
  }
  func.func @transform_5(%arg0: i32) -> (i32, i32) {
    %c0_i32 = arith.constant 0 : i32
    %c0_i32_0 = arith.constant 0 : i32
    %c0_i32_1 = arith.constant 0 : i32
    return %c0_i32, %c0_i32_0 : i32, i32
  }
  func.func @transform_6(%arg0: i32) -> (i32, i32) {
    %c0_i32 = arith.constant 0 : i32
    %c0_i32_0 = arith.constant 0 : i32
    %c0_i32_1 = arith.constant 0 : i32
    return %c0_i32, %c0_i32_0 : i32, i32
  }
  func.func @transform_7(%arg0: i32) -> (i32, i32, i32) {
    %c0_i32 = arith.constant 0 : i32
    %c0_i32_0 = arith.constant 0 : i32
    %c0_i32_1 = arith.constant 0 : i32
    return %arg0, %c0_i32, %c0_i32_0 : i32, i32, i32
  }
  func.func @transform_8(%arg0: i32) -> (i32, i32, i32) {
    %c0_i32 = arith.constant 0 : i32
    %c0_i32_0 = arith.constant 0 : i32
    %c0_i32_1 = arith.constant 0 : i32
    return %arg0, %c0_i32, %c0_i32_0 : i32, i32, i32
  }
}

module attributes {stable_mosaic.version = 11 : i64} {
  func.func @_encoder_block_kernel(%arg0: i32, %arg1: memref<1x3x256xf32, #tpu.memory_space<vmem>>, %arg2: memref<4x27xf32, #tpu.memory_space<vmem>>, %arg3: memref<4x1xf32, #tpu.memory_space<vmem>>, %arg4: memref<4x36xf32, #tpu.memory_space<vmem>>, %arg5: memref<4x1xf32, #tpu.memory_space<vmem>>, %arg6: memref<9x256xf32, #tpu.memory_space<vmem>>, %arg7: memref<256x64xf32, #tpu.memory_space<vmem>>, %arg8: memref<1x4x256xf32, #tpu.memory_space<vmem>>, %arg9: memref<1x4x64xf32, #tpu.memory_space<vmem>>) attributes {dimension_semantics = [#tpu.dimension_semantics<parallel>], iteration_bounds = array<i64: 2>, scalar_prefetch = 0 : i64, scratch_operands = 0 : i64, tpu.core_type = #tpu.core_type<tc>, window_params = [{transform_indices = @transform_0, window_bounds = array<i64: 1, 3, 256>}, {pipeline_mode = #tpu.pipeline_mode<synchronous>, transform_indices = @transform_1, window_bounds = array<i64: 4, 27>}, {pipeline_mode = #tpu.pipeline_mode<synchronous>, transform_indices = @transform_2, window_bounds = array<i64: 4, 1>}, {pipeline_mode = #tpu.pipeline_mode<synchronous>, transform_indices = @transform_3, window_bounds = array<i64: 4, 36>}, {pipeline_mode = #tpu.pipeline_mode<synchronous>, transform_indices = @transform_4, window_bounds = array<i64: 4, 1>}, {pipeline_mode = #tpu.pipeline_mode<synchronous>, transform_indices = @transform_5, window_bounds = array<i64: 9, 256>}, {pipeline_mode = #tpu.pipeline_mode<synchronous>, transform_indices = @transform_6, window_bounds = array<i64: 256, 64>}, {transform_indices = @transform_7, window_bounds = array<i64: 1, 4, 256>}, {transform_indices = @transform_8, window_bounds = array<i64: 1, 4, 64>}]} {
    %c0 = arith.constant 0 : index
    %c0_0 = arith.constant 0 : index
    %c0_1 = arith.constant 0 : index
    %0 = vector.load %arg1[%c0, %c0_0, %c0_1] : memref<1x3x256xf32, #tpu.memory_space<vmem>>, vector<1x3x256xf32>
    %1 = vector.shape_cast %0 : vector<1x3x256xf32> to vector<3x256xf32>
    %c0_2 = arith.constant 0 : index
    %c0_3 = arith.constant 0 : index
    %2 = vector.load %arg6[%c0_2, %c0_3] : memref<9x256xf32, #tpu.memory_space<vmem>>, vector<9x256xf32>
    %c0_4 = arith.constant 0 : index
    %c0_5 = arith.constant 0 : index
    %3 = vector.load %arg2[%c0_4, %c0_5] : memref<4x27xf32, #tpu.memory_space<vmem>>, vector<4x27xf32>
    %c0_6 = arith.constant 0 : index
    %c0_7 = arith.constant 0 : index
    %4 = vector.load %arg3[%c0_6, %c0_7] : memref<4x1xf32, #tpu.memory_space<vmem>>, vector<4x1xf32>
    %c17_i32 = arith.constant 17 : i32
    %5 = tpu.dynamic_rotate %1 by %c17_i32 dim 1 : vector<3x256xf32>, i32 -> vector<3x256xf32>
    %6 = vector.extract_strided_slice %2 {offsets = [0, 0], sizes = [1, 256], strides = [1, 1]} : vector<9x256xf32> to vector<1x256xf32>
    %7 = vector.broadcast %6 : vector<1x256xf32> to vector<3x256xf32>
    %8 = arith.mulf %5, %7 : vector<3x256xf32>
    %c16_i32 = arith.constant 16 : i32
    %9 = tpu.dynamic_rotate %1 by %c16_i32 dim 1 : vector<3x256xf32>, i32 -> vector<3x256xf32>
    %10 = vector.extract_strided_slice %2 {offsets = [1, 0], sizes = [1, 256], strides = [1, 1]} : vector<9x256xf32> to vector<1x256xf32>
    %11 = vector.broadcast %10 : vector<1x256xf32> to vector<3x256xf32>
    %12 = arith.mulf %9, %11 : vector<3x256xf32>
    %c15_i32 = arith.constant 15 : i32
    %13 = tpu.dynamic_rotate %1 by %c15_i32 dim 1 : vector<3x256xf32>, i32 -> vector<3x256xf32>
    %14 = vector.extract_strided_slice %2 {offsets = [2, 0], sizes = [1, 256], strides = [1, 1]} : vector<9x256xf32> to vector<1x256xf32>
    %15 = vector.broadcast %14 : vector<1x256xf32> to vector<3x256xf32>
    %16 = arith.mulf %13, %15 : vector<3x256xf32>
    %c1_i32 = arith.constant 1 : i32
    %17 = tpu.dynamic_rotate %1 by %c1_i32 dim 1 : vector<3x256xf32>, i32 -> vector<3x256xf32>
    %18 = vector.extract_strided_slice %2 {offsets = [3, 0], sizes = [1, 256], strides = [1, 1]} : vector<9x256xf32> to vector<1x256xf32>
    %19 = vector.broadcast %18 : vector<1x256xf32> to vector<3x256xf32>
    %20 = arith.mulf %17, %19 : vector<3x256xf32>
    %c255_i32 = arith.constant 255 : i32
    %21 = tpu.dynamic_rotate %1 by %c255_i32 dim 1 : vector<3x256xf32>, i32 -> vector<3x256xf32>
    %22 = vector.extract_strided_slice %2 {offsets = [5, 0], sizes = [1, 256], strides = [1, 1]} : vector<9x256xf32> to vector<1x256xf32>
    %23 = vector.broadcast %22 : vector<1x256xf32> to vector<3x256xf32>
    %24 = arith.mulf %21, %23 : vector<3x256xf32>
    %c241_i32 = arith.constant 241 : i32
    %25 = tpu.dynamic_rotate %1 by %c241_i32 dim 1 : vector<3x256xf32>, i32 -> vector<3x256xf32>
    %26 = vector.extract_strided_slice %2 {offsets = [6, 0], sizes = [1, 256], strides = [1, 1]} : vector<9x256xf32> to vector<1x256xf32>
    %27 = vector.broadcast %26 : vector<1x256xf32> to vector<3x256xf32>
    %28 = arith.mulf %25, %27 : vector<3x256xf32>
    %c240_i32 = arith.constant 240 : i32
    %29 = tpu.dynamic_rotate %1 by %c240_i32 dim 1 : vector<3x256xf32>, i32 -> vector<3x256xf32>
    %30 = vector.extract_strided_slice %2 {offsets = [7, 0], sizes = [1, 256], strides = [1, 1]} : vector<9x256xf32> to vector<1x256xf32>
    %31 = vector.broadcast %30 : vector<1x256xf32> to vector<3x256xf32>
    %32 = arith.mulf %29, %31 : vector<3x256xf32>
    %c239_i32 = arith.constant 239 : i32
    %33 = tpu.dynamic_rotate %1 by %c239_i32 dim 1 : vector<3x256xf32>, i32 -> vector<3x256xf32>
    %34 = vector.extract_strided_slice %2 {offsets = [8, 0], sizes = [1, 256], strides = [1, 1]} : vector<9x256xf32> to vector<1x256xf32>
    %35 = vector.broadcast %34 : vector<1x256xf32> to vector<3x256xf32>
    %36 = arith.mulf %33, %35 : vector<3x256xf32>
    %37 = tpu.concatenate %8, %12, %16, %20, %1, %24, %28, %32, %36 in 0 : vector<3x256xf32>, vector<3x256xf32>, vector<3x256xf32>, vector<3x256xf32>, vector<3x256xf32>, vector<3x256xf32>, vector<3x256xf32>, vector<3x256xf32>, vector<3x256xf32> -> vector<27x256xf32>
    %cst = arith.constant dense<0.000000e+00> : vector<4x256xf32>
    %38 = tpu.matmul %3, %37, %cst {dimension_numbers = #tpu.dot_dimension_numbers<[1], [0], [0], [1], [0, 0, 1, 1], [], []>} : vector<4x27xf32>, vector<27x256xf32>, vector<4x256xf32> -> vector<4x256xf32>
    %39 = vector.broadcast %4 : vector<4x1xf32> to vector<4x256xf32>
    %40 = arith.addf %38, %39 : vector<4x256xf32>
    %cst_8 = arith.constant 0.000000e+00 : f32
    %41 = vector.broadcast %cst_8 : f32 to vector<4x256xf32>
    %42 = arith.maximumf %40, %41 : vector<4x256xf32>
    %c0_9 = arith.constant 0 : index
    %c0_10 = arith.constant 0 : index
    %43 = vector.load %arg4[%c0_9, %c0_10] : memref<4x36xf32, #tpu.memory_space<vmem>>, vector<4x36xf32>
    %c0_11 = arith.constant 0 : index
    %c0_12 = arith.constant 0 : index
    %44 = vector.load %arg5[%c0_11, %c0_12] : memref<4x1xf32, #tpu.memory_space<vmem>>, vector<4x1xf32>
    %c17_i32_13 = arith.constant 17 : i32
    %45 = tpu.dynamic_rotate %42 by %c17_i32_13 dim 1 : vector<4x256xf32>, i32 -> vector<4x256xf32>
    %46 = vector.extract_strided_slice %2 {offsets = [0, 0], sizes = [1, 256], strides = [1, 1]} : vector<9x256xf32> to vector<1x256xf32>
    %47 = vector.broadcast %46 : vector<1x256xf32> to vector<4x256xf32>
    %48 = arith.mulf %45, %47 : vector<4x256xf32>
    %c16_i32_14 = arith.constant 16 : i32
    %49 = tpu.dynamic_rotate %42 by %c16_i32_14 dim 1 : vector<4x256xf32>, i32 -> vector<4x256xf32>
    %50 = vector.extract_strided_slice %2 {offsets = [1, 0], sizes = [1, 256], strides = [1, 1]} : vector<9x256xf32> to vector<1x256xf32>
    %51 = vector.broadcast %50 : vector<1x256xf32> to vector<4x256xf32>
    %52 = arith.mulf %49, %51 : vector<4x256xf32>
    %c15_i32_15 = arith.constant 15 : i32
    %53 = tpu.dynamic_rotate %42 by %c15_i32_15 dim 1 : vector<4x256xf32>, i32 -> vector<4x256xf32>
    %54 = vector.extract_strided_slice %2 {offsets = [2, 0], sizes = [1, 256], strides = [1, 1]} : vector<9x256xf32> to vector<1x256xf32>
    %55 = vector.broadcast %54 : vector<1x256xf32> to vector<4x256xf32>
    %56 = arith.mulf %53, %55 : vector<4x256xf32>
    %c1_i32_16 = arith.constant 1 : i32
    %57 = tpu.dynamic_rotate %42 by %c1_i32_16 dim 1 : vector<4x256xf32>, i32 -> vector<4x256xf32>
    %58 = vector.extract_strided_slice %2 {offsets = [3, 0], sizes = [1, 256], strides = [1, 1]} : vector<9x256xf32> to vector<1x256xf32>
    %59 = vector.broadcast %58 : vector<1x256xf32> to vector<4x256xf32>
    %60 = arith.mulf %57, %59 : vector<4x256xf32>
    %c255_i32_17 = arith.constant 255 : i32
    %61 = tpu.dynamic_rotate %42 by %c255_i32_17 dim 1 : vector<4x256xf32>, i32 -> vector<4x256xf32>
    %62 = vector.extract_strided_slice %2 {offsets = [5, 0], sizes = [1, 256], strides = [1, 1]} : vector<9x256xf32> to vector<1x256xf32>
    %63 = vector.broadcast %62 : vector<1x256xf32> to vector<4x256xf32>
    %64 = arith.mulf %61, %63 : vector<4x256xf32>
    %c241_i32_18 = arith.constant 241 : i32
    %65 = tpu.dynamic_rotate %42 by %c241_i32_18 dim 1 : vector<4x256xf32>, i32 -> vector<4x256xf32>
    %66 = vector.extract_strided_slice %2 {offsets = [6, 0], sizes = [1, 256], strides = [1, 1]} : vector<9x256xf32> to vector<1x256xf32>
    %67 = vector.broadcast %66 : vector<1x256xf32> to vector<4x256xf32>
    %68 = arith.mulf %65, %67 : vector<4x256xf32>
    %c240_i32_19 = arith.constant 240 : i32
    %69 = tpu.dynamic_rotate %42 by %c240_i32_19 dim 1 : vector<4x256xf32>, i32 -> vector<4x256xf32>
    %70 = vector.extract_strided_slice %2 {offsets = [7, 0], sizes = [1, 256], strides = [1, 1]} : vector<9x256xf32> to vector<1x256xf32>
    %71 = vector.broadcast %70 : vector<1x256xf32> to vector<4x256xf32>
    %72 = arith.mulf %69, %71 : vector<4x256xf32>
    %c239_i32_20 = arith.constant 239 : i32
    %73 = tpu.dynamic_rotate %42 by %c239_i32_20 dim 1 : vector<4x256xf32>, i32 -> vector<4x256xf32>
    %74 = vector.extract_strided_slice %2 {offsets = [8, 0], sizes = [1, 256], strides = [1, 1]} : vector<9x256xf32> to vector<1x256xf32>
    %75 = vector.broadcast %74 : vector<1x256xf32> to vector<4x256xf32>
    %76 = arith.mulf %73, %75 : vector<4x256xf32>
    %77 = tpu.concatenate %48, %52, %56, %60, %42, %64, %68, %72, %76 in 0 : vector<4x256xf32>, vector<4x256xf32>, vector<4x256xf32>, vector<4x256xf32>, vector<4x256xf32>, vector<4x256xf32>, vector<4x256xf32>, vector<4x256xf32>, vector<4x256xf32> -> vector<36x256xf32>
    %cst_21 = arith.constant dense<0.000000e+00> : vector<4x256xf32>
    %78 = tpu.matmul %43, %77, %cst_21 {dimension_numbers = #tpu.dot_dimension_numbers<[1], [0], [0], [1], [0, 0, 1, 1], [], []>} : vector<4x36xf32>, vector<36x256xf32>, vector<4x256xf32> -> vector<4x256xf32>
    %79 = vector.broadcast %44 : vector<4x1xf32> to vector<4x256xf32>
    %80 = arith.addf %78, %79 : vector<4x256xf32>
    %cst_22 = arith.constant 0.000000e+00 : f32
    %81 = vector.broadcast %cst_22 : f32 to vector<4x256xf32>
    %82 = arith.maximumf %80, %81 : vector<4x256xf32>
    %c0_23 = arith.constant 0 : index
    %c0_24 = arith.constant 0 : index
    %c0_25 = arith.constant 0 : index
    %83 = vector.load %arg8[%c0_23, %c0_24, %c0_25] : memref<1x4x256xf32, #tpu.memory_space<vmem>>, vector<1x4x256xf32>
    %84 = vector.shape_cast %83 : vector<1x4x256xf32> to vector<4x256xf32>
    %85 = vector.shape_cast %82 : vector<4x256xf32> to vector<1x4x256xf32>
    tpu.vector_store %arg8[%c0_23, %c0_24, %c0_25], %85 {strides = array<i32>} : memref<1x4x256xf32, #tpu.memory_space<vmem>>, vector<1x4x256xf32>,
    %c255_i32_26 = arith.constant 255 : i32
    %86 = tpu.dynamic_rotate %82 by %c255_i32_26 dim 1 : vector<4x256xf32>, i32 -> vector<4x256xf32>
    %87 = arith.maximumf %82, %86 : vector<4x256xf32>
    %c240_i32_27 = arith.constant 240 : i32
    %88 = tpu.dynamic_rotate %87 by %c240_i32_27 dim 1 : vector<4x256xf32>, i32 -> vector<4x256xf32>
    %89 = arith.maximumf %87, %88 : vector<4x256xf32>
    %c0_28 = arith.constant 0 : index
    %c0_29 = arith.constant 0 : index
    %90 = vector.load %arg7[%c0_28, %c0_29] : memref<256x64xf32, #tpu.memory_space<vmem>>, vector<256x64xf32>
    %cst_30 = arith.constant dense<0.000000e+00> : vector<4x64xf32>
    %91 = tpu.matmul %89, %90, %cst_30 {dimension_numbers = #tpu.dot_dimension_numbers<[1], [0], [0], [1], [0, 0, 1, 1], [], []>} : vector<4x256xf32>, vector<256x64xf32>, vector<4x64xf32> -> vector<4x64xf32>
    %c0_31 = arith.constant 0 : index
    %c0_32 = arith.constant 0 : index
    %c0_33 = arith.constant 0 : index
    %92 = vector.load %arg9[%c0_31, %c0_32, %c0_33] : memref<1x4x64xf32, #tpu.memory_space<vmem>>, vector<1x4x64xf32>
    %93 = vector.shape_cast %92 : vector<1x4x64xf32> to vector<4x64xf32>
    %94 = vector.shape_cast %91 : vector<4x64xf32> to vector<1x4x64xf32>
    tpu.vector_store %arg9[%c0_31, %c0_32, %c0_33], %94 {strides = array<i32>} : memref<1x4x64xf32, #tpu.memory_space<vmem>>, vector<1x4x64xf32>,
    return
  }
  func.func @transform_0(%arg0: i32) -> (i32, i32, i32) {
    %c0_i32 = arith.constant 0 : i32
    %c0_i32_0 = arith.constant 0 : i32
    %c0_i32_1 = arith.constant 0 : i32
    return %arg0, %c0_i32, %c0_i32_0 : i32, i32, i32
  }
  func.func @transform_1(%arg0: i32) -> (i32, i32) {
    %c0_i32 = arith.constant 0 : i32
    %c0_i32_0 = arith.constant 0 : i32
    %c0_i32_1 = arith.constant 0 : i32
    return %c0_i32, %c0_i32_0 : i32, i32
  }
  func.func @transform_2(%arg0: i32) -> (i32, i32) {
    %c0_i32 = arith.constant 0 : i32
    %c0_i32_0 = arith.constant 0 : i32
    %c0_i32_1 = arith.constant 0 : i32
    return %c0_i32, %c0_i32_0 : i32, i32
  }
  func.func @transform_3(%arg0: i32) -> (i32, i32) {
    %c0_i32 = arith.constant 0 : i32
    %c0_i32_0 = arith.constant 0 : i32
    %c0_i32_1 = arith.constant 0 : i32
    return %c0_i32, %c0_i32_0 : i32, i32
  }
  func.func @transform_4(%arg0: i32) -> (i32, i32) {
    %c0_i32 = arith.constant 0 : i32
    %c0_i32_0 = arith.constant 0 : i32
    %c0_i32_1 = arith.constant 0 : i32
    return %c0_i32, %c0_i32_0 : i32, i32
  }
  func.func @transform_5(%arg0: i32) -> (i32, i32) {
    %c0_i32 = arith.constant 0 : i32
    %c0_i32_0 = arith.constant 0 : i32
    %c0_i32_1 = arith.constant 0 : i32
    return %c0_i32, %c0_i32_0 : i32, i32
  }
  func.func @transform_6(%arg0: i32) -> (i32, i32) {
    %c0_i32 = arith.constant 0 : i32
    %c0_i32_0 = arith.constant 0 : i32
    %c0_i32_1 = arith.constant 0 : i32
    return %c0_i32, %c0_i32_0 : i32, i32
  }
  func.func @transform_7(%arg0: i32) -> (i32, i32, i32) {
    %c0_i32 = arith.constant 0 : i32
    %c0_i32_0 = arith.constant 0 : i32
    %c0_i32_1 = arith.constant 0 : i32
    return %arg0, %c0_i32, %c0_i32_0 : i32, i32, i32
  }
  func.func @transform_8(%arg0: i32) -> (i32, i32, i32) {
    %c0_i32 = arith.constant 0 : i32
    %c0_i32_0 = arith.constant 0 : i32
    %c0_i32_1 = arith.constant 0 : i32
    return %arg0, %c0_i32, %c0_i32_0 : i32, i32, i32
  }
}

module attributes {stable_mosaic.version = 11 : i64} {
  func.func @_encoder_block_kernel(%arg0: i32, %arg1: memref<1x8x16xf32, #tpu.memory_space<vmem>>, %arg2: memref<16x72xf32, #tpu.memory_space<vmem>>, %arg3: memref<16x1xf32, #tpu.memory_space<vmem>>, %arg4: memref<16x144xf32, #tpu.memory_space<vmem>>, %arg5: memref<16x1xf32, #tpu.memory_space<vmem>>, %arg6: memref<9x16xf32, #tpu.memory_space<vmem>>, %arg7: memref<1x16x16xf32, #tpu.memory_space<vmem>>) attributes {dimension_semantics = [#tpu.dimension_semantics<parallel>], iteration_bounds = array<i64: 2>, scalar_prefetch = 0 : i64, scratch_operands = 0 : i64, tpu.core_type = #tpu.core_type<tc>, window_params = [{transform_indices = @transform_0, window_bounds = array<i64: 1, 8, 16>}, {pipeline_mode = #tpu.pipeline_mode<synchronous>, transform_indices = @transform_1, window_bounds = array<i64: 16, 72>}, {pipeline_mode = #tpu.pipeline_mode<synchronous>, transform_indices = @transform_2, window_bounds = array<i64: 16, 1>}, {pipeline_mode = #tpu.pipeline_mode<synchronous>, transform_indices = @transform_3, window_bounds = array<i64: 16, 144>}, {pipeline_mode = #tpu.pipeline_mode<synchronous>, transform_indices = @transform_4, window_bounds = array<i64: 16, 1>}, {pipeline_mode = #tpu.pipeline_mode<synchronous>, transform_indices = @transform_5, window_bounds = array<i64: 9, 16>}, {transform_indices = @transform_6, window_bounds = array<i64: 1, 16, 16>}]} {
    %c0 = arith.constant 0 : index
    %c0_0 = arith.constant 0 : index
    %c0_1 = arith.constant 0 : index
    %0 = vector.load %arg1[%c0, %c0_0, %c0_1] : memref<1x8x16xf32, #tpu.memory_space<vmem>>, vector<1x8x16xf32>
    %1 = vector.shape_cast %0 : vector<1x8x16xf32> to vector<8x16xf32>
    %c0_2 = arith.constant 0 : index
    %c0_3 = arith.constant 0 : index
    %2 = vector.load %arg6[%c0_2, %c0_3] : memref<9x16xf32, #tpu.memory_space<vmem>>, vector<9x16xf32>
    %c0_4 = arith.constant 0 : index
    %c0_5 = arith.constant 0 : index
    %3 = vector.load %arg2[%c0_4, %c0_5] : memref<16x72xf32, #tpu.memory_space<vmem>>, vector<16x72xf32>
    %c0_6 = arith.constant 0 : index
    %c0_7 = arith.constant 0 : index
    %4 = vector.load %arg3[%c0_6, %c0_7] : memref<16x1xf32, #tpu.memory_space<vmem>>, vector<16x1xf32>
    %c5_i32 = arith.constant 5 : i32
    %5 = tpu.dynamic_rotate %1 by %c5_i32 dim 1 : vector<8x16xf32>, i32 -> vector<8x16xf32>
    %6 = vector.extract_strided_slice %2 {offsets = [0, 0], sizes = [1, 16], strides = [1, 1]} : vector<9x16xf32> to vector<1x16xf32>
    %7 = vector.broadcast %6 : vector<1x16xf32> to vector<8x16xf32>
    %8 = arith.mulf %5, %7 : vector<8x16xf32>
    %c4_i32 = arith.constant 4 : i32
    %9 = tpu.dynamic_rotate %1 by %c4_i32 dim 1 : vector<8x16xf32>, i32 -> vector<8x16xf32>
    %10 = vector.extract_strided_slice %2 {offsets = [1, 0], sizes = [1, 16], strides = [1, 1]} : vector<9x16xf32> to vector<1x16xf32>
    %11 = vector.broadcast %10 : vector<1x16xf32> to vector<8x16xf32>
    %12 = arith.mulf %9, %11 : vector<8x16xf32>
    %c3_i32 = arith.constant 3 : i32
    %13 = tpu.dynamic_rotate %1 by %c3_i32 dim 1 : vector<8x16xf32>, i32 -> vector<8x16xf32>
    %14 = vector.extract_strided_slice %2 {offsets = [2, 0], sizes = [1, 16], strides = [1, 1]} : vector<9x16xf32> to vector<1x16xf32>
    %15 = vector.broadcast %14 : vector<1x16xf32> to vector<8x16xf32>
    %16 = arith.mulf %13, %15 : vector<8x16xf32>
    %c1_i32 = arith.constant 1 : i32
    %17 = tpu.dynamic_rotate %1 by %c1_i32 dim 1 : vector<8x16xf32>, i32 -> vector<8x16xf32>
    %18 = vector.extract_strided_slice %2 {offsets = [3, 0], sizes = [1, 16], strides = [1, 1]} : vector<9x16xf32> to vector<1x16xf32>
    %19 = vector.broadcast %18 : vector<1x16xf32> to vector<8x16xf32>
    %20 = arith.mulf %17, %19 : vector<8x16xf32>
    %c15_i32 = arith.constant 15 : i32
    %21 = tpu.dynamic_rotate %1 by %c15_i32 dim 1 : vector<8x16xf32>, i32 -> vector<8x16xf32>
    %22 = vector.extract_strided_slice %2 {offsets = [5, 0], sizes = [1, 16], strides = [1, 1]} : vector<9x16xf32> to vector<1x16xf32>
    %23 = vector.broadcast %22 : vector<1x16xf32> to vector<8x16xf32>
    %24 = arith.mulf %21, %23 : vector<8x16xf32>
    %c13_i32 = arith.constant 13 : i32
    %25 = tpu.dynamic_rotate %1 by %c13_i32 dim 1 : vector<8x16xf32>, i32 -> vector<8x16xf32>
    %26 = vector.extract_strided_slice %2 {offsets = [6, 0], sizes = [1, 16], strides = [1, 1]} : vector<9x16xf32> to vector<1x16xf32>
    %27 = vector.broadcast %26 : vector<1x16xf32> to vector<8x16xf32>
    %28 = arith.mulf %25, %27 : vector<8x16xf32>
    %c12_i32 = arith.constant 12 : i32
    %29 = tpu.dynamic_rotate %1 by %c12_i32 dim 1 : vector<8x16xf32>, i32 -> vector<8x16xf32>
    %30 = vector.extract_strided_slice %2 {offsets = [7, 0], sizes = [1, 16], strides = [1, 1]} : vector<9x16xf32> to vector<1x16xf32>
    %31 = vector.broadcast %30 : vector<1x16xf32> to vector<8x16xf32>
    %32 = arith.mulf %29, %31 : vector<8x16xf32>
    %c11_i32 = arith.constant 11 : i32
    %33 = tpu.dynamic_rotate %1 by %c11_i32 dim 1 : vector<8x16xf32>, i32 -> vector<8x16xf32>
    %34 = vector.extract_strided_slice %2 {offsets = [8, 0], sizes = [1, 16], strides = [1, 1]} : vector<9x16xf32> to vector<1x16xf32>
    %35 = vector.broadcast %34 : vector<1x16xf32> to vector<8x16xf32>
    %36 = arith.mulf %33, %35 : vector<8x16xf32>
    %37 = tpu.concatenate %8, %12, %16, %20, %1, %24, %28, %32, %36 in 0 : vector<8x16xf32>, vector<8x16xf32>, vector<8x16xf32>, vector<8x16xf32>, vector<8x16xf32>, vector<8x16xf32>, vector<8x16xf32>, vector<8x16xf32>, vector<8x16xf32> -> vector<72x16xf32>
    %cst = arith.constant dense<0.000000e+00> : vector<16x16xf32>
    %38 = tpu.matmul %3, %37, %cst {dimension_numbers = #tpu.dot_dimension_numbers<[1], [0], [0], [1], [0, 0, 1, 1], [], []>} : vector<16x72xf32>, vector<72x16xf32>, vector<16x16xf32> -> vector<16x16xf32>
    %39 = vector.broadcast %4 : vector<16x1xf32> to vector<16x16xf32>
    %40 = arith.addf %38, %39 : vector<16x16xf32>
    %cst_8 = arith.constant 0.000000e+00 : f32
    %41 = vector.broadcast %cst_8 : f32 to vector<16x16xf32>
    %42 = arith.maximumf %40, %41 : vector<16x16xf32>
    %c0_9 = arith.constant 0 : index
    %c0_10 = arith.constant 0 : index
    %43 = vector.load %arg4[%c0_9, %c0_10] : memref<16x144xf32, #tpu.memory_space<vmem>>, vector<16x144xf32>
    %c0_11 = arith.constant 0 : index
    %c0_12 = arith.constant 0 : index
    %44 = vector.load %arg5[%c0_11, %c0_12] : memref<16x1xf32, #tpu.memory_space<vmem>>, vector<16x1xf32>
    %c5_i32_13 = arith.constant 5 : i32
    %45 = tpu.dynamic_rotate %42 by %c5_i32_13 dim 1 : vector<16x16xf32>, i32 -> vector<16x16xf32>
    %46 = vector.extract_strided_slice %2 {offsets = [0, 0], sizes = [1, 16], strides = [1, 1]} : vector<9x16xf32> to vector<1x16xf32>
    %47 = vector.broadcast %46 : vector<1x16xf32> to vector<16x16xf32>
    %48 = arith.mulf %45, %47 : vector<16x16xf32>
    %c4_i32_14 = arith.constant 4 : i32
    %49 = tpu.dynamic_rotate %42 by %c4_i32_14 dim 1 : vector<16x16xf32>, i32 -> vector<16x16xf32>
    %50 = vector.extract_strided_slice %2 {offsets = [1, 0], sizes = [1, 16], strides = [1, 1]} : vector<9x16xf32> to vector<1x16xf32>
    %51 = vector.broadcast %50 : vector<1x16xf32> to vector<16x16xf32>
    %52 = arith.mulf %49, %51 : vector<16x16xf32>
    %c3_i32_15 = arith.constant 3 : i32
    %53 = tpu.dynamic_rotate %42 by %c3_i32_15 dim 1 : vector<16x16xf32>, i32 -> vector<16x16xf32>
    %54 = vector.extract_strided_slice %2 {offsets = [2, 0], sizes = [1, 16], strides = [1, 1]} : vector<9x16xf32> to vector<1x16xf32>
    %55 = vector.broadcast %54 : vector<1x16xf32> to vector<16x16xf32>
    %56 = arith.mulf %53, %55 : vector<16x16xf32>
    %c1_i32_16 = arith.constant 1 : i32
    %57 = tpu.dynamic_rotate %42 by %c1_i32_16 dim 1 : vector<16x16xf32>, i32 -> vector<16x16xf32>
    %58 = vector.extract_strided_slice %2 {offsets = [3, 0], sizes = [1, 16], strides = [1, 1]} : vector<9x16xf32> to vector<1x16xf32>
    %59 = vector.broadcast %58 : vector<1x16xf32> to vector<16x16xf32>
    %60 = arith.mulf %57, %59 : vector<16x16xf32>
    %c15_i32_17 = arith.constant 15 : i32
    %61 = tpu.dynamic_rotate %42 by %c15_i32_17 dim 1 : vector<16x16xf32>, i32 -> vector<16x16xf32>
    %62 = vector.extract_strided_slice %2 {offsets = [5, 0], sizes = [1, 16], strides = [1, 1]} : vector<9x16xf32> to vector<1x16xf32>
    %63 = vector.broadcast %62 : vector<1x16xf32> to vector<16x16xf32>
    %64 = arith.mulf %61, %63 : vector<16x16xf32>
    %c13_i32_18 = arith.constant 13 : i32
    %65 = tpu.dynamic_rotate %42 by %c13_i32_18 dim 1 : vector<16x16xf32>, i32 -> vector<16x16xf32>
    %66 = vector.extract_strided_slice %2 {offsets = [6, 0], sizes = [1, 16], strides = [1, 1]} : vector<9x16xf32> to vector<1x16xf32>
    %67 = vector.broadcast %66 : vector<1x16xf32> to vector<16x16xf32>
    %68 = arith.mulf %65, %67 : vector<16x16xf32>
    %c12_i32_19 = arith.constant 12 : i32
    %69 = tpu.dynamic_rotate %42 by %c12_i32_19 dim 1 : vector<16x16xf32>, i32 -> vector<16x16xf32>
    %70 = vector.extract_strided_slice %2 {offsets = [7, 0], sizes = [1, 16], strides = [1, 1]} : vector<9x16xf32> to vector<1x16xf32>
    %71 = vector.broadcast %70 : vector<1x16xf32> to vector<16x16xf32>
    %72 = arith.mulf %69, %71 : vector<16x16xf32>
    %c11_i32_20 = arith.constant 11 : i32
    %73 = tpu.dynamic_rotate %42 by %c11_i32_20 dim 1 : vector<16x16xf32>, i32 -> vector<16x16xf32>
    %74 = vector.extract_strided_slice %2 {offsets = [8, 0], sizes = [1, 16], strides = [1, 1]} : vector<9x16xf32> to vector<1x16xf32>
    %75 = vector.broadcast %74 : vector<1x16xf32> to vector<16x16xf32>
    %76 = arith.mulf %73, %75 : vector<16x16xf32>
    %77 = tpu.concatenate %48, %52, %56, %60, %42, %64, %68, %72, %76 in 0 : vector<16x16xf32>, vector<16x16xf32>, vector<16x16xf32>, vector<16x16xf32>, vector<16x16xf32>, vector<16x16xf32>, vector<16x16xf32>, vector<16x16xf32>, vector<16x16xf32> -> vector<144x16xf32>
    %cst_21 = arith.constant dense<0.000000e+00> : vector<16x16xf32>
    %78 = tpu.matmul %43, %77, %cst_21 {dimension_numbers = #tpu.dot_dimension_numbers<[1], [0], [0], [1], [0, 0, 1, 1], [], []>} : vector<16x144xf32>, vector<144x16xf32>, vector<16x16xf32> -> vector<16x16xf32>
    %79 = vector.broadcast %44 : vector<16x1xf32> to vector<16x16xf32>
    %80 = arith.addf %78, %79 : vector<16x16xf32>
    %cst_22 = arith.constant 0.000000e+00 : f32
    %81 = vector.broadcast %cst_22 : f32 to vector<16x16xf32>
    %82 = arith.maximumf %80, %81 : vector<16x16xf32>
    %c0_23 = arith.constant 0 : index
    %c0_24 = arith.constant 0 : index
    %c0_25 = arith.constant 0 : index
    %83 = vector.load %arg7[%c0_23, %c0_24, %c0_25] : memref<1x16x16xf32, #tpu.memory_space<vmem>>, vector<1x16x16xf32>
    %84 = vector.shape_cast %83 : vector<1x16x16xf32> to vector<16x16xf32>
    %85 = vector.shape_cast %82 : vector<16x16xf32> to vector<1x16x16xf32>
    tpu.vector_store %arg7[%c0_23, %c0_24, %c0_25], %85 {strides = array<i32>} : memref<1x16x16xf32, #tpu.memory_space<vmem>>, vector<1x16x16xf32>,
    return
  }
  func.func @transform_0(%arg0: i32) -> (i32, i32, i32) {
    %c0_i32 = arith.constant 0 : i32
    %c0_i32_0 = arith.constant 0 : i32
    %c0_i32_1 = arith.constant 0 : i32
    return %arg0, %c0_i32, %c0_i32_0 : i32, i32, i32
  }
  func.func @transform_1(%arg0: i32) -> (i32, i32) {
    %c0_i32 = arith.constant 0 : i32
    %c0_i32_0 = arith.constant 0 : i32
    %c0_i32_1 = arith.constant 0 : i32
    return %c0_i32, %c0_i32_0 : i32, i32
  }
  func.func @transform_2(%arg0: i32) -> (i32, i32) {
    %c0_i32 = arith.constant 0 : i32
    %c0_i32_0 = arith.constant 0 : i32
    %c0_i32_1 = arith.constant 0 : i32
    return %c0_i32, %c0_i32_0 : i32, i32
  }
  func.func @transform_3(%arg0: i32) -> (i32, i32) {
    %c0_i32 = arith.constant 0 : i32
    %c0_i32_0 = arith.constant 0 : i32
    %c0_i32_1 = arith.constant 0 : i32
    return %c0_i32, %c0_i32_0 : i32, i32
  }
  func.func @transform_4(%arg0: i32) -> (i32, i32) {
    %c0_i32 = arith.constant 0 : i32
    %c0_i32_0 = arith.constant 0 : i32
    %c0_i32_1 = arith.constant 0 : i32
    return %c0_i32, %c0_i32_0 : i32, i32
  }
  func.func @transform_5(%arg0: i32) -> (i32, i32) {
    %c0_i32 = arith.constant 0 : i32
    %c0_i32_0 = arith.constant 0 : i32
    %c0_i32_1 = arith.constant 0 : i32
    return %c0_i32, %c0_i32_0 : i32, i32
  }
  func.func @transform_6(%arg0: i32) -> (i32, i32, i32) {
    %c0_i32 = arith.constant 0 : i32
    %c0_i32_0 = arith.constant 0 : i32
    %c0_i32_1 = arith.constant 0 : i32
    return %arg0, %c0_i32, %c0_i32_0 : i32, i32, i32
  }
}

</mosaic_0001>

<llo_original>
// kernel: encoder_forward.5
$region0: #{encoder_forward.5}
  #allocation0 [shape = 'u32[]', space=smem, size = 0x4, offset = 0x4, fixed_abs, tag = 'smem constant byte address 0x4 - core index']
  #allocation1 [shape = 'u32[144,128]{1,0:T(1,128)}', space=vmem, size = 0x12000, scoped, tag = 'internal scratch']
  %s0 = inlined_call_operand.vmem [shape: f32[2,8,16], index: 0, kind: input, shape index: {}]
  %s1 = inlined_call_operand.vmem [shape: f32[16,72], index: 1, kind: input, shape index: {}]
  %s2 = inlined_call_operand.vmem [shape: f32[16,1], index: 2, kind: input, shape index: {}]
  %s3 = inlined_call_operand.vmem [shape: f32[16,144], index: 3, kind: input, shape index: {}]
  %s4 = inlined_call_operand.vmem [shape: f32[16,1], index: 4, kind: input, shape index: {}]
  %s5 = inlined_call_operand.vmem [shape: f32[9,16], index: 5, kind: input, shape index: {}]
  %s6 = inlined_call_operand.vmem [shape: f32[2,16,16], index: 6, kind: output, shape index: {}]
  %s7 = sld [smem:[#allocation0]]
  $region57: #{encoder_forward.5} parent=0
    _
  %s9 = ssub.s32 1, %s7
  %s10 = scalar_select 0, %s9, %s7
  loop: start=0, step=1, limit=4
  $region2: #{encoder_forward.5} parent=0 // loop_pre_header
    _
  $region3: #{encoder_forward.5} parent=0 // loop_header
    %s12 = sphi 0, %s16
    %p13 = scmp.ge.s32.totalorder %s12, 4
    %s22 = sphi 0, %s24
    %s25 = sphi 0, %s22
    %s26 = sphi 0, %s25
    %s42 = sphi 0, %s26
    %s46 = sphi 0, %s46
    %s48 = sphi 0, %s46
    %s49 = sphi 0, %s48
    %s63 = sphi 0, %s49
    %s67 = sphi 0, %s67
    %s69 = sphi 0, %s67
    %s70 = sphi 0, %s69
    %s84 = sphi 0, %s70
    %s88 = sphi 0, %s88
    %s90 = sphi 0, %s88
    %s91 = sphi 0, %s90
    %s105 = sphi 0, %s91
    %s109 = sphi 0, %s109
    %s111 = sphi 0, %s109
    %s112 = sphi 0, %s111
    %s126 = sphi 0, %s112
    %s130 = sphi 0, %s130
    %s132 = sphi 0, %s130
    %s133 = sphi 0, %s132
    %s147 = sphi 0, %s133
    %s153 = sphi 0, %s155
    %s156 = sphi 0, %s153
    %s157 = sphi 0, %s156
    %s173 = sphi 0, %s157
  $region4: #{encoder_forward.5} parent=0 // loop_header_branch
    %15 = sbr.rel (%p13) target = $region8
  $region5: #{encoder_forward.5} parent=0 // loop_body
    %s17 = ssub.s32 %s12, 1
    %s18 = ssub.s32 %s12, 2
    %s19 = sadd.s32 %s12, 1
    %s20 = ssub.s32 %s12, %s19
    %p21 = scmp.eq.s32.totalorder %s20, 0
    %s23 = sadd.s32 %s22, 1
    %s24 = scalar_select %p21, %s22, %s23
    %p27 = pneg %p21
    %p28 = scmp.eq.s32.totalorder %s12, 1
    %p29 = por %p27, %p28
    %p30 = scmp.ne.s32.totalorder %s22, %s25
    %p31 = scmp.eq.s32.totalorder %s12, 0
    %p32 = por %p30, %p31
    %p33 = scmp.ne.s32.totalorder %s22, %s25
    %p34 = scmp.eq.s32.totalorder %s17, 1
    %p35 = por %p33, %p34
    %p36 = scmp.ne.s32.totalorder %s25, %s26
    %p37 = scmp.eq.s32.totalorder %s17, 0
    %p38 = por %p36, %p37
    %p39 = scmp.ne.s32.totalorder %s25, %s26
    %p40 = scmp.eq.s32.totalorder %s18, 1
    %p41 = por %p39, %p40
    %p43 = scmp.ne.s32.totalorder %s26, %s42
    %p44 = scmp.eq.s32.totalorder %s18, 0
    %p45 = por %p43, %p44
    %s47 = sadd.s32 %s46, 1
    %p50 = scmp.eq.s32.totalorder %s12, 1
    %p51 = scmp.ne.s32.totalorder %s46, %s48
    %p52 = scmp.eq.s32.totalorder %s12, 0
    %p53 = por %p51, %p52
    %p54 = scmp.ne.s32.totalorder %s46, %s48
    %p55 = scmp.eq.s32.totalorder %s17, 1
    %p56 = por %p54, %p55
    %p57 = scmp.ne.s32.totalorder %s48, %s49
    %p58 = scmp.eq.s32.totalorder %s17, 0
    %p59 = por %p57, %p58
    %p60 = scmp.ne.s32.totalorder %s48, %s49
    %p61 = scmp.eq.s32.totalorder %s18, 1
    %p62 = por %p60, %p61
    %p64 = scmp.ne.s32.totalorder %s49, %s63
    %p65 = scmp.eq.s32.totalorder %s18, 0
    %p66 = por %p64, %p65
    %s68 = sadd.s32 %s67, 1
    %p71 = scmp.eq.s32.totalorder %s12, 1
    %p72 = scmp.ne.s32.totalorder %s67, %s69
    %p73 = scmp.eq.s32.totalorder %s12, 0
    %p74 = por %p72, %p73
    %p75 = scmp.ne.s32.totalorder %s67, %s69
    %p76 = scmp.eq.s32.totalorder %s17, 1
    %p77 = por %p75, %p76
    %p78 = scmp.ne.s32.totalorder %s69, %s70
    %p79 = scmp.eq.s32.totalorder %s17, 0
    %p80 = por %p78, %p79
    %p81 = scmp.ne.s32.totalorder %s69, %s70
    %p82 = scmp.eq.s32.totalorder %s18, 1
    %p83 = por %p81, %p82
    %p85 = scmp.ne.s32.totalorder %s70, %s84
    %p86 = scmp.eq.s32.totalorder %s18, 0
    %p87 = por %p85, %p86
    %s89 = sadd.s32 %s88, 1
    %p92 = scmp.eq.s32.totalorder %s12, 1
    %p93 = scmp.ne.s32.totalorder %s88, %s90
    %p94 = scmp.eq.s32.totalorder %s12, 0
    %p95 = por %p93, %p94
    %p96 = scmp.ne.s32.totalorder %s88, %s90
    %p97 = scmp.eq.s32.totalorder %s17, 1
    %p98 = por %p96, %p97
    %p99 = scmp.ne.s32.totalorder %s90, %s91
    %p100 = scmp.eq.s32.totalorder %s17, 0
    %p101 = por %p99, %p100
    %p102 = scmp.ne.s32.totalorder %s90, %s91
    %p103 = scmp.eq.s32.totalorder %s18, 1
    %p104 = por %p102, %p103
    %p106 = scmp.ne.s32.totalorder %s91, %s105
    %p107 = scmp.eq.s32.totalorder %s18, 0
    %p108 = por %p106, %p107
    %s110 = sadd.s32 %s109, 1
    %p113 = scmp.eq.s32.totalorder %s12, 1
    %p114 = scmp.ne.s32.totalorder %s109, %s111
    %p115 = scmp.eq.s32.totalorder %s12, 0
    %p116 = por %p114, %p115
    %p117 = scmp.ne.s32.totalorder %s109, %s111
    %p118 = scmp.eq.s32.totalorder %s17, 1
    %p119 = por %p117, %p118
    %p120 = scmp.ne.s32.totalorder %s111, %s112
    %p121 = scmp.eq.s32.totalorder %s17, 0
    %p122 = por %p120, %p121
    %p123 = scmp.ne.s32.totalorder %s111, %s112
    %p124 = scmp.eq.s32.totalorder %s18, 1
    %p125 = por %p123, %p124
    %p127 = scmp.ne.s32.totalorder %s112, %s126
    %p128 = scmp.eq.s32.totalorder %s18, 0
    %p129 = por %p127, %p128
    %s131 = sadd.s32 %s130, 1
    %p134 = scmp.eq.s32.totalorder %s12, 1
    %p135 = scmp.ne.s32.totalorder %s130, %s132
    %p136 = scmp.eq.s32.totalorder %s12, 0
    %p137 = por %p135, %p136
    %p138 = scmp.ne.s32.totalorder %s130, %s132
    %p139 = scmp.eq.s32.totalorder %s17, 1
    %p140 = por %p138, %p139
    %p141 = scmp.ne.s32.totalorder %s132, %s133
    %p142 = scmp.eq.s32.totalorder %s17, 0
    %p143 = por %p141, %p142
    %p144 = scmp.ne.s32.totalorder %s132, %s133
    %p145 = scmp.eq.s32.totalorder %s18, 1
    %p146 = por %p144, %p145
    %p148 = scmp.ne.s32.totalorder %s133, %s147
    %p149 = scmp.eq.s32.totalorder %s18, 0
    %p150 = por %p148, %p149
    %s151 = ssub.s32 %s12, %s19
    %p152 = scmp.eq.s32.totalorder %s151, 0
    %s154 = sadd.s32 %s153, 1
    %s155 = scalar_select %p152, %s153, %s154
    %p158 = pneg %p152
    %p159 = scmp.eq.s32.totalorder %s12, 1
    %p160 = por %p158, %p159
    %p161 = scmp.ne.s32.totalorder %s153, %s156
    %p162 = scmp.eq.s32.totalorder %s12, 0
    %p163 = por %p161, %p162
    %p164 = scmp.ne.s32.totalorder %s153, %s156
    %p165 = scmp.eq.s32.totalorder %s17, 1
    %p166 = por %p164, %p165
    %p167 = scmp.ne.s32.totalorder %s156, %s157
    %p168 = scmp.eq.s32.totalorder %s17, 0
    %p169 = por %p167, %p168
    %p170 = scmp.ne.s32.totalorder %s156, %s157
    %p171 = scmp.eq.s32.totalorder %s18, 1
    %p172 = por %p170, %p171
    %p174 = scmp.ne.s32.totalorder %s157, %s173
    %p175 = scmp.eq.s32.totalorder %s18, 0
    %p176 = por %p174, %p175
    %p177 = scmp.le.s32.totalorder 1, %s12
    %p178 = scmp.lt.s32.totalorder %s12, 3
    %p179 = pnand %p177, %p178
    %p180 = pneg %p179
    // Predicated region
    $region9: #{encoder_forward.5} parent=5 // pred_check
      _
    $region10: #{encoder_forward.5} parent=5 // pred_check_branch
      %182 = sbr.rel (%p179) target = $region12
    $region11: #{encoder_forward.5} parent=5 // pred_region
      %s183 = ssub.s32 %s12, 1
      // Predicated region
      $region13: #{encoder_forward.5} parent=11 // pred_check
        %p184 = pneg %p59
      $region14: #{encoder_forward.5} parent=11 // pred_check_branch
        %186 = sbr.rel (%p184) target = $region16
      $region15: #{encoder_forward.5} parent=11 // pred_region
        _
      $region16: #{encoder_forward.5} parent=11 // pred_fallthru
        _
      // Predicated region
      $region17: #{encoder_forward.5} parent=11 // pred_check
        %p187 = pneg %p80
      $region18: #{encoder_forward.5} parent=11 // pred_check_branch
        %189 = sbr.rel (%p187) target = $region20
      $region19: #{encoder_forward.5} parent=11 // pred_region
        _
      $region20: #{encoder_forward.5} parent=11 // pred_fallthru
        _
      // Predicated region
      $region21: #{encoder_forward.5} parent=11 // pred_check
        %p190 = pneg %p101
      $region22: #{encoder_forward.5} parent=11 // pred_check_branch
        %192 = sbr.rel (%p190) target = $region24
      $region23: #{encoder_forward.5} parent=11 // pred_region
        _
      $region24: #{encoder_forward.5} parent=11 // pred_fallthru
        _
      // Predicated region
      $region25: #{encoder_forward.5} parent=11 // pred_check
        %p193 = pneg %p122
      $region26: #{encoder_forward.5} parent=11 // pred_check_branch
        %195 = sbr.rel (%p193) target = $region28
      $region27: #{encoder_forward.5} parent=11 // pred_region
        _
      $region28: #{encoder_forward.5} parent=11 // pred_fallthru
        _
      // Predicated region
      $region29: #{encoder_forward.5} parent=11 // pred_check
        %p196 = pneg %p143
      $region30: #{encoder_forward.5} parent=11 // pred_check_branch
        %198 = sbr.rel (%p196) target = $region32
      $region31: #{encoder_forward.5} parent=11 // pred_region
        _
      $region32: #{encoder_forward.5} parent=11 // pred_fallthru
        _
    $region12: #{encoder_forward.5} parent=5 // pred_fallthru
      _
    %p199 = scmp.lt.s32.totalorder %s12, 2
    // Predicated region
    $region33: #{encoder_forward.5} parent=5 // pred_check
      %p200 = pneg %p199
    $region34: #{encoder_forward.5} parent=5 // pred_check_branch
      %202 = sbr.rel (%p200) target = $region36
    $region35: #{encoder_forward.5} parent=5 // pred_region
      // Predicated region
      $region37: #{encoder_forward.5} parent=35 // pred_check
        %p203 = pneg %p32
      $region38: #{encoder_forward.5} parent=35 // pred_check_branch
        %205 = sbr.rel (%p203) target = $region40
      $region39: #{encoder_forward.5} parent=35 // pred_region
        %p206 = scmp.lt.s32.totalorder %s12, 1
        %s207 = scalar_select %p206, %s12, 1
        %s208 = smul.addr %s207, 8
        %s209 = scalar_lea.vmem %s0, %s208
      $region40: #{encoder_forward.5} parent=35 // pred_fallthru
        _
    $region36: #{encoder_forward.5} parent=5 // pred_fallthru
      _
    %p210 = scmp.le.s32.totalorder 1, %s12
    %p211 = scmp.lt.s32.totalorder %s12, 3
    %p212 = pnand %p210, %p211
    %p213 = pneg %p212
    // Predicated region
    $region41: #{encoder_forward.5} parent=5 // pred_check
      _
    $region42: #{encoder_forward.5} parent=5 // pred_check_branch
      %215 = sbr.rel (%p212) target = $region44
    $region43: #{encoder_forward.5} parent=5 // pred_region
      %s216 = ssub.s32 %s12, 1
      %p217 = scmp.lt.s32.totalorder %s17, 1
      %s218 = scalar_select %p217, %s17, 1
      %s219 = smul.addr %s218, 8
      %s220 = scalar_lea.vmem %s0, %s219
      %p221 = pneg %p38
      %p222 = pneg %p35
      %p223 = pneg %p59
      %p224 = pneg %p56
      %p225 = pneg %p80
      %p226 = pneg %p77
      %p227 = pneg %p101
      %p228 = pneg %p98
      %p229 = pneg %p122
      %p230 = pneg %p119
      %p231 = pneg %p143
      %p232 = pneg %p140
      %p233 = pneg %p169
      %p234 = pneg %p166
      %p235 = scmp.lt.s32.totalorder %s17, 1
      %s236 = scalar_select %p235, %s17, 1
      %s237 = smul.addr %s236, 2
      %s238 = smul.addr %s237, 8
      %s239 = scalar_lea.vmem %s6, %s238
      %p240 = scmp.lt.s32.totalorder %s17, 1
      %s241 = scalar_select %p240, %s17, 1
      %s242 = smul.addr %s241, 8
      %s243 = scalar_lea.vmem %s0, %s242
      %p244 = scmp.lt.s32.totalorder %s17, 1
      %s245 = scalar_select %p244, %s17, 1
      %s246 = smul.addr %s245, 2
      %s247 = smul.addr %s246, 8
      %s248 = scalar_lea.vmem %s6, %s247
      %v249 = vld [vmem:[%s243] sm:$0xff]
      %v250 = vld [vmem:[%s5] sm:$0xff]
      %v251 = vld [vmem:[%s5 + $0x8] sm:$0x1]
      %v252 = vld [vmem:[%s1] sm:$0xff]
      %v253 = vld [vmem:[%s1 + $0x8] sm:$0xff]
      %v254 = vld [vmem:[%s2] sm:$0xff]
      %v255 = vld [vmem:[%s2 + $0x8] sm:$0xff]
      %vm256 = vcmask 1047680
      %257 = vrot.lane.b32.xlu0 %v249, 16
      %v258 = vpop.permute.xlu0 %257
      %v259 = vsel %vm256, %v258, %v249
      %260 = vrot.lane.b32.xlu0 %v259, 16
      %v261 = vpop.permute.xlu0 %260
      %v262 = vsel %vm256, %v261, %v249
      %v263 = vlaneseq
      %v264 = vshrl.u32 %v263, 7
      %v265 = vsub.s32 0, %v264
      %v266 = vrot.slane %v250, %v265
      %268 = vrot.lane.b32.xlu0 %v266, 11
      %v269 = vpop.permute.xlu0 %268
      %v271 = vmul.f32 %v262, %v269
      %v272 = vlaneseq
      %v273 = vshrl.u32 %v272, 7
      %v274 = vsub.s32 1, %v273
      %v275 = vrot.slane %v250, %v274
      %277 = vrot.lane.b32.xlu0 %v275, 12
      %v278 = vpop.permute.xlu0 %277
      %v280 = vmul.f32 %v262, %v278
      %v281 = vlaneseq
      %v282 = vshrl.u32 %v281, 7
      %v283 = vsub.s32 2, %v282
      %v284 = vrot.slane %v250, %v283
      %286 = vrot.lane.b32.xlu0 %v284, 13
      %v287 = vpop.permute.xlu0 %286
      %v289 = vmul.f32 %v262, %v287
      %v290 = vlaneseq
      %v291 = vshrl.u32 %v290, 7
      %v292 = vsub.s32 3, %v291
      %v293 = vrot.slane %v250, %v292
      %295 = vrot.lane.b32.xlu0 %v293, 15
      %v296 = vpop.permute.xlu0 %295
      %v298 = vmul.f32 %v262, %v296
      %v299 = vlaneseq
      %v300 = vshrl.u32 %v299, 7
      %v301 = vsub.s32 5, %v300
      %v302 = vrot.slane %v250, %v301
      %304 = vrot.lane.b32.xlu0 %v302, 1
      %v305 = vpop.permute.xlu0 %304
      %v307 = vmul.f32 %v262, %v305
      %v308 = vlaneseq
      %v309 = vshrl.u32 %v308, 7
      %v310 = vsub.s32 6, %v309
      %v311 = vrot.slane %v250, %v310
      %313 = vrot.lane.b32.xlu0 %v311, 3
      %v314 = vpop.permute.xlu0 %313
      %v316 = vmul.f32 %v262, %v314
      %v317 = vlaneseq
      %v318 = vshrl.u32 %v317, 7
      %v319 = vsub.s32 7, %v318
      %v320 = vrot.slane %v250, %v319
      %322 = vrot.lane.b32.xlu0 %v320, 4
      %v323 = vpop.permute.xlu0 %322
      %v325 = vmul.f32 %v262, %v323
      %v326 = vlaneseq
      %v327 = vshrl.u32 %v326, 7
      %v328 = vsub.s32 0, %v327
      %v329 = vrot.slane %v251, %v328
      %331 = vrot.lane.b32.xlu0 %v329, 5
      %v332 = vpop.permute.xlu0 %331
      %v334 = vmul.f32 %v262, %v332
      %336 = vrot.lane.b32.xlu0 %v280, 127
      %v337 = vpop.permute.xlu0 %336
      %339 = vrot.lane.b32.xlu0 %v289, 126
      %v340 = vpop.permute.xlu0 %339
      %342 = vrot.lane.b32.xlu0 %v298, 124
      %v343 = vpop.permute.xlu0 %342
      %345 = vrot.lane.b32.xlu0 %v249, 11
      %v346 = vpop.permute.xlu0 %345
      %348 = vrot.lane.b32.xlu0 %v307, 10
      %v349 = vpop.permute.xlu0 %348
      %351 = vrot.lane.b32.xlu0 %v316, 8
      %v352 = vpop.permute.xlu0 %351
      %354 = vrot.lane.b32.xlu0 %v325, 7
      %v355 = vpop.permute.xlu0 %354
      %357 = vrot.lane.b32.xlu0 %v334, 6
      %v358 = vpop.permute.xlu0 %357
      %360 = vset.pattern.permute.xlu0 0
      %361 = vperm.xlu0 %360, %v254
      %v362 = vpop.permute.xlu0 %361
      %365 = vset.pattern.permute.xlu0 0
      %366 = vperm.xlu0 %365, %v255
      %v367 = vpop.permute.xlu0 %366
      %370 = vrot.lane.b32.xlu0 %v271, 117
      %v371 = vpop.permute.xlu0 %370
      %372 = vrot.lane.b32.xlu0 %v337, 117
      %v373 = vpop.permute.xlu0 %372
      %374 = vrot.lane.b32.xlu0 %v340, 117
      %v375 = vpop.permute.xlu0 %374
      %376 = vrot.lane.b32.xlu0 %v343, 117
      %v377 = vpop.permute.xlu0 %376
      %378 = vrot.lane.b32.xlu0 %v346, 117
      %v379 = vpop.permute.xlu0 %378
      %380 = vrot.lane.b32.xlu0 %v349, 117
      %v381 = vpop.permute.xlu0 %380
      %382 = vrot.lane.b32.xlu0 %v352, 117
      %v383 = vpop.permute.xlu0 %382
      %384 = vrot.lane.b32.xlu0 %v355, 117
      %v385 = vpop.permute.xlu0 %384
      %386 = vrot.lane.b32.xlu0 %v358, 117
      %v387 = vpop.permute.xlu0 %386
      %vm397 = vcmask 588800
      %v399 = vsel %vm397, %v252, 0
      %v402 = vsel %vm397, %v253, 0
      %404 = vmatprep.subr.mxu0 0.0
      %405 = vmatpush1.msra.mxu0 0.0
      %406 = vmatprep.subr.mxu0 0.0
      %407 = vmatpush1.msra.mxu0 0.0
      %408 = vmatprep.subr.mxu0 0.0
      %409 = vmatpush1.msra.mxu0 0.0
      %410 = vmatprep.subr.mxu0 0.0
      %411 = vmatpush1.msra.mxu0 0.0
      %412 = vmatprep.subr.mxu0 0.0
      %413 = vmatpush1.msra.mxu0 0.0
      %414 = vmatprep.subr.mxu0 0.0
      %415 = vmatpush1.msra.mxu0 0.0
      %416 = vmatprep.subr.mxu0 0.0
      %417 = vmatpush1.msra.mxu0 0.0
      %418 = vmatprep.subr.mxu0 0.0
      %419 = vmatpush1.msra.mxu0 %v387
      %420 = vmatprep.subr.mxu0 0.0
      %421 = vmatpush1.msra.mxu0 %v385
      %422 = vmatprep.subr.mxu0 0.0
      %423 = vmatpush1.msra.mxu0 %v383
      %424 = vmatprep.subr.mxu0 0.0
      %425 = vmatpush1.msra.mxu0 %v381
      %426 = vmatprep.subr.mxu0 0.0
      %427 = vmatpush1.msra.mxu0 %v379
      %428 = vmatprep.subr.mxu0 0.0
      %429 = vmatpush1.msra.mxu0 %v377
      %430 = vmatprep.subr.mxu0 0.0
      %431 = vmatpush1.msra.mxu0 %v375
      %432 = vmatprep.subr.mxu0 0.0
      %433 = vmatpush1.msra.mxu0 %v373
      %434 = vmatprep.subr.mxu0 0.0
      %435 = vmatpush1.msra.mxu0 %v371
      %436 = vmatprep.subr.mxu0 0.0
      %437 = vmatpush2.msra.mxu0 0.0
      %438 = vmatprep.subr.mxu0 0.0
      %439 = vmatpush2.msra.mxu0 0.0
      %440 = vmatprep.subr.mxu0 0.0
      %441 = vmatpush2.msra.mxu0 0.0
      %442 = vmatprep.subr.mxu0 0.0
      %443 = vmatpush2.msra.mxu0 0.0
      %444 = vmatprep.subr.mxu0 0.0
      %445 = vmatpush2.msra.mxu0 0.0
      %446 = vmatprep.subr.mxu0 0.0
      %447 = vmatpush2.msra.mxu0 0.0
      %448 = vmatprep.subr.mxu0 0.0
      %449 = vmatpush2.msra.mxu0 0.0
      %450 = vmatprep.subr.mxu0 0.0
      %451 = vmatpush2.msra.mxu0 0.0
      %452 = vmatprep.subr.mxu0 0.0
      %453 = vmatpush2.msra.mxu0 0.0
      %454 = vmatprep.subr.mxu0 0.0
      %455 = vmatpush2.msra.mxu0 0.0
      %456 = vmatprep.subr.mxu0 0.0
      %457 = vmatpush2.msra.mxu0 0.0
      %458 = vmatprep.subr.mxu0 0.0
      %459 = vmatpush2.msra.mxu0 0.0
      %460 = vmatprep.subr.mxu0 0.0
      %461 = vmatpush2.msra.mxu0 0.0
      %462 = vmatprep.subr.mxu0 0.0
      %463 = vmatpush2.msra.mxu0 0.0
      %464 = vmatprep.subr.mxu0 0.0
      %465 = vmatpush2.msra.mxu0 0.0
      %466 = vmatprep.subr.mxu0 0.0
      %467 = vmatpush2.msra.mxu0 0.0
      %468 = vmatprep.mubr.f32.mxu0 0.0
      %469 = vmatmul.mubr.f32.gmra.mxu0 %v399
      %v470 = vpop.f32.mrf.mxu0
      %v471 = vadd.f32 %v362, %v470
      %v472 = vpop.f32.mrf.mxu0
      %473 = vmatprep.mubr.f32.mxu0 0.0
      %474 = vmatmul.mubr.f32.gmra.mxu0 %v402
      %v475 = vpop.f32.mrf.mxu0
      %v476 = vadd.f32 %v367, %v475
      %v477 = vpop.f32.mrf.mxu0
      %478 = vdwg.mxu0
      %v479 = vmax.f32 %v471, 0.0
      %v480 = vmax.f32 %v476, 0.0
      %v481 = vld [vmem:[%s3] sm:$0xff]
      %v482 = vld [vmem:[%s3 + $0x8] sm:$0xff]
      %v483 = vld [vmem:[%s3 + $0x10] sm:$0xff]
      %v484 = vld [vmem:[%s3 + $0x18] sm:$0xff]
      %v485 = vld [vmem:[%s4] sm:$0xff]
      %v486 = vld [vmem:[%s4 + $0x8] sm:$0xff]
      %487 = vrot.lane.b32.xlu0 %v479, 16
      %v488 = vpop.permute.xlu0 %487
      %v489 = vsel %vm256, %v488, %v479
      %490 = vrot.lane.b32.xlu0 %v480, 16
      %v491 = vpop.permute.xlu0 %490
      %v492 = vsel %vm256, %v491, %v480
      %493 = vrot.lane.b32.xlu0 %v489, 16
      %v494 = vpop.permute.xlu0 %493
      %495 = vrot.lane.b32.xlu0 %v492, 16
      %v496 = vpop.permute.xlu0 %495
      %v497 = vsel %vm256, %v494, %v479
      %v498 = vsel %vm256, %v496, %v480
      %v499 = vmul.f32 %v497, %v269
      %v500 = vmul.f32 %v498, %v269
      %v501 = vmul.f32 %v497, %v278
      %v502 = vmul.f32 %v498, %v278
      %v503 = vmul.f32 %v497, %v287
      %v504 = vmul.f32 %v498, %v287
      %v505 = vmul.f32 %v497, %v296
      %v506 = vmul.f32 %v498, %v296
      %v507 = vmul.f32 %v497, %v305
      %v508 = vmul.f32 %v498, %v305
      %v509 = vmul.f32 %v497, %v314
      %v510 = vmul.f32 %v498, %v314
      %v511 = vmul.f32 %v497, %v323
      %v512 = vmul.f32 %v498, %v323
      %v513 = vmul.f32 %v497, %v332
      %v514 = vmul.f32 %v498, %v332
      %517 = vrot.lane.b32.xlu0 %v501, 127
      %v518 = vpop.permute.xlu0 %517
      %519 = vrot.lane.b32.xlu0 %v502, 127
      %v520 = vpop.permute.xlu0 %519
      %523 = vrot.lane.b32.xlu0 %v503, 126
      %v524 = vpop.permute.xlu0 %523
      %525 = vrot.lane.b32.xlu0 %v504, 126
      %v526 = vpop.permute.xlu0 %525
      %529 = vrot.lane.b32.xlu0 %v505, 124
      %v530 = vpop.permute.xlu0 %529
      %531 = vrot.lane.b32.xlu0 %v506, 124
      %v532 = vpop.permute.xlu0 %531
      %535 = vrot.lane.b32.xlu0 %v479, 11
      %v536 = vpop.permute.xlu0 %535
      %537 = vrot.lane.b32.xlu0 %v480, 11
      %v538 = vpop.permute.xlu0 %537
      %541 = vrot.lane.b32.xlu0 %v507, 10
      %v542 = vpop.permute.xlu0 %541
      %543 = vrot.lane.b32.xlu0 %v508, 10
      %v544 = vpop.permute.xlu0 %543
      %547 = vrot.lane.b32.xlu0 %v509, 8
      %v548 = vpop.permute.xlu0 %547
      %549 = vrot.lane.b32.xlu0 %v510, 8
      %v550 = vpop.permute.xlu0 %549
      %553 = vrot.lane.b32.xlu0 %v511, 7
      %v554 = vpop.permute.xlu0 %553
      %555 = vrot.lane.b32.xlu0 %v512, 7
      %v556 = vpop.permute.xlu0 %555
      %559 = vrot.lane.b32.xlu0 %v513, 6
      %v560 = vpop.permute.xlu0 %559
      %561 = vrot.lane.b32.xlu0 %v514, 6
      %v562 = vpop.permute.xlu0 %561
      %564 = vset.pattern.permute.xlu0 0
      %565 = vperm.xlu0 %564, %v485
      %v566 = vpop.permute.xlu0 %565
      %569 = vset.pattern.permute.xlu0 0
      %570 = vperm.xlu0 %569, %v486
      %v571 = vpop.permute.xlu0 %570
      %575 = vrot.lane.b32.xlu0 %v499, 117
      %v576 = vpop.permute.xlu0 %575
      %577 = vrot.lane.b32.xlu0 %v500, 117
      %v578 = vpop.permute.xlu0 %577
      %579 = vrot.lane.b32.xlu0 %v518, 117
      %v580 = vpop.permute.xlu0 %579
      %581 = vrot.lane.b32.xlu0 %v520, 117
      %v582 = vpop.permute.xlu0 %581
      %583 = vrot.lane.b32.xlu0 %v524, 117
      %v584 = vpop.permute.xlu0 %583
      %585 = vrot.lane.b32.xlu0 %v526, 117
      %v586 = vpop.permute.xlu0 %585
      %587 = vrot.lane.b32.xlu0 %v530, 117
      %v588 = vpop.permute.xlu0 %587
      %589 = vrot.lane.b32.xlu0 %v532, 117
      %v590 = vpop.permute.xlu0 %589
      %591 = vrot.lane.b32.xlu0 %v536, 117
      %v592 = vpop.permute.xlu0 %591
      %593 = vrot.lane.b32.xlu0 %v538, 117
      %v594 = vpop.permute.xlu0 %593
      %595 = vrot.lane.b32.xlu0 %v542, 117
      %v596 = vpop.permute.xlu0 %595
      %597 = vrot.lane.b32.xlu0 %v544, 117
      %v598 = vpop.permute.xlu0 %597
      %599 = vrot.lane.b32.xlu0 %v548, 117
      %v600 = vpop.permute.xlu0 %599
      %601 = vrot.lane.b32.xlu0 %v550, 117
      %v602 = vpop.permute.xlu0 %601
      %603 = vrot.lane.b32.xlu0 %v554, 117
      %v604 = vpop.permute.xlu0 %603
      %605 = vrot.lane.b32.xlu0 %v556, 117
      %v606 = vpop.permute.xlu0 %605
      %607 = vrot.lane.b32.xlu0 %v560, 117
      %v608 = vpop.permute.xlu0 %607
      %609 = vrot.lane.b32.xlu0 %v562, 117
      %v610 = vpop.permute.xlu0 %609
      %vm629 = vcmask 130048
      %v631 = vsel %vm629, %v482, 0
      %v634 = vsel %vm629, %v484, 0
      %636 = vmatprep.subr.mxu0 0.0
      %637 = vmatpush1.msra.mxu0 %v606
      %638 = vmatprep.subr.mxu0 0.0
      %639 = vmatpush1.msra.mxu0 %v604
      %640 = vmatprep.subr.mxu0 0.0
      %641 = vmatpush1.msra.mxu0 %v602
      %642 = vmatprep.subr.mxu0 0.0
      %643 = vmatpush1.msra.mxu0 %v600
      %644 = vmatprep.subr.mxu0 0.0
      %645 = vmatpush1.msra.mxu0 %v598
      %646 = vmatprep.subr.mxu0 0.0
      %647 = vmatpush1.msra.mxu0 %v596
      %648 = vmatprep.subr.mxu0 0.0
      %649 = vmatpush1.msra.mxu0 %v594
      %650 = vmatprep.subr.mxu0 0.0
      %651 = vmatpush1.msra.mxu0 %v592
      %652 = vmatprep.subr.mxu0 0.0
      %653 = vmatpush1.msra.mxu0 %v590
      %654 = vmatprep.subr.mxu0 0.0
      %655 = vmatpush1.msra.mxu0 %v588
      %656 = vmatprep.subr.mxu0 0.0
      %657 = vmatpush1.msra.mxu0 %v586
      %658 = vmatprep.subr.mxu0 0.0
      %659 = vmatpush1.msra.mxu0 %v584
      %660 = vmatprep.subr.mxu0 0.0
      %661 = vmatpush1.msra.mxu0 %v582
      %662 = vmatprep.subr.mxu0 0.0
      %663 = vmatpush1.msra.mxu0 %v580
      %664 = vmatprep.subr.mxu0 0.0
      %665 = vmatpush1.msra.mxu0 %v578
      %666 = vmatprep.subr.mxu0 0.0
      %667 = vmatpush1.msra.mxu0 %v576
      %668 = vmatprep.subr.mxu0 0.0
      %669 = vmatpush2.msra.mxu0 0.0
      %670 = vmatprep.subr.mxu0 0.0
      %671 = vmatpush2.msra.mxu0 0.0
      %672 = vmatprep.subr.mxu0 0.0
      %673 = vmatpush2.msra.mxu0 0.0
      %674 = vmatprep.subr.mxu0 0.0
      %675 = vmatpush2.msra.mxu0 0.0
      %676 = vmatprep.subr.mxu0 0.0
      %677 = vmatpush2.msra.mxu0 0.0
      %678 = vmatprep.subr.mxu0 0.0
      %679 = vmatpush2.msra.mxu0 0.0
      %680 = vmatprep.subr.mxu0 0.0
      %681 = vmatpush2.msra.mxu0 0.0
      %682 = vmatprep.subr.mxu0 0.0
      %683 = vmatpush2.msra.mxu0 0.0
      %684 = vmatprep.subr.mxu0 0.0
      %685 = vmatpush2.msra.mxu0 0.0
      %686 = vmatprep.subr.mxu0 0.0
      %687 = vmatpush2.msra.mxu0 0.0
      %688 = vmatprep.subr.mxu0 0.0
      %689 = vmatpush2.msra.mxu0 0.0
      %690 = vmatprep.subr.mxu0 0.0
      %691 = vmatpush2.msra.mxu0 0.0
      %692 = vmatprep.subr.mxu0 0.0
      %693 = vmatpush2.msra.mxu0 0.0
      %694 = vmatprep.subr.mxu0 0.0
      %695 = vmatpush2.msra.mxu0 0.0
      %696 = vmatprep.subr.mxu0 0.0
      %697 = vmatpush2.msra.mxu0 %v610
      %698 = vmatprep.subr.mxu0 0.0
      %699 = vmatpush2.msra.mxu0 %v608
      %700 = vmatprep.mubr.f32.mxu0 %v631
      %701 = vmatmul.mubr.f32.gmra.mxu0 %v481
      %v702 = vpop.f32.mrf.mxu0
      %v703 = vadd.f32 %v566, %v702
      %v704 = vpop.f32.mrf.mxu0
      %705 = vmatprep.mubr.f32.mxu0 %v634
      %706 = vmatmul.mubr.f32.gmra.mxu0 %v483
      %v707 = vpop.f32.mrf.mxu0
      %v708 = vadd.f32 %v571, %v707
      %v709 = vpop.f32.mrf.mxu0
      %710 = vdwg.mxu0
      %v711 = vmax.f32 %v703, 0.0
      %v712 = vmax.f32 %v708, 0.0
      %713 = vst.msk [vmem:[%s248] sm:$0xff] %vm629, %v711
      %714 = vst.msk [vmem:[%s248 + $0x8] sm:$0xff] %vm629, %v712
      %p715 = scmp.lt.s32.totalorder %s17, 1
      %s716 = scalar_select %p715, %s17, 1
      %s717 = smul.addr %s716, 2
      %s718 = smul.addr %s717, 8
      %s719 = scalar_lea.vmem %s6, %s718
      // Predicated region
      $region45: #{encoder_forward.5} parent=43 // pred_check
        %p720 = pneg %p166
      $region46: #{encoder_forward.5} parent=43 // pred_check_branch
        %722 = sbr.rel (%p720) target = $region48
      $region47: #{encoder_forward.5} parent=43 // pred_region
        _
      $region48: #{encoder_forward.5} parent=43 // pred_fallthru
        _
    $region44: #{encoder_forward.5} parent=5 // pred_fallthru
      _
    %p723 = scmp.le.s32.totalorder 2, %s12
    // Predicated region
    $region49: #{encoder_forward.5} parent=5 // pred_check
      %p724 = pneg %p723
    $region50: #{encoder_forward.5} parent=5 // pred_check_branch
      %726 = sbr.rel (%p724) target = $region52
    $region51: #{encoder_forward.5} parent=5 // pred_region
      %s727 = ssub.s32 %s12, 2
      // Predicated region
      $region53: #{encoder_forward.5} parent=51 // pred_check
        %p728 = pneg %p172
      $region54: #{encoder_forward.5} parent=51 // pred_check_branch
        %730 = sbr.rel (%p728) target = $region56
      $region55: #{encoder_forward.5} parent=51 // pred_region
        %p731 = scmp.lt.s32.totalorder %s18, 1
        %s732 = scalar_select %p731, %s18, 1
        %s733 = smul.addr %s732, 2
        %s734 = smul.addr %s733, 8
        %s735 = scalar_lea.vmem %s6, %s734
      $region56: #{encoder_forward.5} parent=51 // pred_fallthru
        _
    $region52: #{encoder_forward.5} parent=5 // pred_fallthru
      _
  $region6: #{encoder_forward.5} parent=0 // loop_footer
    %s16 = sadd.s32 1, %s12
  $region7: #{encoder_forward.5} parent=0 // loop_footer_branch
    %11 = sbr.rel target = $region3
  $region8: #{encoder_forward.5} parent=0 // loop_exit
    _

// kernel: encoder_forward.4
$region0: #{encoder_forward.4}
  #allocation0 [shape = 'u32[]', space=smem, size = 0x4, offset = 0x4, fixed_abs, tag = 'smem constant byte address 0x4 - core index']
  #allocation1 [shape = 'u32[144,128]{1,0:T(1,128)}', space=vmem, size = 0x12000, scoped, tag = 'internal scratch']
  %s0 = inlined_call_operand.vmem [shape: f32[2,4,64], index: 0, kind: input, shape index: {}]
  %s1 = inlined_call_operand.vmem [shape: f32[8,36], index: 1, kind: input, shape index: {}]
  %s2 = inlined_call_operand.vmem [shape: f32[8,1], index: 2, kind: input, shape index: {}]
  %s3 = inlined_call_operand.vmem [shape: f32[8,72], index: 3, kind: input, shape index: {}]
  %s4 = inlined_call_operand.vmem [shape: f32[8,1], index: 4, kind: input, shape index: {}]
  %s5 = inlined_call_operand.vmem [shape: f32[9,64], index: 5, kind: input, shape index: {}]
  %s6 = inlined_call_operand.vmem [shape: f32[64,16], index: 6, kind: input, shape index: {}]
  %s7 = inlined_call_operand.vmem [shape: f32[2,8,64], index: 7, kind: output, shape index: {0}]
  %s8 = inlined_call_operand.vmem [shape: f32[2,8,16], index: 8, kind: output, shape index: {1}]
  %9 = xla_tuple %s7, %s8
  %s10 = sld [smem:[#allocation0]]
  $region69: #{encoder_forward.4} parent=0
    _
  %s12 = ssub.s32 1, %s10
  %s13 = scalar_select 0, %s12, %s10
  loop: start=0, step=1, limit=4
  $region2: #{encoder_forward.4} parent=0 // loop_pre_header
    _
  $region3: #{encoder_forward.4} parent=0 // loop_header
    %s15 = sphi 0, %s19
    %p16 = scmp.ge.s32.totalorder %s15, 4
    %s25 = sphi 0, %s27
    %s28 = sphi 0, %s25
    %s29 = sphi 0, %s28
    %s45 = sphi 0, %s29
    %s49 = sphi 0, %s49
    %s51 = sphi 0, %s49
    %s52 = sphi 0, %s51
    %s66 = sphi 0, %s52
    %s70 = sphi 0, %s70
    %s72 = sphi 0, %s70
    %s73 = sphi 0, %s72
    %s87 = sphi 0, %s73
    %s91 = sphi 0, %s91
    %s93 = sphi 0, %s91
    %s94 = sphi 0, %s93
    %s108 = sphi 0, %s94
    %s112 = sphi 0, %s112
    %s114 = sphi 0, %s112
    %s115 = sphi 0, %s114
    %s129 = sphi 0, %s115
    %s133 = sphi 0, %s133
    %s135 = sphi 0, %s133
    %s136 = sphi 0, %s135
    %s150 = sphi 0, %s136
    %s154 = sphi 0, %s154
    %s156 = sphi 0, %s154
    %s157 = sphi 0, %s156
    %s171 = sphi 0, %s157
    %s177 = sphi 0, %s179
    %s180 = sphi 0, %s177
    %s181 = sphi 0, %s180
    %s197 = sphi 0, %s181
    %s203 = sphi 0, %s205
    %s206 = sphi 0, %s203
    %s207 = sphi 0, %s206
    %s223 = sphi 0, %s207
  $region4: #{encoder_forward.4} parent=0 // loop_header_branch
    %18 = sbr.rel (%p16) target = $region8
  $region5: #{encoder_forward.4} parent=0 // loop_body
    %s20 = ssub.s32 %s15, 1
    %s21 = ssub.s32 %s15, 2
    %s22 = sadd.s32 %s15, 1
    %s23 = ssub.s32 %s15, %s22
    %p24 = scmp.eq.s32.totalorder %s23, 0
    %s26 = sadd.s32 %s25, 1
    %s27 = scalar_select %p24, %s25, %s26
    %p30 = pneg %p24
    %p31 = scmp.eq.s32.totalorder %s15, 1
    %p32 = por %p30, %p31
    %p33 = scmp.ne.s32.totalorder %s25, %s28
    %p34 = scmp.eq.s32.totalorder %s15, 0
    %p35 = por %p33, %p34
    %p36 = scmp.ne.s32.totalorder %s25, %s28
    %p37 = scmp.eq.s32.totalorder %s20, 1
    %p38 = por %p36, %p37
    %p39 = scmp.ne.s32.totalorder %s28, %s29
    %p40 = scmp.eq.s32.totalorder %s20, 0
    %p41 = por %p39, %p40
    %p42 = scmp.ne.s32.totalorder %s28, %s29
    %p43 = scmp.eq.s32.totalorder %s21, 1
    %p44 = por %p42, %p43
    %p46 = scmp.ne.s32.totalorder %s29, %s45
    %p47 = scmp.eq.s32.totalorder %s21, 0
    %p48 = por %p46, %p47
    %s50 = sadd.s32 %s49, 1
    %p53 = scmp.eq.s32.totalorder %s15, 1
    %p54 = scmp.ne.s32.totalorder %s49, %s51
    %p55 = scmp.eq.s32.totalorder %s15, 0
    %p56 = por %p54, %p55
    %p57 = scmp.ne.s32.totalorder %s49, %s51
    %p58 = scmp.eq.s32.totalorder %s20, 1
    %p59 = por %p57, %p58
    %p60 = scmp.ne.s32.totalorder %s51, %s52
    %p61 = scmp.eq.s32.totalorder %s20, 0
    %p62 = por %p60, %p61
    %p63 = scmp.ne.s32.totalorder %s51, %s52
    %p64 = scmp.eq.s32.totalorder %s21, 1
    %p65 = por %p63, %p64
    %p67 = scmp.ne.s32.totalorder %s52, %s66
    %p68 = scmp.eq.s32.totalorder %s21, 0
    %p69 = por %p67, %p68
    %s71 = sadd.s32 %s70, 1
    %p74 = scmp.eq.s32.totalorder %s15, 1
    %p75 = scmp.ne.s32.totalorder %s70, %s72
    %p76 = scmp.eq.s32.totalorder %s15, 0
    %p77 = por %p75, %p76
    %p78 = scmp.ne.s32.totalorder %s70, %s72
    %p79 = scmp.eq.s32.totalorder %s20, 1
    %p80 = por %p78, %p79
    %p81 = scmp.ne.s32.totalorder %s72, %s73
    %p82 = scmp.eq.s32.totalorder %s20, 0
    %p83 = por %p81, %p82
    %p84 = scmp.ne.s32.totalorder %s72, %s73
    %p85 = scmp.eq.s32.totalorder %s21, 1
    %p86 = por %p84, %p85
    %p88 = scmp.ne.s32.totalorder %s73, %s87
    %p89 = scmp.eq.s32.totalorder %s21, 0
    %p90 = por %p88, %p89
    %s92 = sadd.s32 %s91, 1
    %p95 = scmp.eq.s32.totalorder %s15, 1
    %p96 = scmp.ne.s32.totalorder %s91, %s93
    %p97 = scmp.eq.s32.totalorder %s15, 0
    %p98 = por %p96, %p97
    %p99 = scmp.ne.s32.totalorder %s91, %s93
    %p100 = scmp.eq.s32.totalorder %s20, 1
    %p101 = por %p99, %p100
    %p102 = scmp.ne.s32.totalorder %s93, %s94
    %p103 = scmp.eq.s32.totalorder %s20, 0
    %p104 = por %p102, %p103
    %p105 = scmp.ne.s32.totalorder %s93, %s94
    %p106 = scmp.eq.s32.totalorder %s21, 1
    %p107 = por %p105, %p106
    %p109 = scmp.ne.s32.totalorder %s94, %s108
    %p110 = scmp.eq.s32.totalorder %s21, 0
    %p111 = por %p109, %p110
    %s113 = sadd.s32 %s112, 1
    %p116 = scmp.eq.s32.totalorder %s15, 1
    %p117 = scmp.ne.s32.totalorder %s112, %s114
    %p118 = scmp.eq.s32.totalorder %s15, 0
    %p119 = por %p117, %p118
    %p120 = scmp.ne.s32.totalorder %s112, %s114
    %p121 = scmp.eq.s32.totalorder %s20, 1
    %p122 = por %p120, %p121
    %p123 = scmp.ne.s32.totalorder %s114, %s115
    %p124 = scmp.eq.s32.totalorder %s20, 0
    %p125 = por %p123, %p124
    %p126 = scmp.ne.s32.totalorder %s114, %s115
    %p127 = scmp.eq.s32.totalorder %s21, 1
    %p128 = por %p126, %p127
    %p130 = scmp.ne.s32.totalorder %s115, %s129
    %p131 = scmp.eq.s32.totalorder %s21, 0
    %p132 = por %p130, %p131
    %s134 = sadd.s32 %s133, 1
    %p137 = scmp.eq.s32.totalorder %s15, 1
    %p138 = scmp.ne.s32.totalorder %s133, %s135
    %p139 = scmp.eq.s32.totalorder %s15, 0
    %p140 = por %p138, %p139
    %p141 = scmp.ne.s32.totalorder %s133, %s135
    %p142 = scmp.eq.s32.totalorder %s20, 1
    %p143 = por %p141, %p142
    %p144 = scmp.ne.s32.totalorder %s135, %s136
    %p145 = scmp.eq.s32.totalorder %s20, 0
    %p146 = por %p144, %p145
    %p147 = scmp.ne.s32.totalorder %s135, %s136
    %p148 = scmp.eq.s32.totalorder %s21, 1
    %p149 = por %p147, %p148
    %p151 = scmp.ne.s32.totalorder %s136, %s150
    %p152 = scmp.eq.s32.totalorder %s21, 0
    %p153 = por %p151, %p152
    %s155 = sadd.s32 %s154, 1
    %p158 = scmp.eq.s32.totalorder %s15, 1
    %p159 = scmp.ne.s32.totalorder %s154, %s156
    %p160 = scmp.eq.s32.totalorder %s15, 0
    %p161 = por %p159, %p160
    %p162 = scmp.ne.s32.totalorder %s154, %s156
    %p163 = scmp.eq.s32.totalorder %s20, 1
    %p164 = por %p162, %p163
    %p165 = scmp.ne.s32.totalorder %s156, %s157
    %p166 = scmp.eq.s32.totalorder %s20, 0
    %p167 = por %p165, %p166
    %p168 = scmp.ne.s32.totalorder %s156, %s157
    %p169 = scmp.eq.s32.totalorder %s21, 1
    %p170 = por %p168, %p169
    %p172 = scmp.ne.s32.totalorder %s157, %s171
    %p173 = scmp.eq.s32.totalorder %s21, 0
    %p174 = por %p172, %p173
    %s175 = ssub.s32 %s15, %s22
    %p176 = scmp.eq.s32.totalorder %s175, 0
    %s178 = sadd.s32 %s177, 1
    %s179 = scalar_select %p176, %s177, %s178
    %p182 = pneg %p176
    %p183 = scmp.eq.s32.totalorder %s15, 1
    %p184 = por %p182, %p183
    %p185 = scmp.ne.s32.totalorder %s177, %s180
    %p186 = scmp.eq.s32.totalorder %s15, 0
    %p187 = por %p185, %p186
    %p188 = scmp.ne.s32.totalorder %s177, %s180
    %p189 = scmp.eq.s32.totalorder %s20, 1
    %p190 = por %p188, %p189
    %p191 = scmp.ne.s32.totalorder %s180, %s181
    %p192 = scmp.eq.s32.totalorder %s20, 0
    %p193 = por %p191, %p192
    %p194 = scmp.ne.s32.totalorder %s180, %s181
    %p195 = scmp.eq.s32.totalorder %s21, 1
    %p196 = por %p194, %p195
    %p198 = scmp.ne.s32.totalorder %s181, %s197
    %p199 = scmp.eq.s32.totalorder %s21, 0
    %p200 = por %p198, %p199
    %s201 = ssub.s32 %s15, %s22
    %p202 = scmp.eq.s32.totalorder %s201, 0
    %s204 = sadd.s32 %s203, 1
    %s205 = scalar_select %p202, %s203, %s204
    %p208 = pneg %p202
    %p209 = scmp.eq.s32.totalorder %s15, 1
    %p210 = por %p208, %p209
    %p211 = scmp.ne.s32.totalorder %s203, %s206
    %p212 = scmp.eq.s32.totalorder %s15, 0
    %p213 = por %p211, %p212
    %p214 = scmp.ne.s32.totalorder %s203, %s206
    %p215 = scmp.eq.s32.totalorder %s20, 1
    %p216 = por %p214, %p215
    %p217 = scmp.ne.s32.totalorder %s206, %s207
    %p218 = scmp.eq.s32.totalorder %s20, 0
    %p219 = por %p217, %p218
    %p220 = scmp.ne.s32.totalorder %s206, %s207
    %p221 = scmp.eq.s32.totalorder %s21, 1
    %p222 = por %p220, %p221
    %p224 = scmp.ne.s32.totalorder %s207, %s223
    %p225 = scmp.eq.s32.totalorder %s21, 0
    %p226 = por %p224, %p225
    %p227 = scmp.le.s32.totalorder 1, %s15
    %p228 = scmp.lt.s32.totalorder %s15, 3
    %p229 = pnand %p227, %p228
    %p230 = pneg %p229
    // Predicated region
    $region9: #{encoder_forward.4} parent=5 // pred_check
      _
    $region10: #{encoder_forward.4} parent=5 // pred_check_branch
      %232 = sbr.rel (%p229) target = $region12
    $region11: #{encoder_forward.4} parent=5 // pred_region
      %s233 = ssub.s32 %s15, 1
      // Predicated region
      $region13: #{encoder_forward.4} parent=11 // pred_check
        %p234 = pneg %p62
      $region14: #{encoder_forward.4} parent=11 // pred_check_branch
        %236 = sbr.rel (%p234) target = $region16
      $region15: #{encoder_forward.4} parent=11 // pred_region
        _
      $region16: #{encoder_forward.4} parent=11 // pred_fallthru
        _
      // Predicated region
      $region17: #{encoder_forward.4} parent=11 // pred_check
        %p237 = pneg %p83
      $region18: #{encoder_forward.4} parent=11 // pred_check_branch
        %239 = sbr.rel (%p237) target = $region20
      $region19: #{encoder_forward.4} parent=11 // pred_region
        _
      $region20: #{encoder_forward.4} parent=11 // pred_fallthru
        _
      // Predicated region
      $region21: #{encoder_forward.4} parent=11 // pred_check
        %p240 = pneg %p104
      $region22: #{encoder_forward.4} parent=11 // pred_check_branch
        %242 = sbr.rel (%p240) target = $region24
      $region23: #{encoder_forward.4} parent=11 // pred_region
        _
      $region24: #{encoder_forward.4} parent=11 // pred_fallthru
        _
      // Predicated region
      $region25: #{encoder_forward.4} parent=11 // pred_check
        %p243 = pneg %p125
      $region26: #{encoder_forward.4} parent=11 // pred_check_branch
        %245 = sbr.rel (%p243) target = $region28
      $region27: #{encoder_forward.4} parent=11 // pred_region
        _
      $region28: #{encoder_forward.4} parent=11 // pred_fallthru
        _
      // Predicated region
      $region29: #{encoder_forward.4} parent=11 // pred_check
        %p246 = pneg %p146
      $region30: #{encoder_forward.4} parent=11 // pred_check_branch
        %248 = sbr.rel (%p246) target = $region32
      $region31: #{encoder_forward.4} parent=11 // pred_region
        _
      $region32: #{encoder_forward.4} parent=11 // pred_fallthru
        _
      // Predicated region
      $region33: #{encoder_forward.4} parent=11 // pred_check
        %p249 = pneg %p167
      $region34: #{encoder_forward.4} parent=11 // pred_check_branch
        %251 = sbr.rel (%p249) target = $region36
      $region35: #{encoder_forward.4} parent=11 // pred_region
        _
      $region36: #{encoder_forward.4} parent=11 // pred_fallthru
        _
    $region12: #{encoder_forward.4} parent=5 // pred_fallthru
      _
    %p252 = scmp.lt.s32.totalorder %s15, 2
    // Predicated region
    $region37: #{encoder_forward.4} parent=5 // pred_check
      %p253 = pneg %p252
    $region38: #{encoder_forward.4} parent=5 // pred_check_branch
      %255 = sbr.rel (%p253) target = $region40
    $region39: #{encoder_forward.4} parent=5 // pred_region
      // Predicated region
      $region41: #{encoder_forward.4} parent=39 // pred_check
        %p256 = pneg %p35
      $region42: #{encoder_forward.4} parent=39 // pred_check_branch
        %258 = sbr.rel (%p256) target = $region44
      $region43: #{encoder_forward.4} parent=39 // pred_region
        %p259 = scmp.lt.s32.totalorder %s15, 1
        %s260 = scalar_select %p259, %s15, 1
        %s261 = smul.addr %s260, 4
        %s262 = scalar_lea.vmem %s0, %s261
      $region44: #{encoder_forward.4} parent=39 // pred_fallthru
        _
    $region40: #{encoder_forward.4} parent=5 // pred_fallthru
      _
    %p263 = scmp.le.s32.totalorder 1, %s15
    %p264 = scmp.lt.s32.totalorder %s15, 3
    %p265 = pnand %p263, %p264
    %p266 = pneg %p265
    // Predicated region
    $region45: #{encoder_forward.4} parent=5 // pred_check
      _
    $region46: #{encoder_forward.4} parent=5 // pred_check_branch
      %268 = sbr.rel (%p265) target = $region48
    $region47: #{encoder_forward.4} parent=5 // pred_region
      %s269 = ssub.s32 %s15, 1
      %p270 = scmp.lt.s32.totalorder %s20, 1
      %s271 = scalar_select %p270, %s20, 1
      %s272 = smul.addr %s271, 4
      %s273 = scalar_lea.vmem %s0, %s272
      %p274 = pneg %p41
      %p275 = pneg %p38
      %p276 = pneg %p62
      %p277 = pneg %p59
      %p278 = pneg %p83
      %p279 = pneg %p80
      %p280 = pneg %p104
      %p281 = pneg %p101
      %p282 = pneg %p125
      %p283 = pneg %p122
      %p284 = pneg %p146
      %p285 = pneg %p143
      %p286 = pneg %p167
      %p287 = pneg %p164
      %p288 = pneg %p193
      %p289 = pneg %p190
      %p290 = scmp.lt.s32.totalorder %s20, 1
      %s291 = scalar_select %p290, %s20, 1
      %s292 = smul.addr %s291, 8
      %s293 = scalar_lea.vmem %s7, %s292
      %p294 = pneg %p219
      %p295 = pneg %p216
      %p296 = scmp.lt.s32.totalorder %s20, 1
      %s297 = scalar_select %p296, %s20, 1
      %s298 = smul.addr %s297, 8
      %s299 = scalar_lea.vmem %s8, %s298
      %p300 = scmp.lt.s32.totalorder %s20, 1
      %s301 = scalar_select %p300, %s20, 1
      %s302 = smul.addr %s301, 4
      %s303 = scalar_lea.vmem %s0, %s302
      %p304 = scmp.lt.s32.totalorder %s20, 1
      %s305 = scalar_select %p304, %s20, 1
      %s306 = smul.addr %s305, 8
      %s307 = scalar_lea.vmem %s7, %s306
      %p308 = scmp.lt.s32.totalorder %s20, 1
      %s309 = scalar_select %p308, %s20, 1
      %s310 = smul.addr %s309, 8
      %s311 = scalar_lea.vmem %s8, %s310
      %v312 = vld [vmem:[%s303] sm:$0xf]
      %v313 = vld [vmem:[%s5] sm:$0xff]
      %v314 = vld [vmem:[%s5 + $0x8] sm:$0x1]
      %v315 = vld [vmem:[%s1] sm:$0xff]
      %v316 = vld [vmem:[%s2] sm:$0xff]
      %vm317 = vcmask 1048064
      %318 = vrot.lane.b32.xlu0 %v312, 64
      %v319 = vpop.permute.xlu0 %318
      %v320 = vsel %vm317, %v319, %v312
      %321 = vrot.lane.b32.xlu0 %v320, 64
      %v322 = vpop.permute.xlu0 %321
      %v323 = vsel %vm317, %v322, %v312
      %v324 = vlaneseq
      %v325 = vshrl.u32 %v324, 7
      %v326 = vsub.s32 0, %v325
      %v327 = vrot.slane %v313, %v326
      %329 = vrot.lane.b32.xlu0 %v327, 55
      %v330 = vpop.permute.xlu0 %329
      %v332 = vmul.f32 %v323, %v330
      %v333 = vlaneseq
      %v334 = vshrl.u32 %v333, 7
      %v335 = vsub.s32 1, %v334
      %v336 = vrot.slane %v313, %v335
      %338 = vrot.lane.b32.xlu0 %v336, 56
      %v339 = vpop.permute.xlu0 %338
      %v341 = vmul.f32 %v323, %v339
      %v342 = vlaneseq
      %v343 = vshrl.u32 %v342, 7
      %v344 = vsub.s32 2, %v343
      %v345 = vrot.slane %v313, %v344
      %347 = vrot.lane.b32.xlu0 %v345, 57
      %v348 = vpop.permute.xlu0 %347
      %v350 = vmul.f32 %v323, %v348
      %v351 = vlaneseq
      %v352 = vshrl.u32 %v351, 7
      %v353 = vsub.s32 3, %v352
      %v354 = vrot.slane %v313, %v353
      %356 = vrot.lane.b32.xlu0 %v354, 63
      %v357 = vpop.permute.xlu0 %356
      %v359 = vmul.f32 %v323, %v357
      %v360 = vlaneseq
      %v361 = vshrl.u32 %v360, 7
      %v362 = vsub.s32 5, %v361
      %v363 = vrot.slane %v313, %v362
      %365 = vrot.lane.b32.xlu0 %v363, 1
      %v366 = vpop.permute.xlu0 %365
      %v368 = vmul.f32 %v323, %v366
      %v369 = vlaneseq
      %v370 = vshrl.u32 %v369, 7
      %v371 = vsub.s32 6, %v370
      %v372 = vrot.slane %v313, %v371
      %374 = vrot.lane.b32.xlu0 %v372, 7
      %v375 = vpop.permute.xlu0 %374
      %v377 = vmul.f32 %v323, %v375
      %v378 = vlaneseq
      %v379 = vshrl.u32 %v378, 7
      %v380 = vsub.s32 7, %v379
      %v381 = vrot.slane %v313, %v380
      %383 = vrot.lane.b32.xlu0 %v381, 8
      %v384 = vpop.permute.xlu0 %383
      %v386 = vmul.f32 %v323, %v384
      %v387 = vlaneseq
      %v388 = vshrl.u32 %v387, 7
      %v389 = vsub.s32 0, %v388
      %v390 = vrot.slane %v314, %v389
      %392 = vrot.lane.b32.xlu0 %v390, 9
      %v393 = vpop.permute.xlu0 %392
      %v395 = vmul.f32 %v323, %v393
      %v397 = vrot.slane %v341, 4
      %398 = vrot.lane.b32.xlu0 %v397, 127
      %v399 = vpop.permute.xlu0 %398
      %402 = vrot.lane.b32.xlu0 %v350, 126
      %v403 = vpop.permute.xlu0 %402
      %v406 = vrot.slane %v359, 4
      %407 = vrot.lane.b32.xlu0 %v406, 120
      %v408 = vpop.permute.xlu0 %407
      %411 = vrot.lane.b32.xlu0 %v312, 55
      %v412 = vpop.permute.xlu0 %411
      %v415 = vrot.slane %v368, 4
      %416 = vrot.lane.b32.xlu0 %v415, 54
      %v417 = vpop.permute.xlu0 %416
      %420 = vrot.lane.b32.xlu0 %v377, 48
      %v421 = vpop.permute.xlu0 %420
      %v424 = vrot.slane %v386, 4
      %425 = vrot.lane.b32.xlu0 %v424, 47
      %v426 = vpop.permute.xlu0 %425
      %429 = vrot.lane.b32.xlu0 %v395, 46
      %v430 = vpop.permute.xlu0 %429
      %vm431 = vcmask 1043456
      %v432 = vsel %vm431, %v332, %v399
      %v433 = vsel %vm431, %v403, %v408
      %v434 = vsel %vm431, %v412, %v417
      %v435 = vsel %vm431, %v421, %v426
      %437 = vset.pattern.permute.xlu0 0
      %438 = vperm.xlu0 %437, %v316
      %v439 = vpop.permute.xlu0 %438
      %445 = vrot.lane.b32.xlu0 %v432, 73
      %v446 = vpop.permute.xlu0 %445
      %447 = vrot.lane.b32.xlu0 %v433, 73
      %v448 = vpop.permute.xlu0 %447
      %449 = vrot.lane.b32.xlu0 %v434, 73
      %v450 = vpop.permute.xlu0 %449
      %451 = vrot.lane.b32.xlu0 %v435, 73
      %v452 = vpop.permute.xlu0 %451
      %453 = vrot.lane.b32.xlu0 %v430, 73
      %v454 = vpop.permute.xlu0 %453
      %vm459 = vcmask 293888
      %v461 = vsel %vm459, %v315, 0
      %v463 = vsel %vm431, %v454, 0
      %465 = vmatprep.subr.mxu0 0.0
      %466 = vmatpush1.msra.mxu0 0.0
      %467 = vmatprep.subr.mxu0 0.0
      %468 = vmatpush1.msra.mxu0 0.0
      %469 = vmatprep.subr.mxu0 0.0
      %470 = vmatpush1.msra.mxu0 0.0
      %471 = vmatprep.subr.mxu0 0.0
      %472 = vmatpush1.msra.mxu0 0.0
      %473 = vmatprep.subr.mxu0 0.0
      %474 = vmatpush1.msra.mxu0 0.0
      %475 = vmatprep.subr.mxu0 0.0
      %476 = vmatpush1.msra.mxu0 0.0
      %477 = vmatprep.subr.mxu0 0.0
      %478 = vmatpush1.msra.mxu0 0.0
      %479 = vmatprep.subr.mxu0 0.0
      %480 = vmatpush1.msra.mxu0 0.0
      %481 = vmatprep.subr.mxu0 0.0
      %482 = vmatpush1.msra.mxu0 0.0
      %483 = vmatprep.subr.mxu0 0.0
      %484 = vmatpush1.msra.mxu0 0.0
      %485 = vmatprep.subr.mxu0 0.0
      %486 = vmatpush1.msra.mxu0 0.0
      %487 = vmatprep.subr.mxu0 0.0
      %488 = vmatpush1.msra.mxu0 %v463
      %489 = vmatprep.subr.mxu0 0.0
      %490 = vmatpush1.msra.mxu0 %v452
      %491 = vmatprep.subr.mxu0 0.0
      %492 = vmatpush1.msra.mxu0 %v450
      %493 = vmatprep.subr.mxu0 0.0
      %494 = vmatpush1.msra.mxu0 %v448
      %495 = vmatprep.subr.mxu0 0.0
      %496 = vmatpush1.msra.mxu0 %v446
      %497 = vmatprep.subr.mxu0 0.0
      %498 = vmatpush2.msra.mxu0 0.0
      %499 = vmatprep.subr.mxu0 0.0
      %500 = vmatpush2.msra.mxu0 0.0
      %501 = vmatprep.subr.mxu0 0.0
      %502 = vmatpush2.msra.mxu0 0.0
      %503 = vmatprep.subr.mxu0 0.0
      %504 = vmatpush2.msra.mxu0 0.0
      %505 = vmatprep.subr.mxu0 0.0
      %506 = vmatpush2.msra.mxu0 0.0
      %507 = vmatprep.subr.mxu0 0.0
      %508 = vmatpush2.msra.mxu0 0.0
      %509 = vmatprep.subr.mxu0 0.0
      %510 = vmatpush2.msra.mxu0 0.0
      %511 = vmatprep.subr.mxu0 0.0
      %512 = vmatpush2.msra.mxu0 0.0
      %513 = vmatprep.subr.mxu0 0.0
      %514 = vmatpush2.msra.mxu0 0.0
      %515 = vmatprep.subr.mxu0 0.0
      %516 = vmatpush2.msra.mxu0 0.0
      %517 = vmatprep.subr.mxu0 0.0
      %518 = vmatpush2.msra.mxu0 0.0
      %519 = vmatprep.subr.mxu0 0.0
      %520 = vmatpush2.msra.mxu0 0.0
      %521 = vmatprep.subr.mxu0 0.0
      %522 = vmatpush2.msra.mxu0 0.0
      %523 = vmatprep.subr.mxu0 0.0
      %524 = vmatpush2.msra.mxu0 0.0
      %525 = vmatprep.subr.mxu0 0.0
      %526 = vmatpush2.msra.mxu0 0.0
      %527 = vmatprep.subr.mxu0 0.0
      %528 = vmatpush2.msra.mxu0 0.0
      %529 = vmatprep.mubr.f32.mxu0 0.0
      %530 = vmatmul.mubr.f32.gmra.mxu0 %v461
      %v531 = vpop.f32.mrf.mxu0
      %v532 = vadd.f32 %v439, %v531
      %v533 = vpop.f32.mrf.mxu0
      %534 = vdwg.mxu0
      %v535 = vmax.f32 %v532, 0.0
      %v536 = vld [vmem:[%s3] sm:$0xff]
      %v537 = vld [vmem:[%s4] sm:$0xff]
      %538 = vrot.lane.b32.xlu0 %v535, 64
      %v539 = vpop.permute.xlu0 %538
      %v540 = vsel %vm317, %v539, %v535
      %541 = vrot.lane.b32.xlu0 %v540, 64
      %v542 = vpop.permute.xlu0 %541
      %v543 = vsel %vm317, %v542, %v535
      %v544 = vmul.f32 %v543, %v330
      %v545 = vmul.f32 %v543, %v339
      %v546 = vmul.f32 %v543, %v348
      %v547 = vmul.f32 %v543, %v357
      %v548 = vmul.f32 %v543, %v366
      %v549 = vmul.f32 %v543, %v375
      %v550 = vmul.f32 %v543, %v384
      %v551 = vmul.f32 %v543, %v393
      %553 = vrot.lane.b32.xlu0 %v545, 127
      %v554 = vpop.permute.xlu0 %553
      %556 = vrot.lane.b32.xlu0 %v546, 126
      %v557 = vpop.permute.xlu0 %556
      %559 = vrot.lane.b32.xlu0 %v547, 120
      %v560 = vpop.permute.xlu0 %559
      %562 = vrot.lane.b32.xlu0 %v535, 55
      %v563 = vpop.permute.xlu0 %562
      %565 = vrot.lane.b32.xlu0 %v548, 54
      %v566 = vpop.permute.xlu0 %565
      %568 = vrot.lane.b32.xlu0 %v549, 48
      %v569 = vpop.permute.xlu0 %568
      %571 = vrot.lane.b32.xlu0 %v550, 47
      %v572 = vpop.permute.xlu0 %571
      %574 = vrot.lane.b32.xlu0 %v551, 46
      %v575 = vpop.permute.xlu0 %574
      %577 = vset.pattern.permute.xlu0 0
      %578 = vperm.xlu0 %577, %v537
      %v579 = vpop.permute.xlu0 %578
      %582 = vrot.lane.b32.xlu0 %v544, 73
      %v583 = vpop.permute.xlu0 %582
      %584 = vrot.lane.b32.xlu0 %v554, 73
      %v585 = vpop.permute.xlu0 %584
      %586 = vrot.lane.b32.xlu0 %v557, 73
      %v587 = vpop.permute.xlu0 %586
      %588 = vrot.lane.b32.xlu0 %v560, 73
      %v589 = vpop.permute.xlu0 %588
      %590 = vrot.lane.b32.xlu0 %v563, 73
      %v591 = vpop.permute.xlu0 %590
      %592 = vrot.lane.b32.xlu0 %v566, 73
      %v593 = vpop.permute.xlu0 %592
      %594 = vrot.lane.b32.xlu0 %v569, 73
      %v595 = vpop.permute.xlu0 %594
      %596 = vrot.lane.b32.xlu0 %v572, 73
      %v597 = vpop.permute.xlu0 %596
      %598 = vrot.lane.b32.xlu0 %v575, 73
      %v599 = vpop.permute.xlu0 %598
      %vm609 = vcmask 588800
      %v611 = vsel %vm609, %v536, 0
      %613 = vmatprep.subr.mxu0 0.0
      %614 = vmatpush1.msra.mxu0 0.0
      %615 = vmatprep.subr.mxu0 0.0
      %616 = vmatpush1.msra.mxu0 0.0
      %617 = vmatprep.subr.mxu0 0.0
      %618 = vmatpush1.msra.mxu0 0.0
      %619 = vmatprep.subr.mxu0 0.0
      %620 = vmatpush1.msra.mxu0 0.0
      %621 = vmatprep.subr.mxu0 0.0
      %622 = vmatpush1.msra.mxu0 0.0
      %623 = vmatprep.subr.mxu0 0.0
      %624 = vmatpush1.msra.mxu0 0.0
      %625 = vmatprep.subr.mxu0 0.0
      %626 = vmatpush1.msra.mxu0 0.0
      %627 = vmatprep.subr.mxu0 0.0
      %628 = vmatpush1.msra.mxu0 %v599
      %629 = vmatprep.subr.mxu0 0.0
      %630 = vmatpush1.msra.mxu0 %v597
      %631 = vmatprep.subr.mxu0 0.0
      %632 = vmatpush1.msra.mxu0 %v595
      %633 = vmatprep.subr.mxu0 0.0
      %634 = vmatpush1.msra.mxu0 %v593
      %635 = vmatprep.subr.mxu0 0.0
      %636 = vmatpush1.msra.mxu0 %v591
      %637 = vmatprep.subr.mxu0 0.0
      %638 = vmatpush1.msra.mxu0 %v589
      %639 = vmatprep.subr.mxu0 0.0
      %640 = vmatpush1.msra.mxu0 %v587
      %641 = vmatprep.subr.mxu0 0.0
      %642 = vmatpush1.msra.mxu0 %v585
      %643 = vmatprep.subr.mxu0 0.0
      %644 = vmatpush1.msra.mxu0 %v583
      %645 = vmatprep.subr.mxu0 0.0
      %646 = vmatpush2.msra.mxu0 0.0
      %647 = vmatprep.subr.mxu0 0.0
      %648 = vmatpush2.msra.mxu0 0.0
      %649 = vmatprep.subr.mxu0 0.0
      %650 = vmatpush2.msra.mxu0 0.0
      %651 = vmatprep.subr.mxu0 0.0
      %652 = vmatpush2.msra.mxu0 0.0
      %653 = vmatprep.subr.mxu0 0.0
      %654 = vmatpush2.msra.mxu0 0.0
      %655 = vmatprep.subr.mxu0 0.0
      %656 = vmatpush2.msra.mxu0 0.0
      %657 = vmatprep.subr.mxu0 0.0
      %658 = vmatpush2.msra.mxu0 0.0
      %659 = vmatprep.subr.mxu0 0.0
      %660 = vmatpush2.msra.mxu0 0.0
      %661 = vmatprep.subr.mxu0 0.0
      %662 = vmatpush2.msra.mxu0 0.0
      %663 = vmatprep.subr.mxu0 0.0
      %664 = vmatpush2.msra.mxu0 0.0
      %665 = vmatprep.subr.mxu0 0.0
      %666 = vmatpush2.msra.mxu0 0.0
      %667 = vmatprep.subr.mxu0 0.0
      %668 = vmatpush2.msra.mxu0 0.0
      %669 = vmatprep.subr.mxu0 0.0
      %670 = vmatpush2.msra.mxu0 0.0
      %671 = vmatprep.subr.mxu0 0.0
      %672 = vmatpush2.msra.mxu0 0.0
      %673 = vmatprep.subr.mxu0 0.0
      %674 = vmatpush2.msra.mxu0 0.0
      %675 = vmatprep.subr.mxu0 0.0
      %676 = vmatpush2.msra.mxu0 0.0
      %677 = vmatprep.mubr.f32.mxu0 0.0
      %678 = vmatmul.mubr.f32.gmra.mxu0 %v611
      %v679 = vpop.f32.mrf.mxu0
      %v680 = vadd.f32 %v579, %v679
      %v681 = vpop.f32.mrf.mxu0
      %682 = vdwg.mxu0
      %v683 = vmax.f32 %v680, 0.0
      %vm684 = vcmask 523264
      %685 = vst.msk [vmem:[%s307] sm:$0xff] %vm684, %v683
      %686 = vrot.lane.b32.xlu0 %v683, 64
      %v687 = vpop.permute.xlu0 %686
      %v688 = vsel %vm317, %v687, %v683
      %689 = vrot.lane.b32.xlu0 %v688, 64
      %v690 = vpop.permute.xlu0 %689
      %v691 = vsel %vm317, %v690, %v683
      %693 = vrot.lane.b32.xlu0 %v691, 127
      %v694 = vpop.permute.xlu0 %693
      %v696 = vmax.f32 %v683, %v694
      %697 = vrot.lane.b32.xlu0 %v696, 64
      %v698 = vpop.permute.xlu0 %697
      %v699 = vsel %vm317, %v698, %v696
      %700 = vrot.lane.b32.xlu0 %v699, 64
      %v701 = vpop.permute.xlu0 %700
      %v702 = vsel %vm317, %v701, %v696
      %704 = vrot.lane.b32.xlu0 %v702, 120
      %v705 = vpop.permute.xlu0 %704
      %v707 = vmax.f32 %v696, %v705
      %v708 = vld [vmem:[%s6] sm:$0xff]
      %v709 = vld [vmem:[%s6 + $0x8] sm:$0xff]
      %v710 = vld [vmem:[%s6 + $0x10] sm:$0xff]
      %v711 = vld [vmem:[%s6 + $0x18] sm:$0xff]
      %v712 = vld [vmem:[%s6 + $0x20] sm:$0xff]
      %v713 = vld [vmem:[%s6 + $0x28] sm:$0xff]
      %v714 = vld [vmem:[%s6 + $0x30] sm:$0xff]
      %v715 = vld [vmem:[%s6 + $0x38] sm:$0xff]
      %v717 = vsel %vm684, %v707, 0
      %719 = vmatprep.subr.mxu0 0.0
      %720 = vmatpush1.msra.mxu0 0.0
      %721 = vmatprep.subr.mxu0 0.0
      %722 = vmatpush1.msra.mxu0 0.0
      %723 = vmatprep.subr.mxu0 0.0
      %724 = vmatpush1.msra.mxu0 0.0
      %725 = vmatprep.subr.mxu0 0.0
      %726 = vmatpush1.msra.mxu0 0.0
      %727 = vmatprep.subr.mxu0 0.0
      %728 = vmatpush1.msra.mxu0 0.0
      %729 = vmatprep.subr.mxu0 0.0
      %730 = vmatpush1.msra.mxu0 0.0
      %731 = vmatprep.subr.mxu0 0.0
      %732 = vmatpush1.msra.mxu0 0.0
      %733 = vmatprep.subr.mxu0 0.0
      %734 = vmatpush1.msra.mxu0 0.0
      %735 = vmatprep.subr.mxu0 0.0
      %736 = vmatpush1.msra.mxu0 %v715
      %737 = vmatprep.subr.mxu0 0.0
      %738 = vmatpush1.msra.mxu0 %v714
      %739 = vmatprep.subr.mxu0 0.0
      %740 = vmatpush1.msra.mxu0 %v713
      %741 = vmatprep.subr.mxu0 0.0
      %742 = vmatpush1.msra.mxu0 %v712
      %743 = vmatprep.subr.mxu0 0.0
      %744 = vmatpush1.msra.mxu0 %v711
      %745 = vmatprep.subr.mxu0 0.0
      %746 = vmatpush1.msra.mxu0 %v710
      %747 = vmatprep.subr.mxu0 0.0
      %748 = vmatpush1.msra.mxu0 %v709
      %749 = vmatprep.subr.mxu0 0.0
      %750 = vmatpush1.msra.mxu0 %v708
      %751 = vmatprep.subr.mxu0 0.0
      %752 = vmatpush2.msra.mxu0 0.0
      %753 = vmatprep.subr.mxu0 0.0
      %754 = vmatpush2.msra.mxu0 0.0
      %755 = vmatprep.subr.mxu0 0.0
      %756 = vmatpush2.msra.mxu0 0.0
      %757 = vmatprep.subr.mxu0 0.0
      %758 = vmatpush2.msra.mxu0 0.0
      %759 = vmatprep.subr.mxu0 0.0
      %760 = vmatpush2.msra.mxu0 0.0
      %761 = vmatprep.subr.mxu0 0.0
      %762 = vmatpush2.msra.mxu0 0.0
      %763 = vmatprep.subr.mxu0 0.0
      %764 = vmatpush2.msra.mxu0 0.0
      %765 = vmatprep.subr.mxu0 0.0
      %766 = vmatpush2.msra.mxu0 0.0
      %767 = vmatprep.subr.mxu0 0.0
      %768 = vmatpush2.msra.mxu0 0.0
      %769 = vmatprep.subr.mxu0 0.0
      %770 = vmatpush2.msra.mxu0 0.0
      %771 = vmatprep.subr.mxu0 0.0
      %772 = vmatpush2.msra.mxu0 0.0
      %773 = vmatprep.subr.mxu0 0.0
      %774 = vmatpush2.msra.mxu0 0.0
      %775 = vmatprep.subr.mxu0 0.0
      %776 = vmatpush2.msra.mxu0 0.0
      %777 = vmatprep.subr.mxu0 0.0
      %778 = vmatpush2.msra.mxu0 0.0
      %779 = vmatprep.subr.mxu0 0.0
      %780 = vmatpush2.msra.mxu0 0.0
      %781 = vmatprep.subr.mxu0 0.0
      %782 = vmatpush2.msra.mxu0 0.0
      %783 = vmatprep.mubr.f32.mxu0 0.0
      %784 = vmatmul.mubr.f32.gmra.mxu0 %v717
      %v785 = vpop.f32.mrf.mxu0
      %v786 = vadd.f32 0.0, %v785
      %v787 = vpop.f32.mrf.mxu0
      %788 = vdwg.mxu0
      %vm789 = vcmask 130048
      %790 = vst.msk [vmem:[%s311] sm:$0xff] %vm789, %v786
      %p791 = scmp.lt.s32.totalorder %s20, 1
      %s792 = scalar_select %p791, %s20, 1
      %s793 = smul.addr %s792, 8
      %s794 = scalar_lea.vmem %s7, %s793
      %p795 = scmp.lt.s32.totalorder %s20, 1
      %s796 = scalar_select %p795, %s20, 1
      %s797 = smul.addr %s796, 8
      %s798 = scalar_lea.vmem %s8, %s797
      // Predicated region
      $region49: #{encoder_forward.4} parent=47 // pred_check
        %p799 = pneg %p190
      $region50: #{encoder_forward.4} parent=47 // pred_check_branch
        %801 = sbr.rel (%p799) target = $region52
      $region51: #{encoder_forward.4} parent=47 // pred_region
        _
      $region52: #{encoder_forward.4} parent=47 // pred_fallthru
        _
      // Predicated region
      $region53: #{encoder_forward.4} parent=47 // pred_check
        %p802 = pneg %p216
      $region54: #{encoder_forward.4} parent=47 // pred_check_branch
        %804 = sbr.rel (%p802) target = $region56
      $region55: #{encoder_forward.4} parent=47 // pred_region
        _
      $region56: #{encoder_forward.4} parent=47 // pred_fallthru
        _
    $region48: #{encoder_forward.4} parent=5 // pred_fallthru
      _
    %p805 = scmp.le.s32.totalorder 2, %s15
    // Predicated region
    $region57: #{encoder_forward.4} parent=5 // pred_check
      %p806 = pneg %p805
    $region58: #{encoder_forward.4} parent=5 // pred_check_branch
      %808 = sbr.rel (%p806) target = $region60
    $region59: #{encoder_forward.4} parent=5 // pred_region
      %s809 = ssub.s32 %s15, 2
      // Predicated region
      $region61: #{encoder_forward.4} parent=59 // pred_check
        %p810 = pneg %p196
      $region62: #{encoder_forward.4} parent=59 // pred_check_branch
        %812 = sbr.rel (%p810) target = $region64
      $region63: #{encoder_forward.4} parent=59 // pred_region
        %p813 = scmp.lt.s32.totalorder %s21, 1
        %s814 = scalar_select %p813, %s21, 1
        %s815 = smul.addr %s814, 8
        %s816 = scalar_lea.vmem %s7, %s815
      $region64: #{encoder_forward.4} parent=59 // pred_fallthru
        _
      // Predicated region
      $region65: #{encoder_forward.4} parent=59 // pred_check
        %p817 = pneg %p222
      $region66: #{encoder_forward.4} parent=59 // pred_check_branch
        %819 = sbr.rel (%p817) target = $region68
      $region67: #{encoder_forward.4} parent=59 // pred_region
        %p820 = scmp.lt.s32.totalorder %s21, 1
        %s821 = scalar_select %p820, %s21, 1
        %s822 = smul.addr %s821, 8
        %s823 = scalar_lea.vmem %s8, %s822
      $region68: #{encoder_forward.4} parent=59 // pred_fallthru
        _
    $region60: #{encoder_forward.4} parent=5 // pred_fallthru
      _
  $region6: #{encoder_forward.4} parent=0 // loop_footer
    %s19 = sadd.s32 1, %s15
  $region7: #{encoder_forward.4} parent=0 // loop_footer_branch
    %14 = sbr.rel target = $region3
  $region8: #{encoder_forward.4} parent=0 // loop_exit
    _

// kernel: encoder_forward.3
$region0: #{encoder_forward.3}
  #allocation0 [shape = 'u32[]', space=smem, size = 0x4, offset = 0x4, fixed_abs, tag = 'smem constant byte address 0x4 - core index']
  #allocation1 [shape = 'u32[144,128]{1,0:T(1,128)}', space=vmem, size = 0x12000, scoped, tag = 'internal scratch']
  %s0 = inlined_call_operand.vmem [shape: f32[2,3,256], index: 0, kind: input, shape index: {}]
  %s1 = inlined_call_operand.vmem [shape: f32[4,27], index: 1, kind: input, shape index: {}]
  %s2 = inlined_call_operand.vmem [shape: f32[4,1], index: 2, kind: input, shape index: {}]
  %s3 = inlined_call_operand.vmem [shape: f32[4,36], index: 3, kind: input, shape index: {}]
  %s4 = inlined_call_operand.vmem [shape: f32[4,1], index: 4, kind: input, shape index: {}]
  %s5 = inlined_call_operand.vmem [shape: f32[9,256], index: 5, kind: input, shape index: {}]
  %s6 = inlined_call_operand.hbm [shape: f32[256,64], index: 6, kind: input, shape index: {}]
  %s7 = inlined_call_operand.vmem [shape: f32[2,4,256], index: 7, kind: output, shape index: {0}]
  %s8 = inlined_call_operand.vmem [shape: f32[2,4,64], index: 8, kind: output, shape index: {1}]
  %9 = xla_tuple %s7, %s8
  %s10 = sld [smem:[#allocation0]]
  $region73: #{encoder_forward.3} parent=0
    _
  %s12 = ssub.s32 1, %s10
  %s13 = scalar_select 0, %s12, %s10
  $region1: #{encoder_forward.3} parent=0
    #allocation2 [shape = 'u8[131072]{0}', space=vmem, size = 0x20000, scoped, tag = 'input window, operand 6, single buffered']
    #allocation3 [shape = 's32[2]{0}', space=sflag, size = 0x8, scoped, tag = 'scoped memory for encoder_forward.3']
    %14 = vsyncpa [#allocation3], 0
    loop: start=0, step=1, limit=4
    $region2: #{encoder_forward.3} parent=1 // loop_pre_header
      _
    $region3: #{encoder_forward.3} parent=1 // loop_header
      %s16 = sphi 0, %s20
      %p17 = scmp.ge.s32.totalorder %s16, 4
      %s26 = sphi 0, %s28
      %s29 = sphi 0, %s26
      %s30 = sphi 0, %s29
      %s46 = sphi 0, %s30
      %s50 = sphi 0, %s50
      %s52 = sphi 0, %s50
      %s53 = sphi 0, %s52
      %s67 = sphi 0, %s53
      %s71 = sphi 0, %s71
      %s73 = sphi 0, %s71
      %s74 = sphi 0, %s73
      %s88 = sphi 0, %s74
      %s92 = sphi 0, %s92
      %s94 = sphi 0, %s92
      %s95 = sphi 0, %s94
      %s109 = sphi 0, %s95
      %s113 = sphi 0, %s113
      %s115 = sphi 0, %s113
      %s116 = sphi 0, %s115
      %s130 = sphi 0, %s116
      %s134 = sphi 0, %s134
      %s136 = sphi 0, %s134
      %s137 = sphi 0, %s136
      %s151 = sphi 0, %s137
      %s155 = sphi 0, %s155
      %s157 = sphi 0, %s155
      %s158 = sphi 0, %s157
      %s172 = sphi 0, %s158
      %s178 = sphi 0, %s180
      %s181 = sphi 0, %s178
      %s182 = sphi 0, %s181
      %s198 = sphi 0, %s182
      %s204 = sphi 0, %s206
      %s207 = sphi 0, %s204
      %s208 = sphi 0, %s207
      %s224 = sphi 0, %s208
    $region4: #{encoder_forward.3} parent=1 // loop_header_branch
      %19 = sbr.rel (%p17) target = $region8
    $region5: #{encoder_forward.3} parent=1 // loop_body
      %s21 = ssub.s32 %s16, 1
      %s22 = ssub.s32 %s16, 2
      %s23 = sadd.s32 %s16, 1
      %s24 = ssub.s32 %s16, %s23
      %p25 = scmp.eq.s32.totalorder %s24, 0
      %s27 = sadd.s32 %s26, 1
      %s28 = scalar_select %p25, %s26, %s27
      %p31 = pneg %p25
      %p32 = scmp.eq.s32.totalorder %s16, 1
      %p33 = por %p31, %p32
      %p34 = scmp.ne.s32.totalorder %s26, %s29
      %p35 = scmp.eq.s32.totalorder %s16, 0
      %p36 = por %p34, %p35
      %p37 = scmp.ne.s32.totalorder %s26, %s29
      %p38 = scmp.eq.s32.totalorder %s21, 1
      %p39 = por %p37, %p38
      %p40 = scmp.ne.s32.totalorder %s29, %s30
      %p41 = scmp.eq.s32.totalorder %s21, 0
      %p42 = por %p40, %p41
      %p43 = scmp.ne.s32.totalorder %s29, %s30
      %p44 = scmp.eq.s32.totalorder %s22, 1
      %p45 = por %p43, %p44
      %p47 = scmp.ne.s32.totalorder %s30, %s46
      %p48 = scmp.eq.s32.totalorder %s22, 0
      %p49 = por %p47, %p48
      %s51 = sadd.s32 %s50, 1
      %p54 = scmp.eq.s32.totalorder %s16, 1
      %p55 = scmp.ne.s32.totalorder %s50, %s52
      %p56 = scmp.eq.s32.totalorder %s16, 0
      %p57 = por %p55, %p56
      %p58 = scmp.ne.s32.totalorder %s50, %s52
      %p59 = scmp.eq.s32.totalorder %s21, 1
      %p60 = por %p58, %p59
      %p61 = scmp.ne.s32.totalorder %s52, %s53
      %p62 = scmp.eq.s32.totalorder %s21, 0
      %p63 = por %p61, %p62
      %p64 = scmp.ne.s32.totalorder %s52, %s53
      %p65 = scmp.eq.s32.totalorder %s22, 1
      %p66 = por %p64, %p65
      %p68 = scmp.ne.s32.totalorder %s53, %s67
      %p69 = scmp.eq.s32.totalorder %s22, 0
      %p70 = por %p68, %p69
      %s72 = sadd.s32 %s71, 1
      %p75 = scmp.eq.s32.totalorder %s16, 1
      %p76 = scmp.ne.s32.totalorder %s71, %s73
      %p77 = scmp.eq.s32.totalorder %s16, 0
      %p78 = por %p76, %p77
      %p79 = scmp.ne.s32.totalorder %s71, %s73
      %p80 = scmp.eq.s32.totalorder %s21, 1
      %p81 = por %p79, %p80
      %p82 = scmp.ne.s32.totalorder %s73, %s74
      %p83 = scmp.eq.s32.totalorder %s21, 0
      %p84 = por %p82, %p83
      %p85 = scmp.ne.s32.totalorder %s73, %s74
      %p86 = scmp.eq.s32.totalorder %s22, 1
      %p87 = por %p85, %p86
      %p89 = scmp.ne.s32.totalorder %s74, %s88
      %p90 = scmp.eq.s32.totalorder %s22, 0
      %p91 = por %p89, %p90
      %s93 = sadd.s32 %s92, 1
      %p96 = scmp.eq.s32.totalorder %s16, 1
      %p97 = scmp.ne.s32.totalorder %s92, %s94
      %p98 = scmp.eq.s32.totalorder %s16, 0
      %p99 = por %p97, %p98
      %p100 = scmp.ne.s32.totalorder %s92, %s94
      %p101 = scmp.eq.s32.totalorder %s21, 1
      %p102 = por %p100, %p101
      %p103 = scmp.ne.s32.totalorder %s94, %s95
      %p104 = scmp.eq.s32.totalorder %s21, 0
      %p105 = por %p103, %p104
      %p106 = scmp.ne.s32.totalorder %s94, %s95
      %p107 = scmp.eq.s32.totalorder %s22, 1
      %p108 = por %p106, %p107
      %p110 = scmp.ne.s32.totalorder %s95, %s109
      %p111 = scmp.eq.s32.totalorder %s22, 0
      %p112 = por %p110, %p111
      %s114 = sadd.s32 %s113, 1
      %p117 = scmp.eq.s32.totalorder %s16, 1
      %p118 = scmp.ne.s32.totalorder %s113, %s115
      %p119 = scmp.eq.s32.totalorder %s16, 0
      %p120 = por %p118, %p119
      %p121 = scmp.ne.s32.totalorder %s113, %s115
      %p122 = scmp.eq.s32.totalorder %s21, 1
      %p123 = por %p121, %p122
      %p124 = scmp.ne.s32.totalorder %s115, %s116
      %p125 = scmp.eq.s32.totalorder %s21, 0
      %p126 = por %p124, %p125
      %p127 = scmp.ne.s32.totalorder %s115, %s116
      %p128 = scmp.eq.s32.totalorder %s22, 1
      %p129 = por %p127, %p128
      %p131 = scmp.ne.s32.totalorder %s116, %s130
      %p132 = scmp.eq.s32.totalorder %s22, 0
      %p133 = por %p131, %p132
      %s135 = sadd.s32 %s134, 1
      %p138 = scmp.eq.s32.totalorder %s16, 1
      %p139 = scmp.ne.s32.totalorder %s134, %s136
      %p140 = scmp.eq.s32.totalorder %s16, 0
      %p141 = por %p139, %p140
      %p142 = scmp.ne.s32.totalorder %s134, %s136
      %p143 = scmp.eq.s32.totalorder %s21, 1
      %p144 = por %p142, %p143
      %p145 = scmp.ne.s32.totalorder %s136, %s137
      %p146 = scmp.eq.s32.totalorder %s21, 0
      %p147 = por %p145, %p146
      %p148 = scmp.ne.s32.totalorder %s136, %s137
      %p149 = scmp.eq.s32.totalorder %s22, 1
      %p150 = por %p148, %p149
      %p152 = scmp.ne.s32.totalorder %s137, %s151
      %p153 = scmp.eq.s32.totalorder %s22, 0
      %p154 = por %p152, %p153
      %s156 = sadd.s32 %s155, 1
      %p159 = scmp.eq.s32.totalorder %s16, 1
      %p160 = scmp.ne.s32.totalorder %s155, %s157
      %p161 = scmp.eq.s32.totalorder %s16, 0
      %p162 = por %p160, %p161
      %p163 = scmp.ne.s32.totalorder %s155, %s157
      %p164 = scmp.eq.s32.totalorder %s21, 1
      %p165 = por %p163, %p164
      %p166 = scmp.ne.s32.totalorder %s157, %s158
      %p167 = scmp.eq.s32.totalorder %s21, 0
      %p168 = por %p166, %p167
      %p169 = scmp.ne.s32.totalorder %s157, %s158
      %p170 = scmp.eq.s32.totalorder %s22, 1
      %p171 = por %p169, %p170
      %p173 = scmp.ne.s32.totalorder %s158, %s172
      %p174 = scmp.eq.s32.totalorder %s22, 0
      %p175 = por %p173, %p174
      %s176 = ssub.s32 %s16, %s23
      %p177 = scmp.eq.s32.totalorder %s176, 0
      %s179 = sadd.s32 %s178, 1
      %s180 = scalar_select %p177, %s178, %s179
      %p183 = pneg %p177
      %p184 = scmp.eq.s32.totalorder %s16, 1
      %p185 = por %p183, %p184
      %p186 = scmp.ne.s32.totalorder %s178, %s181
      %p187 = scmp.eq.s32.totalorder %s16, 0
      %p188 = por %p186, %p187
      %p189 = scmp.ne.s32.totalorder %s178, %s181
      %p190 = scmp.eq.s32.totalorder %s21, 1
      %p191 = por %p189, %p190
      %p192 = scmp.ne.s32.totalorder %s181, %s182
      %p193 = scmp.eq.s32.totalorder %s21, 0
      %p194 = por %p192, %p193
      %p195 = scmp.ne.s32.totalorder %s181, %s182
      %p196 = scmp.eq.s32.totalorder %s22, 1
      %p197 = por %p195, %p196
      %p199 = scmp.ne.s32.totalorder %s182, %s198
      %p200 = scmp.eq.s32.totalorder %s22, 0
      %p201 = por %p199, %p200
      %s202 = ssub.s32 %s16, %s23
      %p203 = scmp.eq.s32.totalorder %s202, 0
      %s205 = sadd.s32 %s204, 1
      %s206 = scalar_select %p203, %s204, %s205
      %p209 = pneg %p203
      %p210 = scmp.eq.s32.totalorder %s16, 1
      %p211 = por %p209, %p210
      %p212 = scmp.ne.s32.totalorder %s204, %s207
      %p213 = scmp.eq.s32.totalorder %s16, 0
      %p214 = por %p212, %p213
      %p215 = scmp.ne.s32.totalorder %s204, %s207
      %p216 = scmp.eq.s32.totalorder %s21, 1
      %p217 = por %p215, %p216
      %p218 = scmp.ne.s32.totalorder %s207, %s208
      %p219 = scmp.eq.s32.totalorder %s21, 0
      %p220 = por %p218, %p219
      %p221 = scmp.ne.s32.totalorder %s207, %s208
      %p222 = scmp.eq.s32.totalorder %s22, 1
      %p223 = por %p221, %p222
      %p225 = scmp.ne.s32.totalorder %s208, %s224
      %p226 = scmp.eq.s32.totalorder %s22, 0
      %p227 = por %p225, %p226
      %p228 = scmp.le.s32.totalorder 1, %s16
      %p229 = scmp.lt.s32.totalorder %s16, 3
      %p230 = pnand %p228, %p229
      %p231 = pneg %p230
      // Predicated region
      $region9: #{encoder_forward.3} parent=5 // pred_check
        _
      $region10: #{encoder_forward.3} parent=5 // pred_check_branch
        %233 = sbr.rel (%p230) target = $region12
      $region11: #{encoder_forward.3} parent=5 // pred_region
        %s234 = ssub.s32 %s16, 1
        // Predicated region
        $region13: #{encoder_forward.3} parent=11 // pred_check
          %p235 = pneg %p63
        $region14: #{encoder_forward.3} parent=11 // pred_check_branch
          %237 = sbr.rel (%p235) target = $region16
        $region15: #{encoder_forward.3} parent=11 // pred_region
          _
        $region16: #{encoder_forward.3} parent=11 // pred_fallthru
          _
        // Predicated region
        $region17: #{encoder_forward.3} parent=11 // pred_check
          %p238 = pneg %p84
        $region18: #{encoder_forward.3} parent=11 // pred_check_branch
          %240 = sbr.rel (%p238) target = $region20
        $region19: #{encoder_forward.3} parent=11 // pred_region
          _
        $region20: #{encoder_forward.3} parent=11 // pred_fallthru
          _
        // Predicated region
        $region21: #{encoder_forward.3} parent=11 // pred_check
          %p241 = pneg %p105
        $region22: #{encoder_forward.3} parent=11 // pred_check_branch
          %243 = sbr.rel (%p241) target = $region24
        $region23: #{encoder_forward.3} parent=11 // pred_region
          _
        $region24: #{encoder_forward.3} parent=11 // pred_fallthru
          _
        // Predicated region
        $region25: #{encoder_forward.3} parent=11 // pred_check
          %p244 = pneg %p126
        $region26: #{encoder_forward.3} parent=11 // pred_check_branch
          %246 = sbr.rel (%p244) target = $region28
        $region27: #{encoder_forward.3} parent=11 // pred_region
          _
        $region28: #{encoder_forward.3} parent=11 // pred_fallthru
          _
        // Predicated region
        $region29: #{encoder_forward.3} parent=11 // pred_check
          %p247 = pneg %p147
        $region30: #{encoder_forward.3} parent=11 // pred_check_branch
          %249 = sbr.rel (%p247) target = $region32
        $region31: #{encoder_forward.3} parent=11 // pred_region
          _
        $region32: #{encoder_forward.3} parent=11 // pred_fallthru
          _
        // Predicated region
        $region33: #{encoder_forward.3} parent=11 // pred_check
          %p250 = pneg %p168
        $region34: #{encoder_forward.3} parent=11 // pred_check_branch
          %252 = sbr.rel (%p250) target = $region36
        $region35: #{encoder_forward.3} parent=11 // pred_region
          %s254 = ssub.s32 4096, 4096
          %255 = vsyncadd [#allocation3], %s254
          %s256 = sshll.u32 [#allocation2], 4
          %s257 = int_to_ptr.vmem [resolvable:$true] %s256
          %262 = dma.hbm_to_vmem [thread:$0]  %s6, 4096, %s257, [#allocation3], 128, 128, 8
        $region36: #{encoder_forward.3} parent=11 // pred_fallthru
          _
      $region12: #{encoder_forward.3} parent=5 // pred_fallthru
        _
      %p263 = scmp.lt.s32.totalorder %s16, 2
      // Predicated region
      $region37: #{encoder_forward.3} parent=5 // pred_check
        %p264 = pneg %p263
      $region38: #{encoder_forward.3} parent=5 // pred_check_branch
        %266 = sbr.rel (%p264) target = $region40
      $region39: #{encoder_forward.3} parent=5 // pred_region
        // Predicated region
        $region41: #{encoder_forward.3} parent=39 // pred_check
          %p267 = pneg %p36
        $region42: #{encoder_forward.3} parent=39 // pred_check_branch
          %269 = sbr.rel (%p267) target = $region44
        $region43: #{encoder_forward.3} parent=39 // pred_region
          %p270 = scmp.lt.s32.totalorder %s16, 1
          %s271 = scalar_select %p270, %s16, 1
          %s272 = smul.addr %s271, 2
          %s273 = smul.addr %s272, 4
          %s274 = scalar_lea.vmem %s0, %s273
        $region44: #{encoder_forward.3} parent=39 // pred_fallthru
          _
      $region40: #{encoder_forward.3} parent=5 // pred_fallthru
        _
      %p275 = scmp.le.s32.totalorder 1, %s16
      %p276 = scmp.lt.s32.totalorder %s16, 3
      %p277 = pnand %p275, %p276
      %p278 = pneg %p277
      // Predicated region
      $region45: #{encoder_forward.3} parent=5 // pred_check
        _
      $region46: #{encoder_forward.3} parent=5 // pred_check_branch
        %280 = sbr.rel (%p277) target = $region48
      $region47: #{encoder_forward.3} parent=5 // pred_region
        %s281 = ssub.s32 %s16, 1
        // Predicated region
        $region49: #{encoder_forward.3} parent=47 // pred_check
          %p282 = pneg %p168
        $region50: #{encoder_forward.3} parent=47 // pred_check_branch
          %284 = sbr.rel (%p282) target = $region52
        $region51: #{encoder_forward.3} parent=47 // pred_region
          %285 = dma.done [#allocation3], 4096
        $region52: #{encoder_forward.3} parent=47 // pred_fallthru
          _
        %p286 = scmp.lt.s32.totalorder %s21, 1
        %s287 = scalar_select %p286, %s21, 1
        %s288 = smul.addr %s287, 2
        %s289 = smul.addr %s288, 4
        %s290 = scalar_lea.vmem %s0, %s289
        %p291 = pneg %p42
        %p292 = pneg %p39
        %p293 = pneg %p63
        %p294 = pneg %p60
        %p295 = pneg %p84
        %p296 = pneg %p81
        %p297 = pneg %p105
        %p298 = pneg %p102
        %p299 = pneg %p126
        %p300 = pneg %p123
        %p301 = pneg %p147
        %p302 = pneg %p144
        %p303 = pneg %p168
        %p304 = pneg %p165
        %p305 = pneg %p194
        %p306 = pneg %p191
        %p307 = scmp.lt.s32.totalorder %s21, 1
        %s308 = scalar_select %p307, %s21, 1
        %s309 = smul.addr %s308, 2
        %s310 = smul.addr %s309, 4
        %s311 = scalar_lea.vmem %s7, %s310
        %p312 = pneg %p220
        %p313 = pneg %p217
        %p314 = scmp.lt.s32.totalorder %s21, 1
        %s315 = scalar_select %p314, %s21, 1
        %s316 = smul.addr %s315, 4
        %s317 = scalar_lea.vmem %s8, %s316
        %p318 = scmp.lt.s32.totalorder %s21, 1
        %s319 = scalar_select %p318, %s21, 1
        %s320 = smul.addr %s319, 2
        %s321 = smul.addr %s320, 4
        %s322 = scalar_lea.vmem %s0, %s321
        %p323 = scmp.lt.s32.totalorder %s21, 1
        %s324 = scalar_select %p323, %s21, 1
        %s325 = smul.addr %s324, 2
        %s326 = smul.addr %s325, 4
        %s327 = scalar_lea.vmem %s7, %s326
        %p328 = scmp.lt.s32.totalorder %s21, 1
        %s329 = scalar_select %p328, %s21, 1
        %s330 = smul.addr %s329, 4
        %s331 = scalar_lea.vmem %s8, %s330
        %v332 = vld [vmem:[%s322] sm:$0x77]
        %v333 = vld [vmem:[%s5] sm:$0xff]
        %v334 = vld [vmem:[%s5 + $0x8] sm:$0xff]
        %v335 = vld [vmem:[%s5 + $0x10] sm:$0x1]
        %v336 = vld [vmem:[%s5 + $0x18] sm:$0x1]
        %v337 = vld [vmem:[%s1] sm:$0xf]
        %v338 = vld [vmem:[%s2] sm:$0xf]
        %v340 = vcombine.high %v332, %v332
        %342 = vrot.lane.b32.xlu0 %v332, 17
        %v343 = vpop.permute.xlu0 %342
        %344 = vrot.lane.b32.xlu0 %v340, 17
        %v345 = vpop.permute.xlu0 %344
        %v346 = vlaneseq
        %v347 = vand.u32 %v346, 127
        %vm348 = vcmp.lt.s32.totalorder %v347, 17
        %v349 = vsel %vm348, %v343, %v345
        %v350 = vsel %vm348, %v345, %v343
        %v351 = vlaneseq
        %v352 = vshrl.u32 %v351, 7
        %v353 = vsub.s32 0, %v352
        %v354 = vrot.slane %v333, %v353
        %v355 = vlaneseq
        %v356 = vshrl.u32 %v355, 7
        %v357 = vsub.s32 0, %v356
        %v358 = vrot.slane %v334, %v357
        %v359 = vmul.f32 %v350, %v354
        %v360 = vmul.f32 %v349, %v358
        %361 = vrot.lane.b32.xlu0 %v332, 16
        %v362 = vpop.permute.xlu0 %361
        %363 = vrot.lane.b32.xlu0 %v340, 16
        %v364 = vpop.permute.xlu0 %363
        %vm365 = vcmp.lt.s32.totalorder %v347, 16
        %v366 = vsel %vm365, %v362, %v364
        %v367 = vsel %vm365, %v364, %v362
        %v368 = vlaneseq
        %v369 = vshrl.u32 %v368, 7
        %v370 = vsub.s32 1, %v369
        %v371 = vrot.slane %v333, %v370
        %v372 = vlaneseq
        %v373 = vshrl.u32 %v372, 7
        %v374 = vsub.s32 1, %v373
        %v375 = vrot.slane %v334, %v374
        %v376 = vmul.f32 %v367, %v371
        %v377 = vmul.f32 %v366, %v375
        %378 = vrot.lane.b32.xlu0 %v332, 15
        %v379 = vpop.permute.xlu0 %378
        %380 = vrot.lane.b32.xlu0 %v340, 15
        %v381 = vpop.permute.xlu0 %380
        %vm382 = vcmp.lt.s32.totalorder %v347, 15
        %v383 = vsel %vm382, %v379, %v381
        %v384 = vsel %vm382, %v381, %v379
        %v385 = vlaneseq
        %v386 = vshrl.u32 %v385, 7
        %v387 = vsub.s32 2, %v386
        %v388 = vrot.slane %v333, %v387
        %v389 = vlaneseq
        %v390 = vshrl.u32 %v389, 7
        %v391 = vsub.s32 2, %v390
        %v392 = vrot.slane %v334, %v391
        %v393 = vmul.f32 %v384, %v388
        %v394 = vmul.f32 %v383, %v392
        %395 = vrot.lane.b32.xlu0 %v332, 1
        %v396 = vpop.permute.xlu0 %395
        %397 = vrot.lane.b32.xlu0 %v340, 1
        %v398 = vpop.permute.xlu0 %397
        %vm399 = vcmp.lt.s32.totalorder %v347, 1
        %v400 = vsel %vm399, %v396, %v398
        %v401 = vsel %vm399, %v398, %v396
        %v402 = vlaneseq
        %v403 = vshrl.u32 %v402, 7
        %v404 = vsub.s32 3, %v403
        %v405 = vrot.slane %v333, %v404
        %v406 = vlaneseq
        %v407 = vshrl.u32 %v406, 7
        %v408 = vsub.s32 3, %v407
        %v409 = vrot.slane %v334, %v408
        %v410 = vmul.f32 %v401, %v405
        %v411 = vmul.f32 %v400, %v409
        %412 = vrot.lane.b32.xlu0 %v332, 127
        %v413 = vpop.permute.xlu0 %412
        %414 = vrot.lane.b32.xlu0 %v340, 127
        %v415 = vpop.permute.xlu0 %414
        %vm416 = vcmp.lt.s32.totalorder %v347, 127
        %v417 = vsel %vm416, %v413, %v415
        %v418 = vsel %vm416, %v415, %v413
        %v419 = vlaneseq
        %v420 = vshrl.u32 %v419, 7
        %v421 = vsub.s32 5, %v420
        %v422 = vrot.slane %v333, %v421
        %v423 = vlaneseq
        %v424 = vshrl.u32 %v423, 7
        %v425 = vsub.s32 5, %v424
        %v426 = vrot.slane %v334, %v425
        %v427 = vmul.f32 %v417, %v422
        %v428 = vmul.f32 %v418, %v426
        %429 = vrot.lane.b32.xlu0 %v332, 113
        %v430 = vpop.permute.xlu0 %429
        %431 = vrot.lane.b32.xlu0 %v340, 113
        %v432 = vpop.permute.xlu0 %431
        %vm433 = vcmp.lt.s32.totalorder %v347, 113
        %v434 = vsel %vm433, %v430, %v432
        %v435 = vsel %vm433, %v432, %v430
        %v436 = vlaneseq
        %v437 = vshrl.u32 %v436, 7
        %v438 = vsub.s32 6, %v437
        %v439 = vrot.slane %v333, %v438
        %v440 = vlaneseq
        %v441 = vshrl.u32 %v440, 7
        %v442 = vsub.s32 6, %v441
        %v443 = vrot.slane %v334, %v442
        %v444 = vmul.f32 %v434, %v439
        %v445 = vmul.f32 %v435, %v443
        %446 = vrot.lane.b32.xlu0 %v332, 112
        %v447 = vpop.permute.xlu0 %446
        %448 = vrot.lane.b32.xlu0 %v340, 112
        %v449 = vpop.permute.xlu0 %448
        %vm450 = vcmp.lt.s32.totalorder %v347, 112
        %v451 = vsel %vm450, %v447, %v449
        %v452 = vsel %vm450, %v449, %v447
        %v453 = vlaneseq
        %v454 = vshrl.u32 %v453, 7
        %v455 = vsub.s32 7, %v454
        %v456 = vrot.slane %v333, %v455
        %v457 = vlaneseq
        %v458 = vshrl.u32 %v457, 7
        %v459 = vsub.s32 7, %v458
        %v460 = vrot.slane %v334, %v459
        %v461 = vmul.f32 %v451, %v456
        %v462 = vmul.f32 %v452, %v460
        %463 = vrot.lane.b32.xlu0 %v332, 111
        %v464 = vpop.permute.xlu0 %463
        %465 = vrot.lane.b32.xlu0 %v340, 111
        %v466 = vpop.permute.xlu0 %465
        %vm467 = vcmp.lt.s32.totalorder %v347, 111
        %v468 = vsel %vm467, %v464, %v466
        %v469 = vsel %vm467, %v466, %v464
        %v470 = vlaneseq
        %v471 = vshrl.u32 %v470, 7
        %v472 = vsub.s32 0, %v471
        %v473 = vrot.slane %v335, %v472
        %v474 = vlaneseq
        %v475 = vshrl.u32 %v474, 7
        %v476 = vsub.s32 0, %v475
        %v477 = vrot.slane %v336, %v476
        %v478 = vmul.f32 %v468, %v473
        %v479 = vmul.f32 %v469, %v477
        %v482 = vrot.slane %v376, 5
        %v483 = vrot.slane %v377, 5
        %v488 = vrot.slane %v393, 2
        %v489 = vrot.slane %v394, 2
        %v494 = vrot.slane %v410, 7
        %v495 = vrot.slane %v411, 7
        %v498 = vcombine.low %v332, %v332
        %v502 = vrot.slane %v427, 1
        %v503 = vrot.slane %v428, 1
        %v508 = vrot.slane %v444, 6
        %v509 = vrot.slane %v445, 6
        %v514 = vrot.slane %v461, 3
        %v515 = vrot.slane %v462, 3
        %vm518 = vcmask 1042432
        %v519 = vsel %vm518, %v359, %v482
        %v520 = vsel %vm518, %v360, %v483
        %vm521 = vcmask 1045504
        %v522 = vsel %vm521, %v519, %v488
        %v523 = vsel %vm521, %v520, %v489
        %vm524 = vcmask 1040384
        %v525 = vsel %vm524, %v488, %v494
        %v526 = vsel %vm524, %v489, %v495
        %vm527 = vcmask 1043456
        %v528 = vsel %vm527, %v525, %v498
        %v529 = vsel %vm527, %v526, %v332
        %vm530 = vcmask 1046528
        %v531 = vsel %vm530, %v528, %v502
        %v532 = vsel %vm530, %v529, %v503
        %vm533 = vcmask 1041408
        %v534 = vsel %vm533, %v502, %v508
        %v535 = vsel %vm533, %v503, %v509
        %vm536 = vcmask 1044480
        %v537 = vsel %vm536, %v534, %v514
        %v538 = vsel %vm536, %v535, %v515
        %540 = vset.pattern.permute.xlu0 0
        %541 = vperm.xlu0 %540, %v338
        %v542 = vpop.permute.xlu0 %541
        %vm544 = vcmask 220160
        %v546 = vsel %vm544, %v337, 0
        %v549 = vsel %vm518, %v478, 0
        %v552 = vsel %vm518, %v479, 0
        %554 = vmatprep.subr.mxu0 0.0
        %555 = vmatpush1.msra.mxu0 0.0
        %556 = vmatprep.subr.mxu0 0.0
        %557 = vmatpush1.msra.mxu0 0.0
        %558 = vmatprep.subr.mxu0 0.0
        %559 = vmatpush1.msra.mxu0 0.0
        %560 = vmatprep.subr.mxu0 0.0
        %561 = vmatpush1.msra.mxu0 0.0
        %562 = vmatprep.subr.mxu0 0.0
        %563 = vmatpush1.msra.mxu0 0.0
        %564 = vmatprep.subr.mxu0 0.0
        %565 = vmatpush1.msra.mxu0 0.0
        %566 = vmatprep.subr.mxu0 0.0
        %567 = vmatpush1.msra.mxu0 0.0
        %568 = vmatprep.subr.mxu0 0.0
        %569 = vmatpush1.msra.mxu0 0.0
        %570 = vmatprep.subr.mxu0 0.0
        %571 = vmatpush1.msra.mxu0 0.0
        %572 = vmatprep.subr.mxu0 0.0
        %573 = vmatpush1.msra.mxu0 0.0
        %574 = vmatprep.subr.mxu0 0.0
        %575 = vmatpush1.msra.mxu0 0.0
        %576 = vmatprep.subr.mxu0 0.0
        %577 = vmatpush1.msra.mxu0 0.0
        %578 = vmatprep.subr.mxu0 %v552
        %579 = vmatpush1.msra.mxu0 %v549
        %580 = vmatprep.subr.mxu0 %v538
        %581 = vmatpush1.msra.mxu0 %v537
        %582 = vmatprep.subr.mxu0 %v532
        %583 = vmatpush1.msra.mxu0 %v531
        %584 = vmatprep.subr.mxu0 %v523
        %585 = vmatpush1.msra.mxu0 %v522
        %586 = vmatprep.subr.mxu0 0.0
        %587 = vmatpush2.msra.mxu0 0.0
        %588 = vmatprep.subr.mxu0 0.0
        %589 = vmatpush2.msra.mxu0 0.0
        %590 = vmatprep.subr.mxu0 0.0
        %591 = vmatpush2.msra.mxu0 0.0
        %592 = vmatprep.subr.mxu0 0.0
        %593 = vmatpush2.msra.mxu0 0.0
        %594 = vmatprep.subr.mxu0 0.0
        %595 = vmatpush2.msra.mxu0 0.0
        %596 = vmatprep.subr.mxu0 0.0
        %597 = vmatpush2.msra.mxu0 0.0
        %598 = vmatprep.subr.mxu0 0.0
        %599 = vmatpush2.msra.mxu0 0.0
        %600 = vmatprep.subr.mxu0 0.0
        %601 = vmatpush2.msra.mxu0 0.0
        %602 = vmatprep.subr.mxu0 0.0
        %603 = vmatpush2.msra.mxu0 0.0
        %604 = vmatprep.subr.mxu0 0.0
        %605 = vmatpush2.msra.mxu0 0.0
        %606 = vmatprep.subr.mxu0 0.0
        %607 = vmatpush2.msra.mxu0 0.0
        %608 = vmatprep.subr.mxu0 0.0
        %609 = vmatpush2.msra.mxu0 0.0
        %610 = vmatprep.subr.mxu0 0.0
        %611 = vmatpush2.msra.mxu0 0.0
        %612 = vmatprep.subr.mxu0 0.0
        %613 = vmatpush2.msra.mxu0 0.0
        %614 = vmatprep.subr.mxu0 0.0
        %615 = vmatpush2.msra.mxu0 0.0
        %616 = vmatprep.subr.mxu0 0.0
        %617 = vmatpush2.msra.mxu0 0.0
        %618 = vmatprep.mubr.f32.mxu0 0.0
        %619 = vmatmul.mubr.f32.gmra.mxu0 %v546
        %v620 = vpop.f32.mrf.mxu0
        %v621 = vadd.f32 %v542, %v620
        %v622 = vpop.f32.mrf.mxu0
        %v623 = vadd.f32 %v542, %v622
        %624 = vdwg.mxu0
        %v625 = vmax.f32 %v621, 0.0
        %v626 = vmax.f32 %v623, 0.0
        %v627 = vld [vmem:[%s3] sm:$0xf]
        %v628 = vld [vmem:[%s4] sm:$0xf]
        %629 = vrot.lane.b32.xlu0 %v625, 17
        %v630 = vpop.permute.xlu0 %629
        %631 = vrot.lane.b32.xlu0 %v626, 17
        %v632 = vpop.permute.xlu0 %631
        %v633 = vsel %vm348, %v630, %v632
        %v634 = vsel %vm348, %v632, %v630
        %v635 = vmul.f32 %v634, %v354
        %v636 = vmul.f32 %v633, %v358
        %637 = vrot.lane.b32.xlu0 %v625, 16
        %v638 = vpop.permute.xlu0 %637
        %639 = vrot.lane.b32.xlu0 %v626, 16
        %v640 = vpop.permute.xlu0 %639
        %v641 = vsel %vm365, %v638, %v640
        %v642 = vsel %vm365, %v640, %v638
        %v643 = vmul.f32 %v642, %v371
        %v644 = vmul.f32 %v641, %v375
        %645 = vrot.lane.b32.xlu0 %v625, 15
        %v646 = vpop.permute.xlu0 %645
        %647 = vrot.lane.b32.xlu0 %v626, 15
        %v648 = vpop.permute.xlu0 %647
        %v649 = vsel %vm382, %v646, %v648
        %v650 = vsel %vm382, %v648, %v646
        %v651 = vmul.f32 %v650, %v388
        %v652 = vmul.f32 %v649, %v392
        %653 = vrot.lane.b32.xlu0 %v625, 1
        %v654 = vpop.permute.xlu0 %653
        %655 = vrot.lane.b32.xlu0 %v626, 1
        %v656 = vpop.permute.xlu0 %655
        %v657 = vsel %vm399, %v654, %v656
        %v658 = vsel %vm399, %v656, %v654
        %v659 = vmul.f32 %v658, %v405
        %v660 = vmul.f32 %v657, %v409
        %661 = vrot.lane.b32.xlu0 %v625, 127
        %v662 = vpop.permute.xlu0 %661
        %663 = vrot.lane.b32.xlu0 %v626, 127
        %v664 = vpop.permute.xlu0 %663
        %v665 = vsel %vm416, %v662, %v664
        %v666 = vsel %vm416, %v664, %v662
        %v667 = vmul.f32 %v665, %v422
        %v668 = vmul.f32 %v666, %v426
        %669 = vrot.lane.b32.xlu0 %v625, 113
        %v670 = vpop.permute.xlu0 %669
        %671 = vrot.lane.b32.xlu0 %v626, 113
        %v672 = vpop.permute.xlu0 %671
        %v673 = vsel %vm433, %v670, %v672
        %v674 = vsel %vm433, %v672, %v670
        %v675 = vmul.f32 %v673, %v439
        %v676 = vmul.f32 %v674, %v443
        %677 = vrot.lane.b32.xlu0 %v625, 112
        %v678 = vpop.permute.xlu0 %677
        %679 = vrot.lane.b32.xlu0 %v626, 112
        %v680 = vpop.permute.xlu0 %679
        %v681 = vsel %vm450, %v678, %v680
        %v682 = vsel %vm450, %v680, %v678
        %v683 = vmul.f32 %v681, %v456
        %v684 = vmul.f32 %v682, %v460
        %685 = vrot.lane.b32.xlu0 %v625, 111
        %v686 = vpop.permute.xlu0 %685
        %687 = vrot.lane.b32.xlu0 %v626, 111
        %v688 = vpop.permute.xlu0 %687
        %v689 = vsel %vm467, %v686, %v688
        %v690 = vsel %vm467, %v688, %v686
        %v691 = vmul.f32 %v689, %v473
        %v692 = vmul.f32 %v690, %v477
        %v695 = vrot.slane %v643, 4
        %v696 = vrot.slane %v644, 4
        %v701 = vrot.slane %v659, 4
        %v702 = vrot.slane %v660, 4
        %v707 = vrot.slane %v667, 4
        %v708 = vrot.slane %v668, 4
        %v713 = vrot.slane %v683, 4
        %v714 = vrot.slane %v684, 4
        %v717 = vsel %vm527, %v635, %v695
        %v718 = vsel %vm527, %v636, %v696
        %v719 = vsel %vm527, %v651, %v701
        %v720 = vsel %vm527, %v652, %v702
        %v721 = vsel %vm527, %v625, %v707
        %v722 = vsel %vm527, %v626, %v708
        %v723 = vsel %vm527, %v675, %v713
        %v724 = vsel %vm527, %v676, %v714
        %726 = vset.pattern.permute.xlu0 0
        %727 = vperm.xlu0 %726, %v628
        %v728 = vpop.permute.xlu0 %727
        %vm730 = vcmask 293888
        %v732 = vsel %vm730, %v627, 0
        %v735 = vsel %vm527, %v691, 0
        %v738 = vsel %vm527, %v692, 0
        %740 = vmatprep.subr.mxu0 0.0
        %741 = vmatpush1.msra.mxu0 0.0
        %742 = vmatprep.subr.mxu0 0.0
        %743 = vmatpush1.msra.mxu0 0.0
        %744 = vmatprep.subr.mxu0 0.0
        %745 = vmatpush1.msra.mxu0 0.0
        %746 = vmatprep.subr.mxu0 0.0
        %747 = vmatpush1.msra.mxu0 0.0
        %748 = vmatprep.subr.mxu0 0.0
        %749 = vmatpush1.msra.mxu0 0.0
        %750 = vmatprep.subr.mxu0 0.0
        %751 = vmatpush1.msra.mxu0 0.0
        %752 = vmatprep.subr.mxu0 0.0
        %753 = vmatpush1.msra.mxu0 0.0
        %754 = vmatprep.subr.mxu0 0.0
        %755 = vmatpush1.msra.mxu0 0.0
        %756 = vmatprep.subr.mxu0 0.0
        %757 = vmatpush1.msra.mxu0 0.0
        %758 = vmatprep.subr.mxu0 0.0
        %759 = vmatpush1.msra.mxu0 0.0
        %760 = vmatprep.subr.mxu0 0.0
        %761 = vmatpush1.msra.mxu0 0.0
        %762 = vmatprep.subr.mxu0 %v738
        %763 = vmatpush1.msra.mxu0 %v735
        %764 = vmatprep.subr.mxu0 %v724
        %765 = vmatpush1.msra.mxu0 %v723
        %766 = vmatprep.subr.mxu0 %v722
        %767 = vmatpush1.msra.mxu0 %v721
        %768 = vmatprep.subr.mxu0 %v720
        %769 = vmatpush1.msra.mxu0 %v719
        %770 = vmatprep.subr.mxu0 %v718
        %771 = vmatpush1.msra.mxu0 %v717
        %772 = vmatprep.subr.mxu0 0.0
        %773 = vmatpush2.msra.mxu0 0.0
        %774 = vmatprep.subr.mxu0 0.0
        %775 = vmatpush2.msra.mxu0 0.0
        %776 = vmatprep.subr.mxu0 0.0
        %777 = vmatpush2.msra.mxu0 0.0
        %778 = vmatprep.subr.mxu0 0.0
        %779 = vmatpush2.msra.mxu0 0.0
        %780 = vmatprep.subr.mxu0 0.0
        %781 = vmatpush2.msra.mxu0 0.0
        %782 = vmatprep.subr.mxu0 0.0
        %783 = vmatpush2.msra.mxu0 0.0
        %784 = vmatprep.subr.mxu0 0.0
        %785 = vmatpush2.msra.mxu0 0.0
        %786 = vmatprep.subr.mxu0 0.0
        %787 = vmatpush2.msra.mxu0 0.0
        %788 = vmatprep.subr.mxu0 0.0
        %789 = vmatpush2.msra.mxu0 0.0
        %790 = vmatprep.subr.mxu0 0.0
        %791 = vmatpush2.msra.mxu0 0.0
        %792 = vmatprep.subr.mxu0 0.0
        %793 = vmatpush2.msra.mxu0 0.0
        %794 = vmatprep.subr.mxu0 0.0
        %795 = vmatpush2.msra.mxu0 0.0
        %796 = vmatprep.subr.mxu0 0.0
        %797 = vmatpush2.msra.mxu0 0.0
        %798 = vmatprep.subr.mxu0 0.0
        %799 = vmatpush2.msra.mxu0 0.0
        %800 = vmatprep.subr.mxu0 0.0
        %801 = vmatpush2.msra.mxu0 0.0
        %802 = vmatprep.subr.mxu0 0.0
        %803 = vmatpush2.msra.mxu0 0.0
        %804 = vmatprep.mubr.f32.mxu0 0.0
        %805 = vmatmul.mubr.f32.gmra.mxu0 %v732
        %v806 = vpop.f32.mrf.mxu0
        %v807 = vadd.f32 %v728, %v806
        %v808 = vpop.f32.mrf.mxu0
        %v809 = vadd.f32 %v728, %v808
        %810 = vdwg.mxu0
        %v811 = vmax.f32 %v807, 0.0
        %v812 = vmax.f32 %v809, 0.0
        %v815 = vcombine.low %v811, %v812
        %817 = vst [vmem:[%s327] sm:$0xff] %v815
        %818 = vrot.lane.b32.xlu0 %v811, 127
        %v819 = vpop.permute.xlu0 %818
        %820 = vrot.lane.b32.xlu0 %v812, 127
        %v821 = vpop.permute.xlu0 %820
        %v822 = vsel %vm416, %v819, %v821
        %v823 = vsel %vm416, %v821, %v819
        %v824 = vmax.f32 %v811, %v822
        %v825 = vmax.f32 %v812, %v823
        %826 = vrot.lane.b32.xlu0 %v824, 112
        %v827 = vpop.permute.xlu0 %826
        %828 = vrot.lane.b32.xlu0 %v825, 112
        %v829 = vpop.permute.xlu0 %828
        %v830 = vsel %vm450, %v827, %v829
        %v831 = vsel %vm450, %v829, %v827
        %v832 = vmax.f32 %v824, %v830
        %v833 = vmax.f32 %v825, %v831
        %v834 = vld [vmem:[#allocation2] sm:$0xff]
        %v835 = vld [vmem:[#allocation2 + $0x8] sm:$0xff]
        %v836 = vld [vmem:[#allocation2 + $0x10] sm:$0xff]
        %v837 = vld [vmem:[#allocation2 + $0x18] sm:$0xff]
        %v838 = vld [vmem:[#allocation2 + $0x20] sm:$0xff]
        %v839 = vld [vmem:[#allocation2 + $0x28] sm:$0xff]
        %v840 = vld [vmem:[#allocation2 + $0x30] sm:$0xff]
        %v841 = vld [vmem:[#allocation2 + $0x38] sm:$0xff]
        %v842 = vld [vmem:[#allocation2 + $0x40] sm:$0xff]
        %v843 = vld [vmem:[#allocation2 + $0x48] sm:$0xff]
        %v844 = vld [vmem:[#allocation2 + $0x50] sm:$0xff]
        %v845 = vld [vmem:[#allocation2 + $0x58] sm:$0xff]
        %v846 = vld [vmem:[#allocation2 + $0x60] sm:$0xff]
        %v847 = vld [vmem:[#allocation2 + $0x68] sm:$0xff]
        %v848 = vld [vmem:[#allocation2 + $0x70] sm:$0xff]
        %v849 = vld [vmem:[#allocation2 + $0x78] sm:$0xff]
        %v850 = vld [vmem:[#allocation2 + $0x80] sm:$0xff]
        %v851 = vld [vmem:[#allocation2 + $0x88] sm:$0xff]
        %v852 = vld [vmem:[#allocation2 + $0x90] sm:$0xff]
        %v853 = vld [vmem:[#allocation2 + $0x98] sm:$0xff]
        %v854 = vld [vmem:[#allocation2 + $0xa0] sm:$0xff]
        %v855 = vld [vmem:[#allocation2 + $0xa8] sm:$0xff]
        %v856 = vld [vmem:[#allocation2 + $0xb0] sm:$0xff]
        %v857 = vld [vmem:[#allocation2 + $0xb8] sm:$0xff]
        %v858 = vld [vmem:[#allocation2 + $0xc0] sm:$0xff]
        %v859 = vld [vmem:[#allocation2 + $0xc8] sm:$0xff]
        %v860 = vld [vmem:[#allocation2 + $0xd0] sm:$0xff]
        %v861 = vld [vmem:[#allocation2 + $0xd8] sm:$0xff]
        %v862 = vld [vmem:[#allocation2 + $0xe0] sm:$0xff]
        %v863 = vld [vmem:[#allocation2 + $0xe8] sm:$0xff]
        %v864 = vld [vmem:[#allocation2 + $0xf0] sm:$0xff]
        %v865 = vld [vmem:[#allocation2 + $0xf8] sm:$0xff]
        %866 = vmatprep.subr.mxu0 0.0
        %867 = vmatpush1.msra.mxu0 %v849
        %868 = vmatprep.subr.mxu0 0.0
        %869 = vmatpush1.msra.mxu0 %v848
        %870 = vmatprep.subr.mxu0 0.0
        %871 = vmatpush1.msra.mxu0 %v847
        %872 = vmatprep.subr.mxu0 0.0
        %873 = vmatpush1.msra.mxu0 %v846
        %874 = vmatprep.subr.mxu0 0.0
        %875 = vmatpush1.msra.mxu0 %v845
        %876 = vmatprep.subr.mxu0 0.0
        %877 = vmatpush1.msra.mxu0 %v844
        %878 = vmatprep.subr.mxu0 0.0
        %879 = vmatpush1.msra.mxu0 %v843
        %880 = vmatprep.subr.mxu0 0.0
        %881 = vmatpush1.msra.mxu0 %v842
        %882 = vmatprep.subr.mxu0 0.0
        %883 = vmatpush1.msra.mxu0 %v841
        %884 = vmatprep.subr.mxu0 0.0
        %885 = vmatpush1.msra.mxu0 %v840
        %886 = vmatprep.subr.mxu0 0.0
        %887 = vmatpush1.msra.mxu0 %v839
        %888 = vmatprep.subr.mxu0 0.0
        %889 = vmatpush1.msra.mxu0 %v838
        %890 = vmatprep.subr.mxu0 0.0
        %891 = vmatpush1.msra.mxu0 %v837
        %892 = vmatprep.subr.mxu0 0.0
        %893 = vmatpush1.msra.mxu0 %v836
        %894 = vmatprep.subr.mxu0 0.0
        %895 = vmatpush1.msra.mxu0 %v835
        %896 = vmatprep.subr.mxu0 0.0
        %897 = vmatpush1.msra.mxu0 %v834
        %898 = vmatprep.subr.mxu0 0.0
        %899 = vmatpush2.msra.mxu0 %v865
        %900 = vmatprep.subr.mxu0 0.0
        %901 = vmatpush2.msra.mxu0 %v864
        %902 = vmatprep.subr.mxu0 0.0
        %903 = vmatpush2.msra.mxu0 %v863
        %904 = vmatprep.subr.mxu0 0.0
        %905 = vmatpush2.msra.mxu0 %v862
        %906 = vmatprep.subr.mxu0 0.0
        %907 = vmatpush2.msra.mxu0 %v861
        %908 = vmatprep.subr.mxu0 0.0
        %909 = vmatpush2.msra.mxu0 %v860
        %910 = vmatprep.subr.mxu0 0.0
        %911 = vmatpush2.msra.mxu0 %v859
        %912 = vmatprep.subr.mxu0 0.0
        %913 = vmatpush2.msra.mxu0 %v858
        %914 = vmatprep.subr.mxu0 0.0
        %915 = vmatpush2.msra.mxu0 %v857
        %916 = vmatprep.subr.mxu0 0.0
        %917 = vmatpush2.msra.mxu0 %v856
        %918 = vmatprep.subr.mxu0 0.0
        %919 = vmatpush2.msra.mxu0 %v855
        %920 = vmatprep.subr.mxu0 0.0
        %921 = vmatpush2.msra.mxu0 %v854
        %922 = vmatprep.subr.mxu0 0.0
        %923 = vmatpush2.msra.mxu0 %v853
        %924 = vmatprep.subr.mxu0 0.0
        %925 = vmatpush2.msra.mxu0 %v852
        %926 = vmatprep.subr.mxu0 0.0
        %927 = vmatpush2.msra.mxu0 %v851
        %928 = vmatprep.subr.mxu0 0.0
        %929 = vmatpush2.msra.mxu0 %v850
        %930 = vmatprep.mubr.f32.mxu0 %v833
        %931 = vmatmul.mubr.f32.gmra.mxu0 %v832
        %v932 = vpop.f32.mrf.mxu0
        %v933 = vadd.f32 0.0, %v932
        %v934 = vpop.f32.mrf.mxu0
        %935 = vdwg.mxu0
        %vm936 = vcmask 519168
        %937 = vst.msk [vmem:[%s331] sm:$0xf] %vm936, %v933
        %p938 = scmp.lt.s32.totalorder %s21, 1
        %s939 = scalar_select %p938, %s21, 1
        %s940 = smul.addr %s939, 2
        %s941 = smul.addr %s940, 4
        %s942 = scalar_lea.vmem %s7, %s941
        %p943 = scmp.lt.s32.totalorder %s21, 1
        %s944 = scalar_select %p943, %s21, 1
        %s945 = smul.addr %s944, 4
        %s946 = scalar_lea.vmem %s8, %s945
        // Predicated region
        $region53: #{encoder_forward.3} parent=47 // pred_check
          %p947 = pneg %p191
        $region54: #{encoder_forward.3} parent=47 // pred_check_branch
          %949 = sbr.rel (%p947) target = $region56
        $region55: #{encoder_forward.3} parent=47 // pred_region
          _
        $region56: #{encoder_forward.3} parent=47 // pred_fallthru
          _
        // Predicated region
        $region57: #{encoder_forward.3} parent=47 // pred_check
          %p950 = pneg %p217
        $region58: #{encoder_forward.3} parent=47 // pred_check_branch
          %952 = sbr.rel (%p950) target = $region60
        $region59: #{encoder_forward.3} parent=47 // pred_region
          _
        $region60: #{encoder_forward.3} parent=47 // pred_fallthru
          _
      $region48: #{encoder_forward.3} parent=5 // pred_fallthru
        _
      %p953 = scmp.le.s32.totalorder 2, %s16
      // Predicated region
      $region61: #{encoder_forward.3} parent=5 // pred_check
        %p954 = pneg %p953
      $region62: #{encoder_forward.3} parent=5 // pred_check_branch
        %956 = sbr.rel (%p954) target = $region64
      $region63: #{encoder_forward.3} parent=5 // pred_region
        %s957 = ssub.s32 %s16, 2
        // Predicated region
        $region65: #{encoder_forward.3} parent=63 // pred_check
          %p958 = pneg %p197
        $region66: #{encoder_forward.3} parent=63 // pred_check_branch
          %960 = sbr.rel (%p958) target = $region68
        $region67: #{encoder_forward.3} parent=63 // pred_region
          %p961 = scmp.lt.s32.totalorder %s22, 1
          %s962 = scalar_select %p961, %s22, 1
          %s963 = smul.addr %s962, 2
          %s964 = smul.addr %s963, 4
          %s965 = scalar_lea.vmem %s7, %s964
        $region68: #{encoder_forward.3} parent=63 // pred_fallthru
          _
        // Predicated region
        $region69: #{encoder_forward.3} parent=63 // pred_check
          %p966 = pneg %p223
        $region70: #{encoder_forward.3} parent=63 // pred_check_branch
          %968 = sbr.rel (%p966) target = $region72
        $region71: #{encoder_forward.3} parent=63 // pred_region
          %p969 = scmp.lt.s32.totalorder %s22, 1
          %s970 = scalar_select %p969, %s22, 1
          %s971 = smul.addr %s970, 4
          %s972 = scalar_lea.vmem %s8, %s971
        $region72: #{encoder_forward.3} parent=63 // pred_fallthru
          _
      $region64: #{encoder_forward.3} parent=5 // pred_fallthru
        _
    $region6: #{encoder_forward.3} parent=1 // loop_footer
      %s20 = sadd.s32 1, %s16
    $region7: #{encoder_forward.3} parent=1 // loop_footer_branch
      %15 = sbr.rel target = $region3
    $region8: #{encoder_forward.3} parent=1 // loop_exit
      _
    %973 = vsyncpa [#allocation3], 1
    %s974 = scalar_lea.sflag [#allocation3], 1
    %975 = vsyncpa %s974, 1

</llo_original>
